<compile_context>
chip_gen: v5e
topology: v5e:2x2
jax: 0.10.0
libtpu: 0.0.40
codegen_flags: <defaults>
</compile_context>

<pallas_src>
import numpy as np
import jax
import jax.numpy as jnp
from jax import lax
from jax.experimental import pallas as pl
from jax.experimental.pallas import tpu as pltpu

# ----------------------------------------------------------------------------
# Static geometry (input must be 24 x 32 so flatten_dim = 32*6*8 = 1536)
# ----------------------------------------------------------------------------
H0, W0 = 24, 32          # input spatial
C1, C2 = 16, 32          # conv channels
K1 = 3 * W0              # 96   conv1 patch length  (3 rows of 32, horiz pad by omission)
N1 = 512                 # conv1 out cols: (w%2)*256 + (w//2)*16 + c
H1, W1 = 12, 16          # after pool1
P1W = W1 * C1            # 256  pooled1 row width: w1*16 + c1  (compact, no junk)
K2 = 3 * P1W             # 768  conv2 patch length (chunks at 0/256/512 - lane aligned)
N2 = 512                 # conv2 out cols: (w2%2)*256 + (w2//2)*32 + c2
H2, W2 = 6, 8            # after pool2
P2W = W2 * C2            # 256  pooled2 row width: w3*32 + c2
FLAT = H2 * P2W          # 1536 flattened features (== PyTorch flatten_dim)
FC1P = 128               # fc1 hidden padded 64 -> 128
OUT_PAD = 128            # fc2 output padded to a full lane width


# ----------------------------------------------------------------------------
# One-time host-side weight preparation (hoisted out of the forward path)
# ----------------------------------------------------------------------------
def prepare_params(p, num_classes=10):
    conv1_w = np.asarray(p["conv1_w"], np.float32)   # (16, 1, 3, 3)
    conv1_b = np.asarray(p["conv1_b"], np.float32)
    conv2_w = np.asarray(p["conv2_w"], np.float32)   # (32, 16, 3, 3)
    conv2_b = np.asarray(p["conv2_b"], np.float32)
    fc1_w = np.asarray(p["fc1_w"], np.float32)       # (64, 1536)
    fc1_b = np.asarray(p["fc1_b"], np.float32)
    fc2_w = np.asarray(p["fc2_w"], np.float32)       # (num_classes, 64)
    fc2_b = np.asarray(p["fc2_b"], np.float32)

    # conv1 Toeplitz: patch col = kh*32 + win, out col = (w%2)*256 + (w//2)*16 + c.
    # Spatial zero padding is folded in by simply omitting out-of-range terms.
    W1big = np.zeros((K1, N1), np.float32)
    for kh in range(3):
        for w in range(W0):
            base = (w % 2) * 256 + (w // 2) * C1
            for kw in range(3):
                win = w - 1 + kw
                if 0 <= win < W0:
                    W1big[kh * W0 + win, base:base + C1] = conv1_w[:, 0, kh, kw]
    B1big = np.tile(conv1_b, W0)[None, :]            # (1, 512), col%16 == channel

    # conv2 Toeplitz: patch col = kh*256 + win*16 + c1, out col = (w2%2)*256 + (w2//2)*32 + c2
    W2big = np.zeros((K2, N2), np.float32)
    for kh in range(3):
        for w2 in range(W1):
            base = (w2 % 2) * 256 + (w2 // 2) * C2
            for kw in range(3):
                win = w2 - 1 + kw
                if 0 <= win < W1:
                    for c1 in range(C1):
                        W2big[kh * P1W + win * C1 + c1, base:base + C2] = conv2_w[:, c1, kh, kw]
    B2big = np.tile(conv2_b, W1)[None, :]            # (1, 512), col%32 == channel

    # fc1 with the PyTorch (C,H,W) flatten permutation folded in; hidden padded to 128
    WF1 = np.zeros((FLAT, FC1P), np.float32)
    for c2 in range(C2):
        for h3 in range(H2):
            for w3 in range(W2):
                WF1[h3 * P2W + w3 * C2 + c2, :64] = fc1_w[:, c2 * (H2 * W2) + h3 * W2 + w3]
    BF1 = np.zeros((1, FC1P), np.float32)
    BF1[0, :64] = fc1_b

    # fc2 padded to (128, 128)
    WF2 = np.zeros((FC1P, OUT_PAD), np.float32)
    WF2[:64, :num_classes] = fc2_w.T
    BF2 = np.zeros((1, OUT_PAD), np.float32)
    BF2[0, :num_classes] = fc2_b

    return {
        "W1": jnp.asarray(W1big), "B1": jnp.asarray(B1big),
        "W2": jnp.asarray(W2big), "B2": jnp.asarray(B2big),
        "WF1": jnp.asarray(WF1), "BF1": jnp.asarray(BF1),
        "WF2": jnp.asarray(WF2), "BF2": jnp.asarray(BF2),
        "num_classes": num_classes,
    }


# ----------------------------------------------------------------------------
# Fused kernel: conv1 + relu + pool + conv2 + relu + pool + fc1 + relu + fc2
# Tile layout is h-major: slab row = h * B_T + b  (b = image within the tile).
# ----------------------------------------------------------------------------
def _make_fused_kernel(B_T):
    R0 = H0 * B_T   # 24*B_T conv1 rows
    R1 = H1 * B_T   # 12*B_T rows after pool1
    R2 = H2 * B_T   #  6*B_T rows after pool2

    def kernel(x_ref, w1_ref, b1_ref, w2_ref, b2_ref,
               wf1_ref, bf1_ref, wf2_ref, bf2_ref, out_ref):
        f32 = jnp.float32
        x = x_ref[...]                                              # (24*B_T, 32)

        # ---- conv1: build row-patch slab with whole-slab vertical shifts, ONE dot
        z32 = jnp.zeros((B_T, W0), f32)
        up1 = jnp.concatenate([z32, x[:R0 - B_T, :]], axis=0)       # input row h-1 (zero at h=0)
        dn1 = jnp.concatenate([x[B_T:, :], z32], axis=0)            # input row h+1 (zero at h=23)
        a1 = jnp.concatenate([up1, x, dn1], axis=1)                 # (24*B_T, 96)

        y1 = jnp.dot(a1, w1_ref[...], preferred_element_type=f32) + b1_ref[...]
        y1 = jnp.maximum(y1, 0.0)                                   # (24*B_T, 512)

        # ---- maxpool 2x2 #1: row pairs are B_T-aligned row blocks; col pairs are
        #      the two 256-lane halves (no lane rotate, compact 256-wide result)
        y1r = y1.reshape(H1, 2 * B_T, N1)
        y1h = jnp.maximum(y1r[:, :B_T, :], y1r[:, B_T:, :]).reshape(R1, N1)
        p1 = jnp.maximum(y1h[:, :P1W], y1h[:, P1W:])                # (12*B_T, 256)

        # ---- conv2: same trick, chunks at lane offsets 0/256/512, ONE dot
        z256 = jnp.zeros((B_T, P1W), f32)
        up2 = jnp.concatenate([z256, p1[:R1 - B_T, :]], axis=0)
        dn2 = jnp.concatenate([p1[B_T:, :], z256], axis=0)
        a2 = jnp.concatenate([up2, p1, dn2], axis=1)                # (12*B_T, 768)

        y2 = jnp.dot(a2, w2_ref[...], preferred_element_type=f32) + b2_ref[...]
        y2 = jnp.maximum(y2, 0.0)                                   # (12*B_T, 512)

        # ---- maxpool 2x2 #2
        y2r = y2.reshape(H2, 2 * B_T, N2)
        y2h = jnp.maximum(y2r[:, :B_T, :], y2r[:, B_T:, :]).reshape(R2, N2)
        p2 = jnp.maximum(y2h[:, :P2W], y2h[:, P2W:])                # (6*B_T, 256)

        # ---- flatten: one lane-aligned concat (offsets are multiples of 256)
        flat = jnp.concatenate(
            [p2[h * B_T:(h + 1) * B_T, :] for h in range(H2)], axis=1)  # (B_T, 1536)

        # ---- MLP head (fc1 padded to 128 hidden units, fc2 to 128 out lanes)
        h1 = jnp.dot(flat, wf1_ref[...], preferred_element_type=f32) + bf1_ref[...]
        h1 = jnp.maximum(h1, 0.0)                                   # (B_T, 128)
        out_ref[...] = jnp.dot(h1, wf2_ref[...],
                               preferred_element_type=f32) + bf2_ref[...]

    return kernel


def cnn_forward(x_nchw, prep):
    N = x_nchw.shape[0]
    assert x_nchw.shape[1:] == (1, H0, W0), x_nchw.shape

    # Batch tile: multiple of 8 (sublane alignment), capped at 32.  G >= 2 is not
    # forced (only useful on v7x megacore; "parallel" semantics shard it if G > 1).
    B_T = min(32, ((N + 7) // 8) * 8)
    G = -(-N // B_T)
    N_pad = G * B_T

    x = x_nchw.reshape(N, H0, W0).astype(jnp.float32)
    if N_pad != N:
        x = jnp.concatenate([x, jnp.zeros((N_pad - N, H0, W0), jnp.float32)], axis=0)
    # h-major within each tile: row = h*B_T + b
    x4 = x.reshape(G, B_T, H0, W0).transpose(0, 2, 1, 3).reshape(G, H0 * B_T, W0)

    grid_spec = pltpu.PrefetchScalarGridSpec(
        num_scalar_prefetch=0,
        grid=(G,),
        in_specs=[
            pl.BlockSpec((None, H0 * B_T, W0), lambda g: (g, 0, 0)),
            pl.BlockSpec((K1, N1), lambda g: (0, 0)),
            pl.BlockSpec((1, N1), lambda g: (0, 0)),
            pl.BlockSpec((K2, N2), lambda g: (0, 0)),
            pl.BlockSpec((1, N2), lambda g: (0, 0)),
            pl.BlockSpec((FLAT, FC1P), lambda g: (0, 0)),
            pl.BlockSpec((1, FC1P), lambda g: (0, 0)),
            pl.BlockSpec((FC1P, OUT_PAD), lambda g: (0, 0)),
            pl.BlockSpec((1, OUT_PAD), lambda g: (0, 0)),
        ],
        out_specs=pl.BlockSpec((None, B_T, OUT_PAD), lambda g: (g, 0, 0)),
    )

    out = pl.pallas_call(
        _make_fused_kernel(B_T),
        out_shape=jax.ShapeDtypeStruct((G, B_T, OUT_PAD), jnp.float32),
        grid_spec=grid_spec,
        compiler_params=pltpu.CompilerParams(
            dimension_semantics=("parallel",),
            vmem_limit_bytes=32 * 1024 * 1024,
        ),
    )(x4, prep["W1"], prep["B1"], prep["W2"], prep["B2"],
      prep["WF1"], prep["BF1"], prep["WF2"], prep["BF2"])

    return out.reshape(N_pad, OUT_PAD)[:N, :prep["num_classes"]]


# ----------------------------------------------------------------------------
# Pure-JAX reference for verification
# ----------------------------------------------------------------------------
def cnn_reference(x_nchw, p):
    dn = ("NCHW", "OIHW", "NCHW")
    x = lax.conv_general_dilated(x_nchw, p["conv1_w"], (1, 1), "SAME",
                                 dimension_numbers=dn)
    x = jnp.maximum(x + p["conv1_b"][None, :, None, None], 0.0)
    x = lax.reduce_window(x, -jnp.inf, lax.max, (1, 1, 2, 2), (1, 1, 2, 2), "VALID")
    x = lax.conv_general_dilated(x, p["conv2_w"], (1, 1), "SAME",
                                 dimension_numbers=dn)
    x = jnp.maximum(x + p["conv2_b"][None, :, None, None], 0.0)
    x = lax.reduce_window(x, -jnp.inf, lax.max, (1, 1, 2, 2), (1, 1, 2, 2), "VALID")
    x = x.reshape(x.shape[0], -1)
    x = jnp.maximum(x @ p["fc1_w"].T + p["fc1_b"], 0.0)
    return x @ p["fc2_w"].T + p["fc2_b"]


if __name__ == "__main__":
    num_classes = 10
    flatten_dim = 32 * 6 * 8  # 1536 -> input spatial must be 24 x 32

    key = jax.random.PRNGKey(0)
    ks = jax.random.split(key, 9)
    params = {
        "conv1_w": 0.1 * jax.random.normal(ks[0], (16, 1, 3, 3), jnp.float32),
        "conv1_b": 0.1 * jax.random.normal(ks[1], (16,), jnp.float32),
        "conv2_w": 0.1 * jax.random.normal(ks[2], (32, 16, 3, 3), jnp.float32),
        "conv2_b": 0.1 * jax.random.normal(ks[3], (32,), jnp.float32),
        "fc1_w": 0.05 * jax.random.normal(ks[4], (64, flatten_dim), jnp.float32),
        "fc1_b": 0.05 * jax.random.normal(ks[5], (64,), jnp.float32),
        "fc2_w": 0.05 * jax.random.normal(ks[6], (num_classes, 64), jnp.float32),
        "fc2_b": 0.05 * jax.random.normal(ks[7], (num_classes,), jnp.float32),
    }
    x = jax.random.normal(ks[8], (2, 1, 24, 32), jnp.float32)  # NCHW

    prep = prepare_params(params, num_classes)                 # one-time weight prep
    out = jax.block_until_ready(cnn_forward(x, prep))
    ref = jax.block_until_ready(cnn_reference(x, params))

    assert out.shape == (2, num_classes), out.shape
    np.testing.assert_allclose(np.asarray(out), np.asarray(ref),
                               rtol=2e-4, atol=2e-4)
    print("KERNEL_OK")
</pallas_src>

<mosaic_0001>
module attributes {stable_mosaic.version = 11 : i64} {
  func.func @kernel(%arg0: i32, %arg1: memref<1x192x32xf32, #tpu.memory_space<vmem>>, %arg2: memref<96x512xf32, #tpu.memory_space<vmem>>, %arg3: memref<1x512xf32, #tpu.memory_space<vmem>>, %arg4: memref<768x512xf32, #tpu.memory_space<vmem>>, %arg5: memref<1x512xf32, #tpu.memory_space<vmem>>, %arg6: memref<1536x128xf32, #tpu.memory_space<vmem>>, %arg7: memref<1x128xf32, #tpu.memory_space<vmem>>, %arg8: memref<128x128xf32, #tpu.memory_space<vmem>>, %arg9: memref<1x128xf32, #tpu.memory_space<vmem>>, %arg10: memref<1x8x128xf32, #tpu.memory_space<vmem>>) attributes {dimension_semantics = [#tpu.dimension_semantics<parallel>], iteration_bounds = array<i64: 1>, scalar_prefetch = 0 : i64, scratch_operands = 0 : i64, tpu.core_type = #tpu.core_type<tc>, window_params = [{transform_indices = @transform_0, window_bounds = array<i64: 1, 192, 32>}, {pipeline_mode = #tpu.pipeline_mode<synchronous>, transform_indices = @transform_1, window_bounds = array<i64: 96, 512>}, {pipeline_mode = #tpu.pipeline_mode<synchronous>, transform_indices = @transform_2, window_bounds = array<i64: 1, 512>}, {pipeline_mode = #tpu.pipeline_mode<synchronous>, transform_indices = @transform_3, window_bounds = array<i64: 768, 512>}, {pipeline_mode = #tpu.pipeline_mode<synchronous>, transform_indices = @transform_4, window_bounds = array<i64: 1, 512>}, {pipeline_mode = #tpu.pipeline_mode<synchronous>, transform_indices = @transform_5, window_bounds = array<i64: 1536, 128>}, {pipeline_mode = #tpu.pipeline_mode<synchronous>, transform_indices = @transform_6, window_bounds = array<i64: 1, 128>}, {pipeline_mode = #tpu.pipeline_mode<synchronous>, transform_indices = @transform_7, window_bounds = array<i64: 128, 128>}, {pipeline_mode = #tpu.pipeline_mode<synchronous>, transform_indices = @transform_8, window_bounds = array<i64: 1, 128>}, {transform_indices = @transform_9, window_bounds = array<i64: 1, 8, 128>}]} {
    %c0 = arith.constant 0 : index
    %c0_0 = arith.constant 0 : index
    %c0_1 = arith.constant 0 : index
    %0 = vector.load %arg1[%c0, %c0_0, %c0_1] : memref<1x192x32xf32, #tpu.memory_space<vmem>>, vector<1x192x32xf32>
    %1 = vector.shape_cast %0 : vector<1x192x32xf32> to vector<192x32xf32>
    %cst = arith.constant 0.000000e+00 : f32
    %2 = vector.broadcast %cst : f32 to vector<8x32xf32>
    %3 = vector.extract_strided_slice %1 {offsets = [0, 0], sizes = [184, 32], strides = [1, 1]} : vector<192x32xf32> to vector<184x32xf32>
    %4 = tpu.concatenate %2, %3 in 0 : vector<8x32xf32>, vector<184x32xf32> -> vector<192x32xf32>
    %5 = vector.extract_strided_slice %1 {offsets = [8, 0], sizes = [184, 32], strides = [1, 1]} : vector<192x32xf32> to vector<184x32xf32>
    %6 = tpu.concatenate %5, %2 in 0 : vector<184x32xf32>, vector<8x32xf32> -> vector<192x32xf32>
    %7 = tpu.concatenate %4, %1, %6 in 1 : vector<192x32xf32>, vector<192x32xf32>, vector<192x32xf32> -> vector<192x96xf32>
    %c0_2 = arith.constant 0 : index
    %c0_3 = arith.constant 0 : index
    %8 = vector.load %arg2[%c0_2, %c0_3] : memref<96x512xf32, #tpu.memory_space<vmem>>, vector<96x512xf32>
    %cst_4 = arith.constant dense<0.000000e+00> : vector<192x512xf32>
    %9 = tpu.matmul %7, %8, %cst_4 {dimension_numbers = #tpu.dot_dimension_numbers<[1], [0], [0], [1], [0, 0, 1, 1], [], []>} : vector<192x96xf32>, vector<96x512xf32>, vector<192x512xf32> -> vector<192x512xf32>
    %c0_5 = arith.constant 0 : index
    %c0_6 = arith.constant 0 : index
    %10 = vector.load %arg3[%c0_5, %c0_6] : memref<1x512xf32, #tpu.memory_space<vmem>>, vector<1x512xf32>
    %11 = vector.broadcast %10 : vector<1x512xf32> to vector<192x512xf32>
    %12 = arith.addf %9, %11 : vector<192x512xf32>
    %cst_7 = arith.constant 0.000000e+00 : f32
    %13 = vector.broadcast %cst_7 : f32 to vector<192x512xf32>
    %14 = arith.maximumf %12, %13 : vector<192x512xf32>
    %15 = vector.shape_cast %14 : vector<192x512xf32> to vector<12x16x512xf32>
    %16 = vector.extract_strided_slice %15 {offsets = [0, 0, 0], sizes = [12, 8, 512], strides = [1, 1, 1]} : vector<12x16x512xf32> to vector<12x8x512xf32>
    %17 = vector.extract_strided_slice %15 {offsets = [0, 8, 0], sizes = [12, 8, 512], strides = [1, 1, 1]} : vector<12x16x512xf32> to vector<12x8x512xf32>
    %18 = arith.maximumf %16, %17 : vector<12x8x512xf32>
    %19 = vector.shape_cast %18 : vector<12x8x512xf32> to vector<96x512xf32>
    %20 = vector.extract_strided_slice %19 {offsets = [0, 0], sizes = [96, 256], strides = [1, 1]} : vector<96x512xf32> to vector<96x256xf32>
    %21 = vector.extract_strided_slice %19 {offsets = [0, 256], sizes = [96, 256], strides = [1, 1]} : vector<96x512xf32> to vector<96x256xf32>
    %22 = arith.maximumf %20, %21 : vector<96x256xf32>
    %cst_8 = arith.constant 0.000000e+00 : f32
    %23 = vector.broadcast %cst_8 : f32 to vector<8x256xf32>
    %24 = vector.extract_strided_slice %22 {offsets = [0, 0], sizes = [88, 256], strides = [1, 1]} : vector<96x256xf32> to vector<88x256xf32>
    %25 = tpu.concatenate %23, %24 in 0 : vector<8x256xf32>, vector<88x256xf32> -> vector<96x256xf32>
    %26 = vector.extract_strided_slice %22 {offsets = [8, 0], sizes = [88, 256], strides = [1, 1]} : vector<96x256xf32> to vector<88x256xf32>
    %27 = tpu.concatenate %26, %23 in 0 : vector<88x256xf32>, vector<8x256xf32> -> vector<96x256xf32>
    %28 = tpu.concatenate %25, %22, %27 in 1 : vector<96x256xf32>, vector<96x256xf32>, vector<96x256xf32> -> vector<96x768xf32>
    %c0_9 = arith.constant 0 : index
    %c0_10 = arith.constant 0 : index
    %29 = vector.load %arg4[%c0_9, %c0_10] : memref<768x512xf32, #tpu.memory_space<vmem>>, vector<768x512xf32>
    %cst_11 = arith.constant dense<0.000000e+00> : vector<96x512xf32>
    %30 = tpu.matmul %28, %29, %cst_11 {dimension_numbers = #tpu.dot_dimension_numbers<[1], [0], [0], [1], [0, 0, 1, 1], [], []>} : vector<96x768xf32>, vector<768x512xf32>, vector<96x512xf32> -> vector<96x512xf32>
    %c0_12 = arith.constant 0 : index
    %c0_13 = arith.constant 0 : index
    %31 = vector.load %arg5[%c0_12, %c0_13] : memref<1x512xf32, #tpu.memory_space<vmem>>, vector<1x512xf32>
    %32 = vector.broadcast %31 : vector<1x512xf32> to vector<96x512xf32>
    %33 = arith.addf %30, %32 : vector<96x512xf32>
    %cst_14 = arith.constant 0.000000e+00 : f32
    %34 = vector.broadcast %cst_14 : f32 to vector<96x512xf32>
    %35 = arith.maximumf %33, %34 : vector<96x512xf32>
    %36 = vector.shape_cast %35 : vector<96x512xf32> to vector<6x16x512xf32>
    %37 = vector.extract_strided_slice %36 {offsets = [0, 0, 0], sizes = [6, 8, 512], strides = [1, 1, 1]} : vector<6x16x512xf32> to vector<6x8x512xf32>
    %38 = vector.extract_strided_slice %36 {offsets = [0, 8, 0], sizes = [6, 8, 512], strides = [1, 1, 1]} : vector<6x16x512xf32> to vector<6x8x512xf32>
    %39 = arith.maximumf %37, %38 : vector<6x8x512xf32>
    %40 = vector.shape_cast %39 : vector<6x8x512xf32> to vector<48x512xf32>
    %41 = vector.extract_strided_slice %40 {offsets = [0, 0], sizes = [48, 256], strides = [1, 1]} : vector<48x512xf32> to vector<48x256xf32>
    %42 = vector.extract_strided_slice %40 {offsets = [0, 256], sizes = [48, 256], strides = [1, 1]} : vector<48x512xf32> to vector<48x256xf32>
    %43 = arith.maximumf %41, %42 : vector<48x256xf32>
    %44 = vector.extract_strided_slice %43 {offsets = [0, 0], sizes = [8, 256], strides = [1, 1]} : vector<48x256xf32> to vector<8x256xf32>
    %45 = vector.extract_strided_slice %43 {offsets = [8, 0], sizes = [8, 256], strides = [1, 1]} : vector<48x256xf32> to vector<8x256xf32>
    %46 = vector.extract_strided_slice %43 {offsets = [16, 0], sizes = [8, 256], strides = [1, 1]} : vector<48x256xf32> to vector<8x256xf32>
    %47 = vector.extract_strided_slice %43 {offsets = [24, 0], sizes = [8, 256], strides = [1, 1]} : vector<48x256xf32> to vector<8x256xf32>
    %48 = vector.extract_strided_slice %43 {offsets = [32, 0], sizes = [8, 256], strides = [1, 1]} : vector<48x256xf32> to vector<8x256xf32>
    %49 = vector.extract_strided_slice %43 {offsets = [40, 0], sizes = [8, 256], strides = [1, 1]} : vector<48x256xf32> to vector<8x256xf32>
    %50 = tpu.concatenate %44, %45, %46, %47, %48, %49 in 1 : vector<8x256xf32>, vector<8x256xf32>, vector<8x256xf32>, vector<8x256xf32>, vector<8x256xf32>, vector<8x256xf32> -> vector<8x1536xf32>
    %c0_15 = arith.constant 0 : index
    %c0_16 = arith.constant 0 : index
    %51 = vector.load %arg6[%c0_15, %c0_16] : memref<1536x128xf32, #tpu.memory_space<vmem>>, vector<1536x128xf32>
    %cst_17 = arith.constant dense<0.000000e+00> : vector<8x128xf32>
    %52 = tpu.matmul %50, %51, %cst_17 {dimension_numbers = #tpu.dot_dimension_numbers<[1], [0], [0], [1], [0, 0, 1, 1], [], []>} : vector<8x1536xf32>, vector<1536x128xf32>, vector<8x128xf32> -> vector<8x128xf32>
    %c0_18 = arith.constant 0 : index
    %c0_19 = arith.constant 0 : index
    %53 = vector.load %arg7[%c0_18, %c0_19] : memref<1x128xf32, #tpu.memory_space<vmem>>, vector<1x128xf32>
    %54 = vector.broadcast %53 : vector<1x128xf32> to vector<8x128xf32>
    %55 = arith.addf %52, %54 : vector<8x128xf32>
    %cst_20 = arith.constant 0.000000e+00 : f32
    %56 = vector.broadcast %cst_20 : f32 to vector<8x128xf32>
    %57 = arith.maximumf %55, %56 : vector<8x128xf32>
    %c0_21 = arith.constant 0 : index
    %c0_22 = arith.constant 0 : index
    %58 = vector.load %arg8[%c0_21, %c0_22] : memref<128x128xf32, #tpu.memory_space<vmem>>, vector<128x128xf32>
    %cst_23 = arith.constant dense<0.000000e+00> : vector<8x128xf32>
    %59 = tpu.matmul %57, %58, %cst_23 {dimension_numbers = #tpu.dot_dimension_numbers<[1], [0], [0], [1], [0, 0, 1, 1], [], []>} : vector<8x128xf32>, vector<128x128xf32>, vector<8x128xf32> -> vector<8x128xf32>
    %c0_24 = arith.constant 0 : index
    %c0_25 = arith.constant 0 : index
    %60 = vector.load %arg9[%c0_24, %c0_25] : memref<1x128xf32, #tpu.memory_space<vmem>>, vector<1x128xf32>
    %61 = vector.broadcast %60 : vector<1x128xf32> to vector<8x128xf32>
    %62 = arith.addf %59, %61 : vector<8x128xf32>
    %c0_26 = arith.constant 0 : index
    %c0_27 = arith.constant 0 : index
    %c0_28 = arith.constant 0 : index
    %63 = vector.load %arg10[%c0_26, %c0_27, %c0_28] : memref<1x8x128xf32, #tpu.memory_space<vmem>>, vector<1x8x128xf32>
    %64 = vector.shape_cast %63 : vector<1x8x128xf32> to vector<8x128xf32>
    %65 = vector.shape_cast %62 : vector<8x128xf32> to vector<1x8x128xf32>
    tpu.vector_store %arg10[%c0_26, %c0_27, %c0_28], %65 {strides = array<i32>} : memref<1x8x128xf32, #tpu.memory_space<vmem>>, vector<1x8x128xf32>,
    return
  }
  func.func @transform_0(%arg0: i32) -> (i32, i32, i32) {
    %c0_i32 = arith.constant 0 : i32
    %c0_i32_0 = arith.constant 0 : i32
    %c0_i32_1 = arith.constant 0 : i32
    return %arg0, %c0_i32, %c0_i32_0 : i32, i32, i32
  }
  func.func @transform_1(%arg0: i32) -> (i32, i32) {
    %c0_i32 = arith.constant 0 : i32
    %c0_i32_0 = arith.constant 0 : i32
    %c0_i32_1 = arith.constant 0 : i32
    return %c0_i32, %c0_i32_0 : i32, i32
  }
  func.func @transform_2(%arg0: i32) -> (i32, i32) {
    %c0_i32 = arith.constant 0 : i32
    %c0_i32_0 = arith.constant 0 : i32
    %c0_i32_1 = arith.constant 0 : i32
    return %c0_i32, %c0_i32_0 : i32, i32
  }
  func.func @transform_3(%arg0: i32) -> (i32, i32) {
    %c0_i32 = arith.constant 0 : i32
    %c0_i32_0 = arith.constant 0 : i32
    %c0_i32_1 = arith.constant 0 : i32
    return %c0_i32, %c0_i32_0 : i32, i32
  }
  func.func @transform_4(%arg0: i32) -> (i32, i32) {
    %c0_i32 = arith.constant 0 : i32
    %c0_i32_0 = arith.constant 0 : i32
    %c0_i32_1 = arith.constant 0 : i32
    return %c0_i32, %c0_i32_0 : i32, i32
  }
  func.func @transform_5(%arg0: i32) -> (i32, i32) {
    %c0_i32 = arith.constant 0 : i32
    %c0_i32_0 = arith.constant 0 : i32
    %c0_i32_1 = arith.constant 0 : i32
    return %c0_i32, %c0_i32_0 : i32, i32
  }
  func.func @transform_6(%arg0: i32) -> (i32, i32) {
    %c0_i32 = arith.constant 0 : i32
    %c0_i32_0 = arith.constant 0 : i32
    %c0_i32_1 = arith.constant 0 : i32
    return %c0_i32, %c0_i32_0 : i32, i32
  }
  func.func @transform_7(%arg0: i32) -> (i32, i32) {
    %c0_i32 = arith.constant 0 : i32
    %c0_i32_0 = arith.constant 0 : i32
    %c0_i32_1 = arith.constant 0 : i32
    return %c0_i32, %c0_i32_0 : i32, i32
  }
  func.func @transform_8(%arg0: i32) -> (i32, i32) {
    %c0_i32 = arith.constant 0 : i32
    %c0_i32_0 = arith.constant 0 : i32
    %c0_i32_1 = arith.constant 0 : i32
    return %c0_i32, %c0_i32_0 : i32, i32
  }
  func.func @transform_9(%arg0: i32) -> (i32, i32, i32) {
    %c0_i32 = arith.constant 0 : i32
    %c0_i32_0 = arith.constant 0 : i32
    %c0_i32_1 = arith.constant 0 : i32
    return %arg0, %c0_i32, %c0_i32_0 : i32, i32, i32
  }
}

</mosaic_0001>

<llo_original>
// kernel: tpu_custom_call.1
$region0: #{tpu_custom_call.1}
  #allocation0 [shape = 'u32[]', space=smem, size = 0x4, offset = 0x4, fixed_abs, tag = 'smem constant byte address 0x4 - core index']
  #allocation1 [shape = 'u32[72,128]{1,0:T(1,128)}', space=vmem, size = 0x9000, scoped, tag = 'internal scratch']
  %s0 = inlined_call_operand.vmem [shape: f32[1,192,32], index: 0, kind: input, shape index: {}]
  %s1 = inlined_call_operand.hbm [shape: f32[96,512], index: 1, kind: input, shape index: {}]
  %s2 = inlined_call_operand.hbm [shape: f32[1,512], index: 2, kind: input, shape index: {}]
  %s3 = inlined_call_operand.hbm [shape: f32[768,512], index: 3, kind: input, shape index: {}]
  %s4 = inlined_call_operand.hbm [shape: f32[1,512], index: 4, kind: input, shape index: {}]
  %s5 = inlined_call_operand.hbm [shape: f32[1536,128], index: 5, kind: input, shape index: {}]
  %s6 = inlined_call_operand.hbm [shape: f32[1,128], index: 6, kind: input, shape index: {}]
  %s7 = inlined_call_operand.hbm [shape: f32[128,128], index: 7, kind: input, shape index: {}]
  %s8 = inlined_call_operand.hbm [shape: f32[1,128], index: 8, kind: input, shape index: {}]
  %s9 = inlined_call_operand.hbm [shape: f32[1,8,128], index: 9, kind: output, shape index: {}]
  %s10 = sld [smem:[#allocation0]]
  $region78: #{tpu_custom_call.1} parent=0
    _
  %s12 = ssub.s32 1, %s10
  %s13 = scalar_select 0, %s12, %s10
  $region1: #{tpu_custom_call.1} parent=0
    #allocation2 [shape = 'u8[196608]{0}', space=vmem, size = 0x30000, scoped, tag = 'input window, operand 1, single buffered']
    #allocation3 [shape = 's32[1]{0}', space=sflag, size = 0x4, scoped, tag = 'scoped memory for tpu_custom_call.1']
    #allocation4 [shape = 's32[1]{0}', space=sflag, size = 0x4, scoped, tag = 'scoped memory for tpu_custom_call.1']
    #allocation5 [shape = 'u8[2048]{0}', space=vmem, size = 0x800, scoped, tag = 'input window, operand 2, single buffered']
    #allocation6 [shape = 's32[1]{0}', space=sflag, size = 0x4, scoped, tag = 'scoped memory for tpu_custom_call.1']
    #allocation7 [shape = 'u8[1572864]{0}', space=vmem, size = 0x180000, scoped, tag = 'input window, operand 3, single buffered']
    #allocation8 [shape = 'u8[2048]{0}', space=vmem, size = 0x800, scoped, tag = 'input window, operand 4, single buffered']
    #allocation9 [shape = 's32[1]{0}', space=sflag, size = 0x4, scoped, tag = 'scoped memory for tpu_custom_call.1']
    #allocation10 [shape = 'u8[786432]{0}', space=vmem, size = 0xc0000, scoped, tag = 'input window, operand 5, single buffered']
    #allocation11 [shape = 'u8[512]{0}', space=vmem, size = 0x400, scoped, tag = 'input window, operand 6, single buffered']
    #allocation12 [shape = 's32[1]{0}', space=sflag, size = 0x4, scoped, tag = 'scoped memory for tpu_custom_call.1']
    #allocation13 [shape = 'u8[65536]{0}', space=vmem, size = 0x10000, scoped, tag = 'input window, operand 7, single buffered']
    #allocation14 [shape = 'u8[512]{0}', space=vmem, size = 0x400, scoped, tag = 'input window, operand 8, single buffered']
    #allocation15 [shape = 's32[1]{0}', space=sflag, size = 0x4, scoped, tag = 'scoped memory for tpu_custom_call.1']
    #allocation16 [shape = 'u8[4096]{0}', space=vmem, size = 0x1000, scoped, tag = 'output window, operand 0, single buffered']
    %14 = vsyncpa [#allocation3], 0
    %15 = vsyncpa [#allocation6], 0
    %16 = vsyncpa [#allocation9], 0
    %17 = vsyncpa [#allocation12], 0
    %18 = vsyncpa [#allocation15], 0
    %19 = vsyncpa [#allocation4], 0
    // Predicated region
    $region2: #{tpu_custom_call.1} parent=1 // pred_check
      _
    $region3: #{tpu_custom_call.1} parent=1 // pred_check_branch
      %21 = sbr.rel (0) target = $region5
    $region4: #{tpu_custom_call.1} parent=1 // pred_region
      _
    $region5: #{tpu_custom_call.1} parent=1 // pred_fallthru
      _
    // Predicated region
    $region6: #{tpu_custom_call.1} parent=1 // pred_check
      _
    $region7: #{tpu_custom_call.1} parent=1 // pred_check_branch
      %23 = sbr.rel (0) target = $region9
    $region8: #{tpu_custom_call.1} parent=1 // pred_region
      %25 = vsyncadd [#allocation3], 0
      %s26 = sshll.u32 %s1, 4
      %s27 = int_to_ptr.hbm [resolvable:$true] %s26
      %s28 = sshll.u32 [#allocation2], 4
      %s29 = int_to_ptr.vmem [resolvable:$true] %s28
      %34 = dma.hbm_to_vmem [thread:$0]  %s27, 6144, %s29, [#allocation3], 512, 512, 32
    $region9: #{tpu_custom_call.1} parent=1 // pred_fallthru
      _
    // Predicated region
    $region10: #{tpu_custom_call.1} parent=1 // pred_check
      _
    $region11: #{tpu_custom_call.1} parent=1 // pred_check_branch
      %36 = sbr.rel (0) target = $region13
    $region12: #{tpu_custom_call.1} parent=1 // pred_region
      %38 = vsyncadd [#allocation6], 0
      %s40 = sshll.u32 %s2, 4
      %s41 = int_to_ptr.hbm [resolvable:$true] %s40
      %s42 = sshll.u32 [#allocation5], 4
      %s43 = int_to_ptr.vmem [resolvable:$true] %s42
      %45 = dma.hbm_to_vmem [thread:$0]  %s41, 64, %s43, [#allocation6]
    $region13: #{tpu_custom_call.1} parent=1 // pred_fallthru
      _
    // Predicated region
    $region14: #{tpu_custom_call.1} parent=1 // pred_check
      _
    $region15: #{tpu_custom_call.1} parent=1 // pred_check_branch
      %47 = sbr.rel (0) target = $region17
    $region16: #{tpu_custom_call.1} parent=1 // pred_region
      %49 = vsyncadd [#allocation6], 0
      %s50 = sshll.u32 %s3, 4
      %s51 = int_to_ptr.hbm [resolvable:$true] %s50
      %s52 = sshll.u32 [#allocation7], 4
      %s53 = int_to_ptr.vmem [resolvable:$true] %s52
      %58 = dma.hbm_to_vmem [thread:$0]  %s51, 49152, %s53, [#allocation6], 512, 512, 32
    $region17: #{tpu_custom_call.1} parent=1 // pred_fallthru
      _
    // Predicated region
    $region18: #{tpu_custom_call.1} parent=1 // pred_check
      _
    $region19: #{tpu_custom_call.1} parent=1 // pred_check_branch
      %60 = sbr.rel (0) target = $region21
    $region20: #{tpu_custom_call.1} parent=1 // pred_region
      %62 = vsyncadd [#allocation9], 0
      %s64 = sshll.u32 %s4, 4
      %s65 = int_to_ptr.hbm [resolvable:$true] %s64
      %s66 = sshll.u32 [#allocation8], 4
      %s67 = int_to_ptr.vmem [resolvable:$true] %s66
      %69 = dma.hbm_to_vmem [thread:$0]  %s65, 64, %s67, [#allocation9]
    $region21: #{tpu_custom_call.1} parent=1 // pred_fallthru
      _
    // Predicated region
    $region22: #{tpu_custom_call.1} parent=1 // pred_check
      _
    $region23: #{tpu_custom_call.1} parent=1 // pred_check_branch
      %71 = sbr.rel (0) target = $region25
    $region24: #{tpu_custom_call.1} parent=1 // pred_region
      %73 = vsyncadd [#allocation9], 0
      %s74 = sshll.u32 %s5, 4
      %s75 = int_to_ptr.hbm [resolvable:$true] %s74
      %s76 = sshll.u32 [#allocation10], 4
      %s77 = int_to_ptr.vmem [resolvable:$true] %s76
      %82 = dma.hbm_to_vmem [thread:$0]  %s75, 24576, %s77, [#allocation9], 128, 128, 8
    $region25: #{tpu_custom_call.1} parent=1 // pred_fallthru
      _
    // Predicated region
    $region26: #{tpu_custom_call.1} parent=1 // pred_check
      _
    $region27: #{tpu_custom_call.1} parent=1 // pred_check_branch
      %84 = sbr.rel (0) target = $region29
    $region28: #{tpu_custom_call.1} parent=1 // pred_region
      %86 = vsyncadd [#allocation12], 0
      %s88 = sshll.u32 %s6, 4
      %s89 = int_to_ptr.hbm [resolvable:$true] %s88
      %s90 = sshll.u32 [#allocation11], 4
      %s91 = int_to_ptr.vmem [resolvable:$true] %s90
      %93 = dma.hbm_to_vmem [thread:$0]  %s89, 16, %s91, [#allocation12]
    $region29: #{tpu_custom_call.1} parent=1 // pred_fallthru
      _
    // Predicated region
    $region30: #{tpu_custom_call.1} parent=1 // pred_check
      _
    $region31: #{tpu_custom_call.1} parent=1 // pred_check_branch
      %95 = sbr.rel (0) target = $region33
    $region32: #{tpu_custom_call.1} parent=1 // pred_region
      %97 = vsyncadd [#allocation12], 0
      %s98 = sshll.u32 %s7, 4
      %s99 = int_to_ptr.hbm [resolvable:$true] %s98
      %s100 = sshll.u32 [#allocation13], 4
      %s101 = int_to_ptr.vmem [resolvable:$true] %s100
      %106 = dma.hbm_to_vmem [thread:$0]  %s99, 2048, %s101, [#allocation12], 128, 128, 8
    $region33: #{tpu_custom_call.1} parent=1 // pred_fallthru
      _
    // Predicated region
    $region34: #{tpu_custom_call.1} parent=1 // pred_check
      _
    $region35: #{tpu_custom_call.1} parent=1 // pred_check_branch
      %108 = sbr.rel (0) target = $region37
    $region36: #{tpu_custom_call.1} parent=1 // pred_region
      %110 = vsyncadd [#allocation15], 0
      %s112 = sshll.u32 %s8, 4
      %s113 = int_to_ptr.hbm [resolvable:$true] %s112
      %s114 = sshll.u32 [#allocation14], 4
      %s115 = int_to_ptr.vmem [resolvable:$true] %s114
      %117 = dma.hbm_to_vmem [thread:$0]  %s113, 16, %s115, [#allocation15]
    $region37: #{tpu_custom_call.1} parent=1 // pred_fallthru
      _
    // Predicated region
    $region38: #{tpu_custom_call.1} parent=1 // pred_check
      _
    $region39: #{tpu_custom_call.1} parent=1 // pred_check_branch
      %119 = sbr.rel (0) target = $region41
    $region40: #{tpu_custom_call.1} parent=1 // pred_region
      %121 = dma.done [#allocation3], 6144
    $region41: #{tpu_custom_call.1} parent=1 // pred_fallthru
      _
    // Predicated region
    $region42: #{tpu_custom_call.1} parent=1 // pred_check
      _
    $region43: #{tpu_custom_call.1} parent=1 // pred_check_branch
      %123 = sbr.rel (0) target = $region45
    $region44: #{tpu_custom_call.1} parent=1 // pred_region
      %125 = dma.done [#allocation6], 64
    $region45: #{tpu_custom_call.1} parent=1 // pred_fallthru
      _
    // Predicated region
    $region46: #{tpu_custom_call.1} parent=1 // pred_check
      _
    $region47: #{tpu_custom_call.1} parent=1 // pred_check_branch
      %127 = sbr.rel (0) target = $region49
    $region48: #{tpu_custom_call.1} parent=1 // pred_region
      %129 = dma.done [#allocation6], 49152
    $region49: #{tpu_custom_call.1} parent=1 // pred_fallthru
      _
    // Predicated region
    $region50: #{tpu_custom_call.1} parent=1 // pred_check
      _
    $region51: #{tpu_custom_call.1} parent=1 // pred_check_branch
      %131 = sbr.rel (0) target = $region53
    $region52: #{tpu_custom_call.1} parent=1 // pred_region
      %133 = dma.done [#allocation9], 64
    $region53: #{tpu_custom_call.1} parent=1 // pred_fallthru
      _
    // Predicated region
    $region54: #{tpu_custom_call.1} parent=1 // pred_check
      _
    $region55: #{tpu_custom_call.1} parent=1 // pred_check_branch
      %135 = sbr.rel (0) target = $region57
    $region56: #{tpu_custom_call.1} parent=1 // pred_region
      %137 = dma.done [#allocation9], 24576
    $region57: #{tpu_custom_call.1} parent=1 // pred_fallthru
      _
    // Predicated region
    $region58: #{tpu_custom_call.1} parent=1 // pred_check
      _
    $region59: #{tpu_custom_call.1} parent=1 // pred_check_branch
      %139 = sbr.rel (0) target = $region61
    $region60: #{tpu_custom_call.1} parent=1 // pred_region
      %141 = dma.done [#allocation12], 16
    $region61: #{tpu_custom_call.1} parent=1 // pred_fallthru
      _
    // Predicated region
    $region62: #{tpu_custom_call.1} parent=1 // pred_check
      _
    $region63: #{tpu_custom_call.1} parent=1 // pred_check_branch
      %143 = sbr.rel (0) target = $region65
    $region64: #{tpu_custom_call.1} parent=1 // pred_region
      %145 = dma.done [#allocation12], 2048
    $region65: #{tpu_custom_call.1} parent=1 // pred_fallthru
      _
    // Predicated region
    $region66: #{tpu_custom_call.1} parent=1 // pred_check
      _
    $region67: #{tpu_custom_call.1} parent=1 // pred_check_branch
      %147 = sbr.rel (0) target = $region69
    $region68: #{tpu_custom_call.1} parent=1 // pred_region
      %149 = dma.done [#allocation15], 16
    $region69: #{tpu_custom_call.1} parent=1 // pred_fallthru
      _
    %v150 = vld [vmem:[%s0] sm:$0xff]
    %v151 = vld [vmem:[%s0 + $0x8] sm:$0xff]
    %v152 = vld [vmem:[%s0 + $0x10] sm:$0xff]
    %v153 = vld [vmem:[%s0 + $0x18] sm:$0xff]
    %v154 = vld [vmem:[%s0 + $0x20] sm:$0xff]
    %v155 = vld [vmem:[%s0 + $0x28] sm:$0xff]
    %v156 = vld [vmem:[%s0 + $0x30] sm:$0xff]
    %v157 = vld [vmem:[%s0 + $0x38] sm:$0xff]
    %v158 = vld [vmem:[%s0 + $0x40] sm:$0xff]
    %v159 = vld [vmem:[%s0 + $0x48] sm:$0xff]
    %v160 = vld [vmem:[%s0 + $0x50] sm:$0xff]
    %v161 = vld [vmem:[%s0 + $0x58] sm:$0xff]
    %v162 = vld [vmem:[%s0 + $0x60] sm:$0xff]
    %v163 = vld [vmem:[%s0 + $0x68] sm:$0xff]
    %v164 = vld [vmem:[%s0 + $0x70] sm:$0xff]
    %v165 = vld [vmem:[%s0 + $0x78] sm:$0xff]
    %v166 = vld [vmem:[%s0 + $0x80] sm:$0xff]
    %v167 = vld [vmem:[%s0 + $0x88] sm:$0xff]
    %v168 = vld [vmem:[%s0 + $0x90] sm:$0xff]
    %v169 = vld [vmem:[%s0 + $0x98] sm:$0xff]
    %v170 = vld [vmem:[%s0 + $0xa0] sm:$0xff]
    %v171 = vld [vmem:[%s0 + $0xa8] sm:$0xff]
    %v172 = vld [vmem:[%s0 + $0xb0] sm:$0xff]
    %v173 = vld [vmem:[%s0 + $0xb8] sm:$0xff]
    %198 = vrot.lane.b32.xlu0 %v150, 32
    %v199 = vpop.permute.xlu0 %198
    %200 = vrot.lane.b32.xlu0 %v151, 32
    %v201 = vpop.permute.xlu0 %200
    %202 = vrot.lane.b32.xlu0 %v152, 32
    %v203 = vpop.permute.xlu0 %202
    %204 = vrot.lane.b32.xlu0 %v153, 32
    %v205 = vpop.permute.xlu0 %204
    %206 = vrot.lane.b32.xlu0 %v154, 32
    %v207 = vpop.permute.xlu0 %206
    %208 = vrot.lane.b32.xlu0 %v155, 32
    %v209 = vpop.permute.xlu0 %208
    %210 = vrot.lane.b32.xlu0 %v156, 32
    %v211 = vpop.permute.xlu0 %210
    %212 = vrot.lane.b32.xlu0 %v157, 32
    %v213 = vpop.permute.xlu0 %212
    %214 = vrot.lane.b32.xlu0 %v158, 32
    %v215 = vpop.permute.xlu0 %214
    %216 = vrot.lane.b32.xlu0 %v159, 32
    %v217 = vpop.permute.xlu0 %216
    %218 = vrot.lane.b32.xlu0 %v160, 32
    %v219 = vpop.permute.xlu0 %218
    %220 = vrot.lane.b32.xlu0 %v161, 32
    %v221 = vpop.permute.xlu0 %220
    %222 = vrot.lane.b32.xlu0 %v162, 32
    %v223 = vpop.permute.xlu0 %222
    %224 = vrot.lane.b32.xlu0 %v163, 32
    %v225 = vpop.permute.xlu0 %224
    %226 = vrot.lane.b32.xlu0 %v164, 32
    %v227 = vpop.permute.xlu0 %226
    %228 = vrot.lane.b32.xlu0 %v165, 32
    %v229 = vpop.permute.xlu0 %228
    %230 = vrot.lane.b32.xlu0 %v166, 32
    %v231 = vpop.permute.xlu0 %230
    %232 = vrot.lane.b32.xlu0 %v167, 32
    %v233 = vpop.permute.xlu0 %232
    %234 = vrot.lane.b32.xlu0 %v168, 32
    %v235 = vpop.permute.xlu0 %234
    %236 = vrot.lane.b32.xlu0 %v169, 32
    %v237 = vpop.permute.xlu0 %236
    %238 = vrot.lane.b32.xlu0 %v170, 32
    %v239 = vpop.permute.xlu0 %238
    %240 = vrot.lane.b32.xlu0 %v171, 32
    %v241 = vpop.permute.xlu0 %240
    %242 = vrot.lane.b32.xlu0 %v172, 32
    %v243 = vpop.permute.xlu0 %242
    %244 = vrot.lane.b32.xlu0 %v173, 32
    %v245 = vpop.permute.xlu0 %244
    %271 = vrot.lane.b32.xlu0 %v151, 64
    %v272 = vpop.permute.xlu0 %271
    %273 = vrot.lane.b32.xlu0 %v152, 64
    %v274 = vpop.permute.xlu0 %273
    %275 = vrot.lane.b32.xlu0 %v153, 64
    %v276 = vpop.permute.xlu0 %275
    %277 = vrot.lane.b32.xlu0 %v154, 64
    %v278 = vpop.permute.xlu0 %277
    %279 = vrot.lane.b32.xlu0 %v155, 64
    %v280 = vpop.permute.xlu0 %279
    %281 = vrot.lane.b32.xlu0 %v156, 64
    %v282 = vpop.permute.xlu0 %281
    %283 = vrot.lane.b32.xlu0 %v157, 64
    %v284 = vpop.permute.xlu0 %283
    %285 = vrot.lane.b32.xlu0 %v158, 64
    %v286 = vpop.permute.xlu0 %285
    %287 = vrot.lane.b32.xlu0 %v159, 64
    %v288 = vpop.permute.xlu0 %287
    %289 = vrot.lane.b32.xlu0 %v160, 64
    %v290 = vpop.permute.xlu0 %289
    %291 = vrot.lane.b32.xlu0 %v161, 64
    %v292 = vpop.permute.xlu0 %291
    %293 = vrot.lane.b32.xlu0 %v162, 64
    %v294 = vpop.permute.xlu0 %293
    %295 = vrot.lane.b32.xlu0 %v163, 64
    %v296 = vpop.permute.xlu0 %295
    %297 = vrot.lane.b32.xlu0 %v164, 64
    %v298 = vpop.permute.xlu0 %297
    %299 = vrot.lane.b32.xlu0 %v165, 64
    %v300 = vpop.permute.xlu0 %299
    %301 = vrot.lane.b32.xlu0 %v166, 64
    %v302 = vpop.permute.xlu0 %301
    %303 = vrot.lane.b32.xlu0 %v167, 64
    %v304 = vpop.permute.xlu0 %303
    %305 = vrot.lane.b32.xlu0 %v168, 64
    %v306 = vpop.permute.xlu0 %305
    %307 = vrot.lane.b32.xlu0 %v169, 64
    %v308 = vpop.permute.xlu0 %307
    %309 = vrot.lane.b32.xlu0 %v170, 64
    %v310 = vpop.permute.xlu0 %309
    %311 = vrot.lane.b32.xlu0 %v171, 64
    %v312 = vpop.permute.xlu0 %311
    %313 = vrot.lane.b32.xlu0 %v172, 64
    %v314 = vpop.permute.xlu0 %313
    %315 = vrot.lane.b32.xlu0 %v173, 64
    %v316 = vpop.permute.xlu0 %315
    %317 = vrot.lane.b32.xlu0 0.0, 64
    %v318 = vpop.permute.xlu0 %317
    %vm343 = vcmask 261120
    %v344 = vsel %vm343, 0.0, %v199
    %v345 = vsel %vm343, %v150, %v201
    %v346 = vsel %vm343, %v151, %v203
    %v347 = vsel %vm343, %v152, %v205
    %v348 = vsel %vm343, %v153, %v207
    %v349 = vsel %vm343, %v154, %v209
    %v350 = vsel %vm343, %v155, %v211
    %v351 = vsel %vm343, %v156, %v213
    %v352 = vsel %vm343, %v157, %v215
    %v353 = vsel %vm343, %v158, %v217
    %v354 = vsel %vm343, %v159, %v219
    %v355 = vsel %vm343, %v160, %v221
    %v356 = vsel %vm343, %v161, %v223
    %v357 = vsel %vm343, %v162, %v225
    %v358 = vsel %vm343, %v163, %v227
    %v359 = vsel %vm343, %v164, %v229
    %v360 = vsel %vm343, %v165, %v231
    %v361 = vsel %vm343, %v166, %v233
    %v362 = vsel %vm343, %v167, %v235
    %v363 = vsel %vm343, %v168, %v237
    %v364 = vsel %vm343, %v169, %v239
    %v365 = vsel %vm343, %v170, %v241
    %v366 = vsel %vm343, %v171, %v243
    %v367 = vsel %vm343, %v172, %v245
    %vm368 = vcmask 523264
    %v369 = vsel %vm368, %v344, %v272
    %v370 = vsel %vm368, %v345, %v274
    %v371 = vsel %vm368, %v346, %v276
    %v372 = vsel %vm368, %v347, %v278
    %v373 = vsel %vm368, %v348, %v280
    %v374 = vsel %vm368, %v349, %v282
    %v375 = vsel %vm368, %v350, %v284
    %v376 = vsel %vm368, %v351, %v286
    %v377 = vsel %vm368, %v352, %v288
    %v378 = vsel %vm368, %v353, %v290
    %v379 = vsel %vm368, %v354, %v292
    %v380 = vsel %vm368, %v355, %v294
    %v381 = vsel %vm368, %v356, %v296
    %v382 = vsel %vm368, %v357, %v298
    %v383 = vsel %vm368, %v358, %v300
    %v384 = vsel %vm368, %v359, %v302
    %v385 = vsel %vm368, %v360, %v304
    %v386 = vsel %vm368, %v361, %v306
    %v387 = vsel %vm368, %v362, %v308
    %v388 = vsel %vm368, %v363, %v310
    %v389 = vsel %vm368, %v364, %v312
    %v390 = vsel %vm368, %v365, %v314
    %v391 = vsel %vm368, %v366, %v316
    %v392 = vsel %vm368, %v367, %v318
    %v393 = vld [vmem:[#allocation2] sm:$0xff]
    %v394 = vld [vmem:[#allocation2 + $0x8] sm:$0xff]
    %v395 = vld [vmem:[#allocation2 + $0x10] sm:$0xff]
    %v396 = vld [vmem:[#allocation2 + $0x18] sm:$0xff]
    %v397 = vld [vmem:[#allocation2 + $0x20] sm:$0xff]
    %v398 = vld [vmem:[#allocation2 + $0x28] sm:$0xff]
    %v399 = vld [vmem:[#allocation2 + $0x30] sm:$0xff]
    %v400 = vld [vmem:[#allocation2 + $0x38] sm:$0xff]
    %v401 = vld [vmem:[#allocation2 + $0x40] sm:$0xff]
    %v402 = vld [vmem:[#allocation2 + $0x48] sm:$0xff]
    %v403 = vld [vmem:[#allocation2 + $0x50] sm:$0xff]
    %v404 = vld [vmem:[#allocation2 + $0x58] sm:$0xff]
    %v405 = vld [vmem:[#allocation2 + $0x60] sm:$0xff]
    %v406 = vld [vmem:[#allocation2 + $0x68] sm:$0xff]
    %v407 = vld [vmem:[#allocation2 + $0x70] sm:$0xff]
    %v408 = vld [vmem:[#allocation2 + $0x78] sm:$0xff]
    %v409 = vld [vmem:[#allocation2 + $0x80] sm:$0xff]
    %v410 = vld [vmem:[#allocation2 + $0x88] sm:$0xff]
    %v411 = vld [vmem:[#allocation2 + $0x90] sm:$0xff]
    %v412 = vld [vmem:[#allocation2 + $0x98] sm:$0xff]
    %v413 = vld [vmem:[#allocation2 + $0xa0] sm:$0xff]
    %v414 = vld [vmem:[#allocation2 + $0xa8] sm:$0xff]
    %v415 = vld [vmem:[#allocation2 + $0xb0] sm:$0xff]
    %v416 = vld [vmem:[#allocation2 + $0xb8] sm:$0xff]
    %v417 = vld [vmem:[#allocation2 + $0xc0] sm:$0xff]
    %v418 = vld [vmem:[#allocation2 + $0xc8] sm:$0xff]
    %v419 = vld [vmem:[#allocation2 + $0xd0] sm:$0xff]
    %v420 = vld [vmem:[#allocation2 + $0xd8] sm:$0xff]
    %v421 = vld [vmem:[#allocation2 + $0xe0] sm:$0xff]
    %v422 = vld [vmem:[#allocation2 + $0xe8] sm:$0xff]
    %v423 = vld [vmem:[#allocation2 + $0xf0] sm:$0xff]
    %v424 = vld [vmem:[#allocation2 + $0xf8] sm:$0xff]
    %v425 = vld [vmem:[#allocation2 + $0x100] sm:$0xff]
    %v426 = vld [vmem:[#allocation2 + $0x108] sm:$0xff]
    %v427 = vld [vmem:[#allocation2 + $0x110] sm:$0xff]
    %v428 = vld [vmem:[#allocation2 + $0x118] sm:$0xff]
    %v429 = vld [vmem:[#allocation2 + $0x120] sm:$0xff]
    %v430 = vld [vmem:[#allocation2 + $0x128] sm:$0xff]
    %v431 = vld [vmem:[#allocation2 + $0x130] sm:$0xff]
    %v432 = vld [vmem:[#allocation2 + $0x138] sm:$0xff]
    %v433 = vld [vmem:[#allocation2 + $0x140] sm:$0xff]
    %v434 = vld [vmem:[#allocation2 + $0x148] sm:$0xff]
    %v435 = vld [vmem:[#allocation2 + $0x150] sm:$0xff]
    %v436 = vld [vmem:[#allocation2 + $0x158] sm:$0xff]
    %v437 = vld [vmem:[#allocation2 + $0x160] sm:$0xff]
    %v438 = vld [vmem:[#allocation2 + $0x168] sm:$0xff]
    %v439 = vld [vmem:[#allocation2 + $0x170] sm:$0xff]
    %v440 = vld [vmem:[#allocation2 + $0x178] sm:$0xff]
    %v441 = vld [vmem:[#allocation5] sm:$0xf]
    %v443 = vperm.slane %v441, 0
    %v444 = vperm.slane %v441, 1
    %v445 = vperm.slane %v441, 2
    %v446 = vperm.slane %v441, 3
    %vm451 = vcmask 785408
    %v453 = vsel %vm451, %v369, 0
    %v456 = vsel %vm451, %v370, 0
    %v459 = vsel %vm451, %v371, 0
    %v462 = vsel %vm451, %v372, 0
    %v465 = vsel %vm451, %v373, 0
    %v468 = vsel %vm451, %v374, 0
    %v471 = vsel %vm451, %v375, 0
    %v474 = vsel %vm451, %v376, 0
    %v477 = vsel %vm451, %v377, 0
    %v480 = vsel %vm451, %v378, 0
    %v483 = vsel %vm451, %v379, 0
    %v486 = vsel %vm451, %v380, 0
    %v489 = vsel %vm451, %v381, 0
    %v492 = vsel %vm451, %v382, 0
    %v495 = vsel %vm451, %v383, 0
    %v498 = vsel %vm451, %v384, 0
    %v501 = vsel %vm451, %v385, 0
    %v504 = vsel %vm451, %v386, 0
    %v507 = vsel %vm451, %v387, 0
    %v510 = vsel %vm451, %v388, 0
    %v513 = vsel %vm451, %v389, 0
    %v516 = vsel %vm451, %v390, 0
    %v519 = vsel %vm451, %v391, 0
    %v522 = vsel %vm451, %v392, 0
    %524 = vmatpush.msra.mxu0 0.0
    %525 = vmatpush.msra.mxu0 0.0
    %526 = vmatpush.msra.mxu0 0.0
    %527 = vmatpush.msra.mxu0 0.0
    %528 = vmatpush.msra.mxu0 %v437
    %529 = vmatpush.msra.mxu0 %v433
    %530 = vmatpush.msra.mxu0 %v429
    %531 = vmatpush.msra.mxu0 %v425
    %532 = vmatpush.msra.mxu0 %v421
    %533 = vmatpush.msra.mxu0 %v417
    %534 = vmatpush.msra.mxu0 %v413
    %535 = vmatpush.msra.mxu0 %v409
    %536 = vmatpush.msra.mxu0 %v405
    %537 = vmatpush.msra.mxu0 %v401
    %538 = vmatpush.msra.mxu0 %v397
    %539 = vmatpush.msra.mxu0 %v393
    %540 = vmatmul.f32.gmra.mxu0 %v453
    %v541 = vpop.f32.mrf.mxu0
    %v542 = vadd.f32 %v443, %v541
    %543 = vmatmul.f32.gmra.mxu0 %v456
    %v544 = vpop.f32.mrf.mxu0
    %v545 = vadd.f32 %v443, %v544
    %546 = vmatmul.f32.gmra.mxu0 %v459
    %v547 = vpop.f32.mrf.mxu0
    %v548 = vadd.f32 %v443, %v547
    %549 = vmatmul.f32.gmra.mxu0 %v462
    %v550 = vpop.f32.mrf.mxu0
    %v551 = vadd.f32 %v443, %v550
    %552 = vmatmul.f32.gmra.mxu0 %v465
    %v553 = vpop.f32.mrf.mxu0
    %v554 = vadd.f32 %v443, %v553
    %555 = vmatmul.f32.gmra.mxu0 %v468
    %v556 = vpop.f32.mrf.mxu0
    %v557 = vadd.f32 %v443, %v556
    %558 = vmatmul.f32.gmra.mxu0 %v471
    %v559 = vpop.f32.mrf.mxu0
    %v560 = vadd.f32 %v443, %v559
    %561 = vmatmul.f32.gmra.mxu0 %v474
    %v562 = vpop.f32.mrf.mxu0
    %v563 = vadd.f32 %v443, %v562
    %564 = vmatmul.f32.gmra.mxu0 %v477
    %v565 = vpop.f32.mrf.mxu0
    %v566 = vadd.f32 %v443, %v565
    %567 = vmatmul.f32.gmra.mxu0 %v480
    %v568 = vpop.f32.mrf.mxu0
    %v569 = vadd.f32 %v443, %v568
    %570 = vmatmul.f32.gmra.mxu0 %v483
    %v571 = vpop.f32.mrf.mxu0
    %v572 = vadd.f32 %v443, %v571
    %573 = vmatmul.f32.gmra.mxu0 %v486
    %v574 = vpop.f32.mrf.mxu0
    %v575 = vadd.f32 %v443, %v574
    %576 = vmatmul.f32.gmra.mxu0 %v489
    %v577 = vpop.f32.mrf.mxu0
    %v578 = vadd.f32 %v443, %v577
    %579 = vmatmul.f32.gmra.mxu0 %v492
    %v580 = vpop.f32.mrf.mxu0
    %v581 = vadd.f32 %v443, %v580
    %582 = vmatmul.f32.gmra.mxu0 %v495
    %v583 = vpop.f32.mrf.mxu0
    %v584 = vadd.f32 %v443, %v583
    %585 = vmatmul.f32.gmra.mxu0 %v498
    %v586 = vpop.f32.mrf.mxu0
    %v587 = vadd.f32 %v443, %v586
    %588 = vmatmul.f32.gmra.mxu0 %v501
    %v589 = vpop.f32.mrf.mxu0
    %v590 = vadd.f32 %v443, %v589
    %591 = vmatmul.f32.gmra.mxu0 %v504
    %v592 = vpop.f32.mrf.mxu0
    %v593 = vadd.f32 %v443, %v592
    %594 = vmatmul.f32.gmra.mxu0 %v507
    %v595 = vpop.f32.mrf.mxu0
    %v596 = vadd.f32 %v443, %v595
    %597 = vmatmul.f32.gmra.mxu0 %v510
    %v598 = vpop.f32.mrf.mxu0
    %v599 = vadd.f32 %v443, %v598
    %600 = vmatmul.f32.gmra.mxu0 %v513
    %v601 = vpop.f32.mrf.mxu0
    %v602 = vadd.f32 %v443, %v601
    %603 = vmatmul.f32.gmra.mxu0 %v516
    %v604 = vpop.f32.mrf.mxu0
    %v605 = vadd.f32 %v443, %v604
    %606 = vmatmul.f32.gmra.mxu0 %v519
    %v607 = vpop.f32.mrf.mxu0
    %v608 = vadd.f32 %v443, %v607
    %609 = vmatmul.f32.gmra.mxu0 %v522
    %v610 = vpop.f32.mrf.mxu0
    %v611 = vadd.f32 %v443, %v610
    %612 = vdwg.mxu0
    %613 = vmatpush.msra.mxu0 0.0
    %614 = vmatpush.msra.mxu0 0.0
    %615 = vmatpush.msra.mxu0 0.0
    %616 = vmatpush.msra.mxu0 0.0
    %617 = vmatpush.msra.mxu0 %v438
    %618 = vmatpush.msra.mxu0 %v434
    %619 = vmatpush.msra.mxu0 %v430
    %620 = vmatpush.msra.mxu0 %v426
    %621 = vmatpush.msra.mxu0 %v422
    %622 = vmatpush.msra.mxu0 %v418
    %623 = vmatpush.msra.mxu0 %v414
    %624 = vmatpush.msra.mxu0 %v410
    %625 = vmatpush.msra.mxu0 %v406
    %626 = vmatpush.msra.mxu0 %v402
    %627 = vmatpush.msra.mxu0 %v398
    %628 = vmatpush.msra.mxu0 %v394
    %629 = vmatmul.f32.gmra.mxu0 %v453
    %v630 = vpop.f32.mrf.mxu0
    %v631 = vadd.f32 %v444, %v630
    %632 = vmatmul.f32.gmra.mxu0 %v456
    %v633 = vpop.f32.mrf.mxu0
    %v634 = vadd.f32 %v444, %v633
    %635 = vmatmul.f32.gmra.mxu0 %v459
    %v636 = vpop.f32.mrf.mxu0
    %v637 = vadd.f32 %v444, %v636
    %638 = vmatmul.f32.gmra.mxu0 %v462
    %v639 = vpop.f32.mrf.mxu0
    %v640 = vadd.f32 %v444, %v639
    %641 = vmatmul.f32.gmra.mxu0 %v465
    %v642 = vpop.f32.mrf.mxu0
    %v643 = vadd.f32 %v444, %v642
    %644 = vmatmul.f32.gmra.mxu0 %v468
    %v645 = vpop.f32.mrf.mxu0
    %v646 = vadd.f32 %v444, %v645
    %647 = vmatmul.f32.gmra.mxu0 %v471
    %v648 = vpop.f32.mrf.mxu0
    %v649 = vadd.f32 %v444, %v648
    %650 = vmatmul.f32.gmra.mxu0 %v474
    %v651 = vpop.f32.mrf.mxu0
    %v652 = vadd.f32 %v444, %v651
    %653 = vmatmul.f32.gmra.mxu0 %v477
    %v654 = vpop.f32.mrf.mxu0
    %v655 = vadd.f32 %v444, %v654
    %656 = vmatmul.f32.gmra.mxu0 %v480
    %v657 = vpop.f32.mrf.mxu0
    %v658 = vadd.f32 %v444, %v657
    %659 = vmatmul.f32.gmra.mxu0 %v483
    %v660 = vpop.f32.mrf.mxu0
    %v661 = vadd.f32 %v444, %v660
    %662 = vmatmul.f32.gmra.mxu0 %v486
    %v663 = vpop.f32.mrf.mxu0
    %v664 = vadd.f32 %v444, %v663
    %665 = vmatmul.f32.gmra.mxu0 %v489
    %v666 = vpop.f32.mrf.mxu0
    %v667 = vadd.f32 %v444, %v666
    %668 = vmatmul.f32.gmra.mxu0 %v492
    %v669 = vpop.f32.mrf.mxu0
    %v670 = vadd.f32 %v444, %v669
    %671 = vmatmul.f32.gmra.mxu0 %v495
    %v672 = vpop.f32.mrf.mxu0
    %v673 = vadd.f32 %v444, %v672
    %674 = vmatmul.f32.gmra.mxu0 %v498
    %v675 = vpop.f32.mrf.mxu0
    %v676 = vadd.f32 %v444, %v675
    %677 = vmatmul.f32.gmra.mxu0 %v501
    %v678 = vpop.f32.mrf.mxu0
    %v679 = vadd.f32 %v444, %v678
    %680 = vmatmul.f32.gmra.mxu0 %v504
    %v681 = vpop.f32.mrf.mxu0
    %v682 = vadd.f32 %v444, %v681
    %683 = vmatmul.f32.gmra.mxu0 %v507
    %v684 = vpop.f32.mrf.mxu0
    %v685 = vadd.f32 %v444, %v684
    %686 = vmatmul.f32.gmra.mxu0 %v510
    %v687 = vpop.f32.mrf.mxu0
    %v688 = vadd.f32 %v444, %v687
    %689 = vmatmul.f32.gmra.mxu0 %v513
    %v690 = vpop.f32.mrf.mxu0
    %v691 = vadd.f32 %v444, %v690
    %692 = vmatmul.f32.gmra.mxu0 %v516
    %v693 = vpop.f32.mrf.mxu0
    %v694 = vadd.f32 %v444, %v693
    %695 = vmatmul.f32.gmra.mxu0 %v519
    %v696 = vpop.f32.mrf.mxu0
    %v697 = vadd.f32 %v444, %v696
    %698 = vmatmul.f32.gmra.mxu0 %v522
    %v699 = vpop.f32.mrf.mxu0
    %v700 = vadd.f32 %v444, %v699
    %701 = vdwg.mxu0
    %702 = vmatpush.msra.mxu0 0.0
    %703 = vmatpush.msra.mxu0 0.0
    %704 = vmatpush.msra.mxu0 0.0
    %705 = vmatpush.msra.mxu0 0.0
    %706 = vmatpush.msra.mxu0 %v439
    %707 = vmatpush.msra.mxu0 %v435
    %708 = vmatpush.msra.mxu0 %v431
    %709 = vmatpush.msra.mxu0 %v427
    %710 = vmatpush.msra.mxu0 %v423
    %711 = vmatpush.msra.mxu0 %v419
    %712 = vmatpush.msra.mxu0 %v415
    %713 = vmatpush.msra.mxu0 %v411
    %714 = vmatpush.msra.mxu0 %v407
    %715 = vmatpush.msra.mxu0 %v403
    %716 = vmatpush.msra.mxu0 %v399
    %717 = vmatpush.msra.mxu0 %v395
    %718 = vmatmul.f32.gmra.mxu0 %v453
    %v719 = vpop.f32.mrf.mxu0
    %v720 = vadd.f32 %v445, %v719
    %721 = vmatmul.f32.gmra.mxu0 %v456
    %v722 = vpop.f32.mrf.mxu0
    %v723 = vadd.f32 %v445, %v722
    %724 = vmatmul.f32.gmra.mxu0 %v459
    %v725 = vpop.f32.mrf.mxu0
    %v726 = vadd.f32 %v445, %v725
    %727 = vmatmul.f32.gmra.mxu0 %v462
    %v728 = vpop.f32.mrf.mxu0
    %v729 = vadd.f32 %v445, %v728
    %730 = vmatmul.f32.gmra.mxu0 %v465
    %v731 = vpop.f32.mrf.mxu0
    %v732 = vadd.f32 %v445, %v731
    %733 = vmatmul.f32.gmra.mxu0 %v468
    %v734 = vpop.f32.mrf.mxu0
    %v735 = vadd.f32 %v445, %v734
    %736 = vmatmul.f32.gmra.mxu0 %v471
    %v737 = vpop.f32.mrf.mxu0
    %v738 = vadd.f32 %v445, %v737
    %739 = vmatmul.f32.gmra.mxu0 %v474
    %v740 = vpop.f32.mrf.mxu0
    %v741 = vadd.f32 %v445, %v740
    %742 = vmatmul.f32.gmra.mxu0 %v477
    %v743 = vpop.f32.mrf.mxu0
    %v744 = vadd.f32 %v445, %v743
    %745 = vmatmul.f32.gmra.mxu0 %v480
    %v746 = vpop.f32.mrf.mxu0
    %v747 = vadd.f32 %v445, %v746
    %748 = vmatmul.f32.gmra.mxu0 %v483
    %v749 = vpop.f32.mrf.mxu0
    %v750 = vadd.f32 %v445, %v749
    %751 = vmatmul.f32.gmra.mxu0 %v486
    %v752 = vpop.f32.mrf.mxu0
    %v753 = vadd.f32 %v445, %v752
    %754 = vmatmul.f32.gmra.mxu0 %v489
    %v755 = vpop.f32.mrf.mxu0
    %v756 = vadd.f32 %v445, %v755
    %757 = vmatmul.f32.gmra.mxu0 %v492
    %v758 = vpop.f32.mrf.mxu0
    %v759 = vadd.f32 %v445, %v758
    %760 = vmatmul.f32.gmra.mxu0 %v495
    %v761 = vpop.f32.mrf.mxu0
    %v762 = vadd.f32 %v445, %v761
    %763 = vmatmul.f32.gmra.mxu0 %v498
    %v764 = vpop.f32.mrf.mxu0
    %v765 = vadd.f32 %v445, %v764
    %766 = vmatmul.f32.gmra.mxu0 %v501
    %v767 = vpop.f32.mrf.mxu0
    %v768 = vadd.f32 %v445, %v767
    %769 = vmatmul.f32.gmra.mxu0 %v504
    %v770 = vpop.f32.mrf.mxu0
    %v771 = vadd.f32 %v445, %v770
    %772 = vmatmul.f32.gmra.mxu0 %v507
    %v773 = vpop.f32.mrf.mxu0
    %v774 = vadd.f32 %v445, %v773
    %775 = vmatmul.f32.gmra.mxu0 %v510
    %v776 = vpop.f32.mrf.mxu0
    %v777 = vadd.f32 %v445, %v776
    %778 = vmatmul.f32.gmra.mxu0 %v513
    %v779 = vpop.f32.mrf.mxu0
    %v780 = vadd.f32 %v445, %v779
    %781 = vmatmul.f32.gmra.mxu0 %v516
    %v782 = vpop.f32.mrf.mxu0
    %v783 = vadd.f32 %v445, %v782
    %784 = vmatmul.f32.gmra.mxu0 %v519
    %v785 = vpop.f32.mrf.mxu0
    %v786 = vadd.f32 %v445, %v785
    %787 = vmatmul.f32.gmra.mxu0 %v522
    %v788 = vpop.f32.mrf.mxu0
    %v789 = vadd.f32 %v445, %v788
    %790 = vdwg.mxu0
    %791 = vmatpush.msra.mxu0 0.0
    %792 = vmatpush.msra.mxu0 0.0
    %793 = vmatpush.msra.mxu0 0.0
    %794 = vmatpush.msra.mxu0 0.0
    %795 = vmatpush.msra.mxu0 %v440
    %796 = vmatpush.msra.mxu0 %v436
    %797 = vmatpush.msra.mxu0 %v432
    %798 = vmatpush.msra.mxu0 %v428
    %799 = vmatpush.msra.mxu0 %v424
    %800 = vmatpush.msra.mxu0 %v420
    %801 = vmatpush.msra.mxu0 %v416
    %802 = vmatpush.msra.mxu0 %v412
    %803 = vmatpush.msra.mxu0 %v408
    %804 = vmatpush.msra.mxu0 %v404
    %805 = vmatpush.msra.mxu0 %v400
    %806 = vmatpush.msra.mxu0 %v396
    %807 = vmatmul.f32.gmra.mxu0 %v453
    %v808 = vpop.f32.mrf.mxu0
    %v809 = vadd.f32 %v446, %v808
    %810 = vmatmul.f32.gmra.mxu0 %v456
    %v811 = vpop.f32.mrf.mxu0
    %v812 = vadd.f32 %v446, %v811
    %813 = vmatmul.f32.gmra.mxu0 %v459
    %v814 = vpop.f32.mrf.mxu0
    %v815 = vadd.f32 %v446, %v814
    %816 = vmatmul.f32.gmra.mxu0 %v462
    %v817 = vpop.f32.mrf.mxu0
    %v818 = vadd.f32 %v446, %v817
    %819 = vmatmul.f32.gmra.mxu0 %v465
    %v820 = vpop.f32.mrf.mxu0
    %v821 = vadd.f32 %v446, %v820
    %822 = vmatmul.f32.gmra.mxu0 %v468
    %v823 = vpop.f32.mrf.mxu0
    %v824 = vadd.f32 %v446, %v823
    %825 = vmatmul.f32.gmra.mxu0 %v471
    %v826 = vpop.f32.mrf.mxu0
    %v827 = vadd.f32 %v446, %v826
    %828 = vmatmul.f32.gmra.mxu0 %v474
    %v829 = vpop.f32.mrf.mxu0
    %v830 = vadd.f32 %v446, %v829
    %831 = vmatmul.f32.gmra.mxu0 %v477
    %v832 = vpop.f32.mrf.mxu0
    %v833 = vadd.f32 %v446, %v832
    %834 = vmatmul.f32.gmra.mxu0 %v480
    %v835 = vpop.f32.mrf.mxu0
    %v836 = vadd.f32 %v446, %v835
    %837 = vmatmul.f32.gmra.mxu0 %v483
    %v838 = vpop.f32.mrf.mxu0
    %v839 = vadd.f32 %v446, %v838
    %840 = vmatmul.f32.gmra.mxu0 %v486
    %v841 = vpop.f32.mrf.mxu0
    %v842 = vadd.f32 %v446, %v841
    %843 = vmatmul.f32.gmra.mxu0 %v489
    %v844 = vpop.f32.mrf.mxu0
    %v845 = vadd.f32 %v446, %v844
    %846 = vmatmul.f32.gmra.mxu0 %v492
    %v847 = vpop.f32.mrf.mxu0
    %v848 = vadd.f32 %v446, %v847
    %849 = vmatmul.f32.gmra.mxu0 %v495
    %v850 = vpop.f32.mrf.mxu0
    %v851 = vadd.f32 %v446, %v850
    %852 = vmatmul.f32.gmra.mxu0 %v498
    %v853 = vpop.f32.mrf.mxu0
    %v854 = vadd.f32 %v446, %v853
    %855 = vmatmul.f32.gmra.mxu0 %v501
    %v856 = vpop.f32.mrf.mxu0
    %v857 = vadd.f32 %v446, %v856
    %858 = vmatmul.f32.gmra.mxu0 %v504
    %v859 = vpop.f32.mrf.mxu0
    %v860 = vadd.f32 %v446, %v859
    %861 = vmatmul.f32.gmra.mxu0 %v507
    %v862 = vpop.f32.mrf.mxu0
    %v863 = vadd.f32 %v446, %v862
    %864 = vmatmul.f32.gmra.mxu0 %v510
    %v865 = vpop.f32.mrf.mxu0
    %v866 = vadd.f32 %v446, %v865
    %867 = vmatmul.f32.gmra.mxu0 %v513
    %v868 = vpop.f32.mrf.mxu0
    %v869 = vadd.f32 %v446, %v868
    %870 = vmatmul.f32.gmra.mxu0 %v516
    %v871 = vpop.f32.mrf.mxu0
    %v872 = vadd.f32 %v446, %v871
    %873 = vmatmul.f32.gmra.mxu0 %v519
    %v874 = vpop.f32.mrf.mxu0
    %v875 = vadd.f32 %v446, %v874
    %876 = vmatmul.f32.gmra.mxu0 %v522
    %v877 = vpop.f32.mrf.mxu0
    %v878 = vadd.f32 %v446, %v877
    %879 = vdwg.mxu0
    %v880 = vmax.f32 %v542, 0.0
    %v881 = vmax.f32 %v631, 0.0
    %v882 = vmax.f32 %v720, 0.0
    %v883 = vmax.f32 %v809, 0.0
    %v884 = vmax.f32 %v545, 0.0
    %v885 = vmax.f32 %v634, 0.0
    %v886 = vmax.f32 %v723, 0.0
    %v887 = vmax.f32 %v812, 0.0
    %v888 = vmax.f32 %v548, 0.0
    %v889 = vmax.f32 %v637, 0.0
    %v890 = vmax.f32 %v726, 0.0
    %v891 = vmax.f32 %v815, 0.0
    %v892 = vmax.f32 %v551, 0.0
    %v893 = vmax.f32 %v640, 0.0
    %v894 = vmax.f32 %v729, 0.0
    %v895 = vmax.f32 %v818, 0.0
    %v896 = vmax.f32 %v554, 0.0
    %v897 = vmax.f32 %v643, 0.0
    %v898 = vmax.f32 %v732, 0.0
    %v899 = vmax.f32 %v821, 0.0
    %v900 = vmax.f32 %v557, 0.0
    %v901 = vmax.f32 %v646, 0.0
    %v902 = vmax.f32 %v735, 0.0
    %v903 = vmax.f32 %v824, 0.0
    %v904 = vmax.f32 %v560, 0.0
    %v905 = vmax.f32 %v649, 0.0
    %v906 = vmax.f32 %v738, 0.0
    %v907 = vmax.f32 %v827, 0.0
    %v908 = vmax.f32 %v563, 0.0
    %v909 = vmax.f32 %v652, 0.0
    %v910 = vmax.f32 %v741, 0.0
    %v911 = vmax.f32 %v830, 0.0
    %v912 = vmax.f32 %v566, 0.0
    %v913 = vmax.f32 %v655, 0.0
    %v914 = vmax.f32 %v744, 0.0
    %v915 = vmax.f32 %v833, 0.0
    %v916 = vmax.f32 %v569, 0.0
    %v917 = vmax.f32 %v658, 0.0
    %v918 = vmax.f32 %v747, 0.0
    %v919 = vmax.f32 %v836, 0.0
    %v920 = vmax.f32 %v572, 0.0
    %v921 = vmax.f32 %v661, 0.0
    %v922 = vmax.f32 %v750, 0.0
    %v923 = vmax.f32 %v839, 0.0
    %v924 = vmax.f32 %v575, 0.0
    %v925 = vmax.f32 %v664, 0.0
    %v926 = vmax.f32 %v753, 0.0
    %v927 = vmax.f32 %v842, 0.0
    %v928 = vmax.f32 %v578, 0.0
    %v929 = vmax.f32 %v667, 0.0
    %v930 = vmax.f32 %v756, 0.0
    %v931 = vmax.f32 %v845, 0.0
    %v932 = vmax.f32 %v581, 0.0
    %v933 = vmax.f32 %v670, 0.0
    %v934 = vmax.f32 %v759, 0.0
    %v935 = vmax.f32 %v848, 0.0
    %v936 = vmax.f32 %v584, 0.0
    %v937 = vmax.f32 %v673, 0.0
    %v938 = vmax.f32 %v762, 0.0
    %v939 = vmax.f32 %v851, 0.0
    %v940 = vmax.f32 %v587, 0.0
    %v941 = vmax.f32 %v676, 0.0
    %v942 = vmax.f32 %v765, 0.0
    %v943 = vmax.f32 %v854, 0.0
    %v944 = vmax.f32 %v590, 0.0
    %v945 = vmax.f32 %v679, 0.0
    %v946 = vmax.f32 %v768, 0.0
    %v947 = vmax.f32 %v857, 0.0
    %v948 = vmax.f32 %v593, 0.0
    %v949 = vmax.f32 %v682, 0.0
    %v950 = vmax.f32 %v771, 0.0
    %v951 = vmax.f32 %v860, 0.0
    %v952 = vmax.f32 %v596, 0.0
    %v953 = vmax.f32 %v685, 0.0
    %v954 = vmax.f32 %v774, 0.0
    %v955 = vmax.f32 %v863, 0.0
    %v956 = vmax.f32 %v599, 0.0
    %v957 = vmax.f32 %v688, 0.0
    %v958 = vmax.f32 %v777, 0.0
    %v959 = vmax.f32 %v866, 0.0
    %v960 = vmax.f32 %v602, 0.0
    %v961 = vmax.f32 %v691, 0.0
    %v962 = vmax.f32 %v780, 0.0
    %v963 = vmax.f32 %v869, 0.0
    %v964 = vmax.f32 %v605, 0.0
    %v965 = vmax.f32 %v694, 0.0
    %v966 = vmax.f32 %v783, 0.0
    %v967 = vmax.f32 %v872, 0.0
    %v968 = vmax.f32 %v608, 0.0
    %v969 = vmax.f32 %v697, 0.0
    %v970 = vmax.f32 %v786, 0.0
    %v971 = vmax.f32 %v875, 0.0
    %v972 = vmax.f32 %v611, 0.0
    %v973 = vmax.f32 %v700, 0.0
    %v974 = vmax.f32 %v789, 0.0
    %v975 = vmax.f32 %v878, 0.0
    %v976 = vmax.f32 %v880, %v884
    %v977 = vmax.f32 %v881, %v885
    %v978 = vmax.f32 %v882, %v886
    %v979 = vmax.f32 %v883, %v887
    %v980 = vmax.f32 %v888, %v892
    %v981 = vmax.f32 %v889, %v893
    %v982 = vmax.f32 %v890, %v894
    %v983 = vmax.f32 %v891, %v895
    %v984 = vmax.f32 %v896, %v900
    %v985 = vmax.f32 %v897, %v901
    %v986 = vmax.f32 %v898, %v902
    %v987 = vmax.f32 %v899, %v903
    %v988 = vmax.f32 %v904, %v908
    %v989 = vmax.f32 %v905, %v909
    %v990 = vmax.f32 %v906, %v910
    %v991 = vmax.f32 %v907, %v911
    %v992 = vmax.f32 %v912, %v916
    %v993 = vmax.f32 %v913, %v917
    %v994 = vmax.f32 %v914, %v918
    %v995 = vmax.f32 %v915, %v919
    %v996 = vmax.f32 %v920, %v924
    %v997 = vmax.f32 %v921, %v925
    %v998 = vmax.f32 %v922, %v926
    %v999 = vmax.f32 %v923, %v927
    %v1000 = vmax.f32 %v928, %v932
    %v1001 = vmax.f32 %v929, %v933
    %v1002 = vmax.f32 %v930, %v934
    %v1003 = vmax.f32 %v931, %v935
    %v1004 = vmax.f32 %v936, %v940
    %v1005 = vmax.f32 %v937, %v941
    %v1006 = vmax.f32 %v938, %v942
    %v1007 = vmax.f32 %v939, %v943
    %v1008 = vmax.f32 %v944, %v948
    %v1009 = vmax.f32 %v945, %v949
    %v1010 = vmax.f32 %v946, %v950
    %v1011 = vmax.f32 %v947, %v951
    %v1012 = vmax.f32 %v952, %v956
    %v1013 = vmax.f32 %v953, %v957
    %v1014 = vmax.f32 %v954, %v958
    %v1015 = vmax.f32 %v955, %v959
    %v1016 = vmax.f32 %v960, %v964
    %v1017 = vmax.f32 %v961, %v965
    %v1018 = vmax.f32 %v962, %v966
    %v1019 = vmax.f32 %v963, %v967
    %v1020 = vmax.f32 %v968, %v972
    %v1021 = vmax.f32 %v969, %v973
    %v1022 = vmax.f32 %v970, %v974
    %v1023 = vmax.f32 %v971, %v975
    %v1024 = vmax.f32 %v976, %v978
    %v1025 = vmax.f32 %v977, %v979
    %v1026 = vmax.f32 %v980, %v982
    %v1027 = vmax.f32 %v981, %v983
    %v1028 = vmax.f32 %v984, %v986
    %v1029 = vmax.f32 %v985, %v987
    %v1030 = vmax.f32 %v988, %v990
    %v1031 = vmax.f32 %v989, %v991
    %v1032 = vmax.f32 %v992, %v994
    %v1033 = vmax.f32 %v993, %v995
    %v1034 = vmax.f32 %v996, %v998
    %v1035 = vmax.f32 %v997, %v999
    %v1036 = vmax.f32 %v1000, %v1002
    %v1037 = vmax.f32 %v1001, %v1003
    %v1038 = vmax.f32 %v1004, %v1006
    %v1039 = vmax.f32 %v1005, %v1007
    %v1040 = vmax.f32 %v1008, %v1010
    %v1041 = vmax.f32 %v1009, %v1011
    %v1042 = vmax.f32 %v1012, %v1014
    %v1043 = vmax.f32 %v1013, %v1015
    %v1044 = vmax.f32 %v1016, %v1018
    %v1045 = vmax.f32 %v1017, %v1019
    %v1046 = vmax.f32 %v1020, %v1022
    %v1047 = vmax.f32 %v1021, %v1023
    %v1048 = vld [vmem:[#allocation7] sm:$0xff]
    %v1049 = vld [vmem:[#allocation7 + $0x8] sm:$0xff]
    %v1050 = vld [vmem:[#allocation7 + $0x10] sm:$0xff]
    %v1051 = vld [vmem:[#allocation7 + $0x18] sm:$0xff]
    %v1052 = vld [vmem:[#allocation7 + $0x20] sm:$0xff]
    %v1053 = vld [vmem:[#allocation7 + $0x28] sm:$0xff]
    %v1054 = vld [vmem:[#allocation7 + $0x30] sm:$0xff]
    %v1055 = vld [vmem:[#allocation7 + $0x38] sm:$0xff]
    %v1056 = vld [vmem:[#allocation7 + $0x40] sm:$0xff]
    %v1057 = vld [vmem:[#allocation7 + $0x48] sm:$0xff]
    %v1058 = vld [vmem:[#allocation7 + $0x50] sm:$0xff]
    %v1059 = vld [vmem:[#allocation7 + $0x58] sm:$0xff]
    %v1060 = vld [vmem:[#allocation7 + $0x60] sm:$0xff]
    %v1061 = vld [vmem:[#allocation7 + $0x68] sm:$0xff]
    %v1062 = vld [vmem:[#allocation7 + $0x70] sm:$0xff]
    %v1063 = vld [vmem:[#allocation7 + $0x78] sm:$0xff]
    %v1064 = vld [vmem:[#allocation7 + $0x80] sm:$0xff]
    %v1065 = vld [vmem:[#allocation7 + $0x88] sm:$0xff]
    %v1066 = vld [vmem:[#allocation7 + $0x90] sm:$0xff]
    %v1067 = vld [vmem:[#allocation7 + $0x98] sm:$0xff]
    %v1068 = vld [vmem:[#allocation7 + $0xa0] sm:$0xff]
    %v1069 = vld [vmem:[#allocation7 + $0xa8] sm:$0xff]
    %v1070 = vld [vmem:[#allocation7 + $0xb0] sm:$0xff]
    %v1071 = vld [vmem:[#allocation7 + $0xb8] sm:$0xff]
    %v1072 = vld [vmem:[#allocation7 + $0xc0] sm:$0xff]
    %v1073 = vld [vmem:[#allocation7 + $0xc8] sm:$0xff]
    %v1074 = vld [vmem:[#allocation7 + $0xd0] sm:$0xff]
    %v1075 = vld [vmem:[#allocation7 + $0xd8] sm:$0xff]
    %v1076 = vld [vmem:[#allocation7 + $0xe0] sm:$0xff]
    %v1077 = vld [vmem:[#allocation7 + $0xe8] sm:$0xff]
    %v1078 = vld [vmem:[#allocation7 + $0xf0] sm:$0xff]
    %v1079 = vld [vmem:[#allocation7 + $0xf8] sm:$0xff]
    %v1080 = vld [vmem:[#allocation7 + $0x100] sm:$0xff]
    %v1081 = vld [vmem:[#allocation7 + $0x108] sm:$0xff]
    %v1082 = vld [vmem:[#allocation7 + $0x110] sm:$0xff]
    %v1083 = vld [vmem:[#allocation7 + $0x118] sm:$0xff]
    %v1084 = vld [vmem:[#allocation7 + $0x120] sm:$0xff]
    %v1085 = vld [vmem:[#allocation7 + $0x128] sm:$0xff]
    %v1086 = vld [vmem:[#allocation7 + $0x130] sm:$0xff]
    %v1087 = vld [vmem:[#allocation7 + $0x138] sm:$0xff]
    %v1088 = vld [vmem:[#allocation7 + $0x140] sm:$0xff]
    %v1089 = vld [vmem:[#allocation7 + $0x148] sm:$0xff]
    %v1090 = vld [vmem:[#allocation7 + $0x150] sm:$0xff]
    %v1091 = vld [vmem:[#allocation7 + $0x158] sm:$0xff]
    %v1092 = vld [vmem:[#allocation7 + $0x160] sm:$0xff]
    %v1093 = vld [vmem:[#allocation7 + $0x168] sm:$0xff]
    %v1094 = vld [vmem:[#allocation7 + $0x170] sm:$0xff]
    %v1095 = vld [vmem:[#allocation7 + $0x178] sm:$0xff]
    %v1096 = vld [vmem:[#allocation7 + $0x180] sm:$0xff]
    %v1097 = vld [vmem:[#allocation7 + $0x188] sm:$0xff]
    %v1098 = vld [vmem:[#allocation7 + $0x190] sm:$0xff]
    %v1099 = vld [vmem:[#allocation7 + $0x198] sm:$0xff]
    %v1100 = vld [vmem:[#allocation7 + $0x1a0] sm:$0xff]
    %v1101 = vld [vmem:[#allocation7 + $0x1a8] sm:$0xff]
    %v1102 = vld [vmem:[#allocation7 + $0x1b0] sm:$0xff]
    %v1103 = vld [vmem:[#allocation7 + $0x1b8] sm:$0xff]
    %v1104 = vld [vmem:[#allocation7 + $0x1c0] sm:$0xff]
    %v1105 = vld [vmem:[#allocation7 + $0x1c8] sm:$0xff]
    %v1106 = vld [vmem:[#allocation7 + $0x1d0] sm:$0xff]
    %v1107 = vld [vmem:[#allocation7 + $0x1d8] sm:$0xff]
    %v1108 = vld [vmem:[#allocation7 + $0x1e0] sm:$0xff]
    %v1109 = vld [vmem:[#allocation7 + $0x1e8] sm:$0xff]
    %v1110 = vld [vmem:[#allocation7 + $0x1f0] sm:$0xff]
    %v1111 = vld [vmem:[#allocation7 + $0x1f8] sm:$0xff]
    %v1112 = vld [vmem:[#allocation7 + $0x200] sm:$0xff]
    %v1113 = vld [vmem:[#allocation7 + $0x208] sm:$0xff]
    %v1114 = vld [vmem:[#allocation7 + $0x210] sm:$0xff]
    %v1115 = vld [vmem:[#allocation7 + $0x218] sm:$0xff]
    %v1116 = vld [vmem:[#allocation7 + $0x220] sm:$0xff]
    %v1117 = vld [vmem:[#allocation7 + $0x228] sm:$0xff]
    %v1118 = vld [vmem:[#allocation7 + $0x230] sm:$0xff]
    %v1119 = vld [vmem:[#allocation7 + $0x238] sm:$0xff]
    %v1120 = vld [vmem:[#allocation7 + $0x240] sm:$0xff]
    %v1121 = vld [vmem:[#allocation7 + $0x248] sm:$0xff]
    %v1122 = vld [vmem:[#allocation7 + $0x250] sm:$0xff]
    %v1123 = vld [vmem:[#allocation7 + $0x258] sm:$0xff]
    %v1124 = vld [vmem:[#allocation7 + $0x260] sm:$0xff]
    %v1125 = vld [vmem:[#allocation7 + $0x268] sm:$0xff]
    %v1126 = vld [vmem:[#allocation7 + $0x270] sm:$0xff]
    %v1127 = vld [vmem:[#allocation7 + $0x278] sm:$0xff]
    %v1128 = vld [vmem:[#allocation7 + $0x280] sm:$0xff]
    %v1129 = vld [vmem:[#allocation7 + $0x288] sm:$0xff]
    %v1130 = vld [vmem:[#allocation7 + $0x290] sm:$0xff]
    %v1131 = vld [vmem:[#allocation7 + $0x298] sm:$0xff]
    %v1132 = vld [vmem:[#allocation7 + $0x2a0] sm:$0xff]
    %v1133 = vld [vmem:[#allocation7 + $0x2a8] sm:$0xff]
    %v1134 = vld [vmem:[#allocation7 + $0x2b0] sm:$0xff]
    %v1135 = vld [vmem:[#allocation7 + $0x2b8] sm:$0xff]
    %v1136 = vld [vmem:[#allocation7 + $0x2c0] sm:$0xff]
    %v1137 = vld [vmem:[#allocation7 + $0x2c8] sm:$0xff]
    %v1138 = vld [vmem:[#allocation7 + $0x2d0] sm:$0xff]
    %v1139 = vld [vmem:[#allocation7 + $0x2d8] sm:$0xff]
    %v1140 = vld [vmem:[#allocation7 + $0x2e0] sm:$0xff]
    %v1141 = vld [vmem:[#allocation7 + $0x2e8] sm:$0xff]
    %v1142 = vld [vmem:[#allocation7 + $0x2f0] sm:$0xff]
    %v1143 = vld [vmem:[#allocation7 + $0x2f8] sm:$0xff]
    %v1144 = vld [vmem:[#allocation7 + $0x300] sm:$0xff]
    %v1145 = vld [vmem:[#allocation7 + $0x308] sm:$0xff]
    %v1146 = vld [vmem:[#allocation7 + $0x310] sm:$0xff]
    %v1147 = vld [vmem:[#allocation7 + $0x318] sm:$0xff]
    %v1148 = vld [vmem:[#allocation7 + $0x320] sm:$0xff]
    %v1149 = vld [vmem:[#allocation7 + $0x328] sm:$0xff]
    %v1150 = vld [vmem:[#allocation7 + $0x330] sm:$0xff]
    %v1151 = vld [vmem:[#allocation7 + $0x338] sm:$0xff]
    %v1152 = vld [vmem:[#allocation7 + $0x340] sm:$0xff]
    %v1153 = vld [vmem:[#allocation7 + $0x348] sm:$0xff]
    %v1154 = vld [vmem:[#allocation7 + $0x350] sm:$0xff]
    %v1155 = vld [vmem:[#allocation7 + $0x358] sm:$0xff]
    %v1156 = vld [vmem:[#allocation7 + $0x360] sm:$0xff]
    %v1157 = vld [vmem:[#allocation7 + $0x368] sm:$0xff]
    %v1158 = vld [vmem:[#allocation7 + $0x370] sm:$0xff]
    %v1159 = vld [vmem:[#allocation7 + $0x378] sm:$0xff]
    %v1160 = vld [vmem:[#allocation7 + $0x380] sm:$0xff]
    %v1161 = vld [vmem:[#allocation7 + $0x388] sm:$0xff]
    %v1162 = vld [vmem:[#allocation7 + $0x390] sm:$0xff]
    %v1163 = vld [vmem:[#allocation7 + $0x398] sm:$0xff]
    %v1164 = vld [vmem:[#allocation7 + $0x3a0] sm:$0xff]
    %v1165 = vld [vmem:[#allocation7 + $0x3a8] sm:$0xff]
    %v1166 = vld [vmem:[#allocation7 + $0x3b0] sm:$0xff]
    %v1167 = vld [vmem:[#allocation7 + $0x3b8] sm:$0xff]
    %v1168 = vld [vmem:[#allocation7 + $0x3c0] sm:$0xff]
    %v1169 = vld [vmem:[#allocation7 + $0x3c8] sm:$0xff]
    %v1170 = vld [vmem:[#allocation7 + $0x3d0] sm:$0xff]
    %v1171 = vld [vmem:[#allocation7 + $0x3d8] sm:$0xff]
    %v1172 = vld [vmem:[#allocation7 + $0x3e0] sm:$0xff]
    %v1173 = vld [vmem:[#allocation7 + $0x3e8] sm:$0xff]
    %v1174 = vld [vmem:[#allocation7 + $0x3f0] sm:$0xff]
    %v1175 = vld [vmem:[#allocation7 + $0x3f8] sm:$0xff]
    %v1176 = vld [vmem:[#allocation7 + $0x400] sm:$0xff]
    %v1177 = vld [vmem:[#allocation7 + $0x408] sm:$0xff]
    %v1178 = vld [vmem:[#allocation7 + $0x410] sm:$0xff]
    %v1179 = vld [vmem:[#allocation7 + $0x418] sm:$0xff]
    %v1180 = vld [vmem:[#allocation7 + $0x420] sm:$0xff]
    %v1181 = vld [vmem:[#allocation7 + $0x428] sm:$0xff]
    %v1182 = vld [vmem:[#allocation7 + $0x430] sm:$0xff]
    %v1183 = vld [vmem:[#allocation7 + $0x438] sm:$0xff]
    %v1184 = vld [vmem:[#allocation7 + $0x440] sm:$0xff]
    %v1185 = vld [vmem:[#allocation7 + $0x448] sm:$0xff]
    %v1186 = vld [vmem:[#allocation7 + $0x450] sm:$0xff]
    %v1187 = vld [vmem:[#allocation7 + $0x458] sm:$0xff]
    %v1188 = vld [vmem:[#allocation7 + $0x460] sm:$0xff]
    %v1189 = vld [vmem:[#allocation7 + $0x468] sm:$0xff]
    %v1190 = vld [vmem:[#allocation7 + $0x470] sm:$0xff]
    %v1191 = vld [vmem:[#allocation7 + $0x478] sm:$0xff]
    %v1192 = vld [vmem:[#allocation7 + $0x480] sm:$0xff]
    %v1193 = vld [vmem:[#allocation7 + $0x488] sm:$0xff]
    %v1194 = vld [vmem:[#allocation7 + $0x490] sm:$0xff]
    %v1195 = vld [vmem:[#allocation7 + $0x498] sm:$0xff]
    %v1196 = vld [vmem:[#allocation7 + $0x4a0] sm:$0xff]
    %v1197 = vld [vmem:[#allocation7 + $0x4a8] sm:$0xff]
    %v1198 = vld [vmem:[#allocation7 + $0x4b0] sm:$0xff]
    %v1199 = vld [vmem:[#allocation7 + $0x4b8] sm:$0xff]
    %v1200 = vld [vmem:[#allocation7 + $0x4c0] sm:$0xff]
    %v1201 = vld [vmem:[#allocation7 + $0x4c8] sm:$0xff]
    %v1202 = vld [vmem:[#allocation7 + $0x4d0] sm:$0xff]
    %v1203 = vld [vmem:[#allocation7 + $0x4d8] sm:$0xff]
    %v1204 = vld [vmem:[#allocation7 + $0x4e0] sm:$0xff]
    %v1205 = vld [vmem:[#allocation7 + $0x4e8] sm:$0xff]
    %v1206 = vld [vmem:[#allocation7 + $0x4f0] sm:$0xff]
    %v1207 = vld [vmem:[#allocation7 + $0x4f8] sm:$0xff]
    %v1208 = vld [vmem:[#allocation7 + $0x500] sm:$0xff]
    %v1209 = vld [vmem:[#allocation7 + $0x508] sm:$0xff]
    %v1210 = vld [vmem:[#allocation7 + $0x510] sm:$0xff]
    %v1211 = vld [vmem:[#allocation7 + $0x518] sm:$0xff]
    %v1212 = vld [vmem:[#allocation7 + $0x520] sm:$0xff]
    %v1213 = vld [vmem:[#allocation7 + $0x528] sm:$0xff]
    %v1214 = vld [vmem:[#allocation7 + $0x530] sm:$0xff]
    %v1215 = vld [vmem:[#allocation7 + $0x538] sm:$0xff]
    %v1216 = vld [vmem:[#allocation7 + $0x540] sm:$0xff]
    %v1217 = vld [vmem:[#allocation7 + $0x548] sm:$0xff]
    %v1218 = vld [vmem:[#allocation7 + $0x550] sm:$0xff]
    %v1219 = vld [vmem:[#allocation7 + $0x558] sm:$0xff]
    %v1220 = vld [vmem:[#allocation7 + $0x560] sm:$0xff]
    %v1221 = vld [vmem:[#allocation7 + $0x568] sm:$0xff]
    %v1222 = vld [vmem:[#allocation7 + $0x570] sm:$0xff]
    %v1223 = vld [vmem:[#allocation7 + $0x578] sm:$0xff]
    %v1224 = vld [vmem:[#allocation7 + $0x580] sm:$0xff]
    %v1225 = vld [vmem:[#allocation7 + $0x588] sm:$0xff]
    %v1226 = vld [vmem:[#allocation7 + $0x590] sm:$0xff]
    %v1227 = vld [vmem:[#allocation7 + $0x598] sm:$0xff]
    %v1228 = vld [vmem:[#allocation7 + $0x5a0] sm:$0xff]
    %v1229 = vld [vmem:[#allocation7 + $0x5a8] sm:$0xff]
    %v1230 = vld [vmem:[#allocation7 + $0x5b0] sm:$0xff]
    %v1231 = vld [vmem:[#allocation7 + $0x5b8] sm:$0xff]
    %v1232 = vld [vmem:[#allocation7 + $0x5c0] sm:$0xff]
    %v1233 = vld [vmem:[#allocation7 + $0x5c8] sm:$0xff]
    %v1234 = vld [vmem:[#allocation7 + $0x5d0] sm:$0xff]
    %v1235 = vld [vmem:[#allocation7 + $0x5d8] sm:$0xff]
    %v1236 = vld [vmem:[#allocation7 + $0x5e0] sm:$0xff]
    %v1237 = vld [vmem:[#allocation7 + $0x5e8] sm:$0xff]
    %v1238 = vld [vmem:[#allocation7 + $0x5f0] sm:$0xff]
    %v1239 = vld [vmem:[#allocation7 + $0x5f8] sm:$0xff]
    %v1240 = vld [vmem:[#allocation7 + $0x600] sm:$0xff]
    %v1241 = vld [vmem:[#allocation7 + $0x608] sm:$0xff]
    %v1242 = vld [vmem:[#allocation7 + $0x610] sm:$0xff]
    %v1243 = vld [vmem:[#allocation7 + $0x618] sm:$0xff]
    %v1244 = vld [vmem:[#allocation7 + $0x620] sm:$0xff]
    %v1245 = vld [vmem:[#allocation7 + $0x628] sm:$0xff]
    %v1246 = vld [vmem:[#allocation7 + $0x630] sm:$0xff]
    %v1247 = vld [vmem:[#allocation7 + $0x638] sm:$0xff]
    %v1248 = vld [vmem:[#allocation7 + $0x640] sm:$0xff]
    %v1249 = vld [vmem:[#allocation7 + $0x648] sm:$0xff]
    %v1250 = vld [vmem:[#allocation7 + $0x650] sm:$0xff]
    %v1251 = vld [vmem:[#allocation7 + $0x658] sm:$0xff]
    %v1252 = vld [vmem:[#allocation7 + $0x660] sm:$0xff]
    %v1253 = vld [vmem:[#allocation7 + $0x668] sm:$0xff]
    %v1254 = vld [vmem:[#allocation7 + $0x670] sm:$0xff]
    %v1255 = vld [vmem:[#allocation7 + $0x678] sm:$0xff]
    %v1256 = vld [vmem:[#allocation7 + $0x680] sm:$0xff]
    %v1257 = vld [vmem:[#allocation7 + $0x688] sm:$0xff]
    %v1258 = vld [vmem:[#allocation7 + $0x690] sm:$0xff]
    %v1259 = vld [vmem:[#allocation7 + $0x698] sm:$0xff]
    %v1260 = vld [vmem:[#allocation7 + $0x6a0] sm:$0xff]
    %v1261 = vld [vmem:[#allocation7 + $0x6a8] sm:$0xff]
    %v1262 = vld [vmem:[#allocation7 + $0x6b0] sm:$0xff]
    %v1263 = vld [vmem:[#allocation7 + $0x6b8] sm:$0xff]
    %v1264 = vld [vmem:[#allocation7 + $0x6c0] sm:$0xff]
    %v1265 = vld [vmem:[#allocation7 + $0x6c8] sm:$0xff]
    %v1266 = vld [vmem:[#allocation7 + $0x6d0] sm:$0xff]
    %v1267 = vld [vmem:[#allocation7 + $0x6d8] sm:$0xff]
    %v1268 = vld [vmem:[#allocation7 + $0x6e0] sm:$0xff]
    %v1269 = vld [vmem:[#allocation7 + $0x6e8] sm:$0xff]
    %v1270 = vld [vmem:[#allocation7 + $0x6f0] sm:$0xff]
    %v1271 = vld [vmem:[#allocation7 + $0x6f8] sm:$0xff]
    %v1272 = vld [vmem:[#allocation7 + $0x700] sm:$0xff]
    %v1273 = vld [vmem:[#allocation7 + $0x708] sm:$0xff]
    %v1274 = vld [vmem:[#allocation7 + $0x710] sm:$0xff]
    %v1275 = vld [vmem:[#allocation7 + $0x718] sm:$0xff]
    %v1276 = vld [vmem:[#allocation7 + $0x720] sm:$0xff]
    %v1277 = vld [vmem:[#allocation7 + $0x728] sm:$0xff]
    %v1278 = vld [vmem:[#allocation7 + $0x730] sm:$0xff]
    %v1279 = vld [vmem:[#allocation7 + $0x738] sm:$0xff]
    %v1280 = vld [vmem:[#allocation7 + $0x740] sm:$0xff]
    %v1281 = vld [vmem:[#allocation7 + $0x748] sm:$0xff]
    %v1282 = vld [vmem:[#allocation7 + $0x750] sm:$0xff]
    %v1283 = vld [vmem:[#allocation7 + $0x758] sm:$0xff]
    %v1284 = vld [vmem:[#allocation7 + $0x760] sm:$0xff]
    %v1285 = vld [vmem:[#allocation7 + $0x768] sm:$0xff]
    %v1286 = vld [vmem:[#allocation7 + $0x770] sm:$0xff]
    %v1287 = vld [vmem:[#allocation7 + $0x778] sm:$0xff]
    %v1288 = vld [vmem:[#allocation7 + $0x780] sm:$0xff]
    %v1289 = vld [vmem:[#allocation7 + $0x788] sm:$0xff]
    %v1290 = vld [vmem:[#allocation7 + $0x790] sm:$0xff]
    %v1291 = vld [vmem:[#allocation7 + $0x798] sm:$0xff]
    %v1292 = vld [vmem:[#allocation7 + $0x7a0] sm:$0xff]
    %v1293 = vld [vmem:[#allocation7 + $0x7a8] sm:$0xff]
    %v1294 = vld [vmem:[#allocation7 + $0x7b0] sm:$0xff]
    %v1295 = vld [vmem:[#allocation7 + $0x7b8] sm:$0xff]
    %v1296 = vld [vmem:[#allocation7 + $0x7c0] sm:$0xff]
    %v1297 = vld [vmem:[#allocation7 + $0x7c8] sm:$0xff]
    %v1298 = vld [vmem:[#allocation7 + $0x7d0] sm:$0xff]
    %v1299 = vld [vmem:[#allocation7 + $0x7d8] sm:$0xff]
    %v1300 = vld [vmem:[#allocation7 + $0x7e0] sm:$0xff]
    %v1301 = vld [vmem:[#allocation7 + $0x7e8] sm:$0xff]
    %v1302 = vld [vmem:[#allocation7 + $0x7f0] sm:$0xff]
    %v1303 = vld [vmem:[#allocation7 + $0x7f8] sm:$0xff]
    %v1304 = vld [vmem:[#allocation7 + $0x800] sm:$0xff]
    %v1305 = vld [vmem:[#allocation7 + $0x808] sm:$0xff]
    %v1306 = vld [vmem:[#allocation7 + $0x810] sm:$0xff]
    %v1307 = vld [vmem:[#allocation7 + $0x818] sm:$0xff]
    %v1308 = vld [vmem:[#allocation7 + $0x820] sm:$0xff]
    %v1309 = vld [vmem:[#allocation7 + $0x828] sm:$0xff]
    %v1310 = vld [vmem:[#allocation7 + $0x830] sm:$0xff]
    %v1311 = vld [vmem:[#allocation7 + $0x838] sm:$0xff]
    %v1312 = vld [vmem:[#allocation7 + $0x840] sm:$0xff]
    %v1313 = vld [vmem:[#allocation7 + $0x848] sm:$0xff]
    %v1314 = vld [vmem:[#allocation7 + $0x850] sm:$0xff]
    %v1315 = vld [vmem:[#allocation7 + $0x858] sm:$0xff]
    %v1316 = vld [vmem:[#allocation7 + $0x860] sm:$0xff]
    %v1317 = vld [vmem:[#allocation7 + $0x868] sm:$0xff]
    %v1318 = vld [vmem:[#allocation7 + $0x870] sm:$0xff]
    %v1319 = vld [vmem:[#allocation7 + $0x878] sm:$0xff]
    %v1320 = vld [vmem:[#allocation7 + $0x880] sm:$0xff]
    %v1321 = vld [vmem:[#allocation7 + $0x888] sm:$0xff]
    %v1322 = vld [vmem:[#allocation7 + $0x890] sm:$0xff]
    %v1323 = vld [vmem:[#allocation7 + $0x898] sm:$0xff]
    %v1324 = vld [vmem:[#allocation7 + $0x8a0] sm:$0xff]
    %v1325 = vld [vmem:[#allocation7 + $0x8a8] sm:$0xff]
    %v1326 = vld [vmem:[#allocation7 + $0x8b0] sm:$0xff]
    %v1327 = vld [vmem:[#allocation7 + $0x8b8] sm:$0xff]
    %v1328 = vld [vmem:[#allocation7 + $0x8c0] sm:$0xff]
    %v1329 = vld [vmem:[#allocation7 + $0x8c8] sm:$0xff]
    %v1330 = vld [vmem:[#allocation7 + $0x8d0] sm:$0xff]
    %v1331 = vld [vmem:[#allocation7 + $0x8d8] sm:$0xff]
    %v1332 = vld [vmem:[#allocation7 + $0x8e0] sm:$0xff]
    %v1333 = vld [vmem:[#allocation7 + $0x8e8] sm:$0xff]
    %v1334 = vld [vmem:[#allocation7 + $0x8f0] sm:$0xff]
    %v1335 = vld [vmem:[#allocation7 + $0x8f8] sm:$0xff]
    %v1336 = vld [vmem:[#allocation7 + $0x900] sm:$0xff]
    %v1337 = vld [vmem:[#allocation7 + $0x908] sm:$0xff]
    %v1338 = vld [vmem:[#allocation7 + $0x910] sm:$0xff]
    %v1339 = vld [vmem:[#allocation7 + $0x918] sm:$0xff]
    %v1340 = vld [vmem:[#allocation7 + $0x920] sm:$0xff]
    %v1341 = vld [vmem:[#allocation7 + $0x928] sm:$0xff]
    %v1342 = vld [vmem:[#allocation7 + $0x930] sm:$0xff]
    %v1343 = vld [vmem:[#allocation7 + $0x938] sm:$0xff]
    %v1344 = vld [vmem:[#allocation7 + $0x940] sm:$0xff]
    %v1345 = vld [vmem:[#allocation7 + $0x948] sm:$0xff]
    %v1346 = vld [vmem:[#allocation7 + $0x950] sm:$0xff]
    %v1347 = vld [vmem:[#allocation7 + $0x958] sm:$0xff]
    %v1348 = vld [vmem:[#allocation7 + $0x960] sm:$0xff]
    %v1349 = vld [vmem:[#allocation7 + $0x968] sm:$0xff]
    %v1350 = vld [vmem:[#allocation7 + $0x970] sm:$0xff]
    %v1351 = vld [vmem:[#allocation7 + $0x978] sm:$0xff]
    %v1352 = vld [vmem:[#allocation7 + $0x980] sm:$0xff]
    %v1353 = vld [vmem:[#allocation7 + $0x988] sm:$0xff]
    %v1354 = vld [vmem:[#allocation7 + $0x990] sm:$0xff]
    %v1355 = vld [vmem:[#allocation7 + $0x998] sm:$0xff]
    %v1356 = vld [vmem:[#allocation7 + $0x9a0] sm:$0xff]
    %v1357 = vld [vmem:[#allocation7 + $0x9a8] sm:$0xff]
    %v1358 = vld [vmem:[#allocation7 + $0x9b0] sm:$0xff]
    %v1359 = vld [vmem:[#allocation7 + $0x9b8] sm:$0xff]
    %v1360 = vld [vmem:[#allocation7 + $0x9c0] sm:$0xff]
    %v1361 = vld [vmem:[#allocation7 + $0x9c8] sm:$0xff]
    %v1362 = vld [vmem:[#allocation7 + $0x9d0] sm:$0xff]
    %v1363 = vld [vmem:[#allocation7 + $0x9d8] sm:$0xff]
    %v1364 = vld [vmem:[#allocation7 + $0x9e0] sm:$0xff]
    %v1365 = vld [vmem:[#allocation7 + $0x9e8] sm:$0xff]
    %v1366 = vld [vmem:[#allocation7 + $0x9f0] sm:$0xff]
    %v1367 = vld [vmem:[#allocation7 + $0x9f8] sm:$0xff]
    %v1368 = vld [vmem:[#allocation7 + $0xa00] sm:$0xff]
    %v1369 = vld [vmem:[#allocation7 + $0xa08] sm:$0xff]
    %v1370 = vld [vmem:[#allocation7 + $0xa10] sm:$0xff]
    %v1371 = vld [vmem:[#allocation7 + $0xa18] sm:$0xff]
    %v1372 = vld [vmem:[#allocation7 + $0xa20] sm:$0xff]
    %v1373 = vld [vmem:[#allocation7 + $0xa28] sm:$0xff]
    %v1374 = vld [vmem:[#allocation7 + $0xa30] sm:$0xff]
    %v1375 = vld [vmem:[#allocation7 + $0xa38] sm:$0xff]
    %v1376 = vld [vmem:[#allocation7 + $0xa40] sm:$0xff]
    %v1377 = vld [vmem:[#allocation7 + $0xa48] sm:$0xff]
    %v1378 = vld [vmem:[#allocation7 + $0xa50] sm:$0xff]
    %v1379 = vld [vmem:[#allocation7 + $0xa58] sm:$0xff]
    %v1380 = vld [vmem:[#allocation7 + $0xa60] sm:$0xff]
    %v1381 = vld [vmem:[#allocation7 + $0xa68] sm:$0xff]
    %v1382 = vld [vmem:[#allocation7 + $0xa70] sm:$0xff]
    %v1383 = vld [vmem:[#allocation7 + $0xa78] sm:$0xff]
    %v1384 = vld [vmem:[#allocation7 + $0xa80] sm:$0xff]
    %v1385 = vld [vmem:[#allocation7 + $0xa88] sm:$0xff]
    %v1386 = vld [vmem:[#allocation7 + $0xa90] sm:$0xff]
    %v1387 = vld [vmem:[#allocation7 + $0xa98] sm:$0xff]
    %v1388 = vld [vmem:[#allocation7 + $0xaa0] sm:$0xff]
    %v1389 = vld [vmem:[#allocation7 + $0xaa8] sm:$0xff]
    %v1390 = vld [vmem:[#allocation7 + $0xab0] sm:$0xff]
    %v1391 = vld [vmem:[#allocation7 + $0xab8] sm:$0xff]
    %v1392 = vld [vmem:[#allocation7 + $0xac0] sm:$0xff]
    %v1393 = vld [vmem:[#allocation7 + $0xac8] sm:$0xff]
    %v1394 = vld [vmem:[#allocation7 + $0xad0] sm:$0xff]
    %v1395 = vld [vmem:[#allocation7 + $0xad8] sm:$0xff]
    %v1396 = vld [vmem:[#allocation7 + $0xae0] sm:$0xff]
    %v1397 = vld [vmem:[#allocation7 + $0xae8] sm:$0xff]
    %v1398 = vld [vmem:[#allocation7 + $0xaf0] sm:$0xff]
    %v1399 = vld [vmem:[#allocation7 + $0xaf8] sm:$0xff]
    %v1400 = vld [vmem:[#allocation7 + $0xb00] sm:$0xff]
    %v1401 = vld [vmem:[#allocation7 + $0xb08] sm:$0xff]
    %v1402 = vld [vmem:[#allocation7 + $0xb10] sm:$0xff]
    %v1403 = vld [vmem:[#allocation7 + $0xb18] sm:$0xff]
    %v1404 = vld [vmem:[#allocation7 + $0xb20] sm:$0xff]
    %v1405 = vld [vmem:[#allocation7 + $0xb28] sm:$0xff]
    %v1406 = vld [vmem:[#allocation7 + $0xb30] sm:$0xff]
    %v1407 = vld [vmem:[#allocation7 + $0xb38] sm:$0xff]
    %v1408 = vld [vmem:[#allocation7 + $0xb40] sm:$0xff]
    %v1409 = vld [vmem:[#allocation7 + $0xb48] sm:$0xff]
    %v1410 = vld [vmem:[#allocation7 + $0xb50] sm:$0xff]
    %v1411 = vld [vmem:[#allocation7 + $0xb58] sm:$0xff]
    %v1412 = vld [vmem:[#allocation7 + $0xb60] sm:$0xff]
    %v1413 = vld [vmem:[#allocation7 + $0xb68] sm:$0xff]
    %v1414 = vld [vmem:[#allocation7 + $0xb70] sm:$0xff]
    %v1415 = vld [vmem:[#allocation7 + $0xb78] sm:$0xff]
    %v1416 = vld [vmem:[#allocation7 + $0xb80] sm:$0xff]
    %v1417 = vld [vmem:[#allocation7 + $0xb88] sm:$0xff]
    %v1418 = vld [vmem:[#allocation7 + $0xb90] sm:$0xff]
    %v1419 = vld [vmem:[#allocation7 + $0xb98] sm:$0xff]
    %v1420 = vld [vmem:[#allocation7 + $0xba0] sm:$0xff]
    %v1421 = vld [vmem:[#allocation7 + $0xba8] sm:$0xff]
    %v1422 = vld [vmem:[#allocation7 + $0xbb0] sm:$0xff]
    %v1423 = vld [vmem:[#allocation7 + $0xbb8] sm:$0xff]
    %v1424 = vld [vmem:[#allocation7 + $0xbc0] sm:$0xff]
    %v1425 = vld [vmem:[#allocation7 + $0xbc8] sm:$0xff]
    %v1426 = vld [vmem:[#allocation7 + $0xbd0] sm:$0xff]
    %v1427 = vld [vmem:[#allocation7 + $0xbd8] sm:$0xff]
    %v1428 = vld [vmem:[#allocation7 + $0xbe0] sm:$0xff]
    %v1429 = vld [vmem:[#allocation7 + $0xbe8] sm:$0xff]
    %v1430 = vld [vmem:[#allocation7 + $0xbf0] sm:$0xff]
    %v1431 = vld [vmem:[#allocation7 + $0xbf8] sm:$0xff]
    %v1432 = vld [vmem:[#allocation8] sm:$0xf]
    %v1434 = vperm.slane %v1432, 0
    %v1435 = vperm.slane %v1432, 1
    %v1436 = vperm.slane %v1432, 2
    %v1437 = vperm.slane %v1432, 3
    %1442 = vmatpush.msra.mxu0 %v1108
    %1443 = vmatpush.msra.mxu0 %v1104
    %1444 = vmatpush.msra.mxu0 %v1100
    %1445 = vmatpush.msra.mxu0 %v1096
    %1446 = vmatpush.msra.mxu0 %v1092
    %1447 = vmatpush.msra.mxu0 %v1088
    %1448 = vmatpush.msra.mxu0 %v1084
    %1449 = vmatpush.msra.mxu0 %v1080
    %1450 = vmatpush.msra.mxu0 %v1076
    %1451 = vmatpush.msra.mxu0 %v1072
    %1452 = vmatpush.msra.mxu0 %v1068
    %1453 = vmatpush.msra.mxu0 %v1064
    %1454 = vmatpush.msra.mxu0 %v1060
    %1455 = vmatpush.msra.mxu0 %v1056
    %1456 = vmatpush.msra.mxu0 %v1052
    %1457 = vmatpush.msra.mxu0 %v1048
    %1458 = vmatmul.f32.gmra.mxu0 0.0
    %v1459 = vpop.f32.mrf.mxu0
    %v1460 = vadd.f32 %v1434, %v1459
    %1461 = vmatmul.f32.gmra.mxu0 %v1024
    %v1462 = vpop.f32.mrf.mxu0
    %v1463 = vadd.f32 %v1434, %v1462
    %1464 = vmatmul.f32.gmra.mxu0 %v1026
    %v1465 = vpop.f32.mrf.mxu0
    %v1466 = vadd.f32 %v1434, %v1465
    %1467 = vmatmul.f32.gmra.mxu0 %v1028
    %v1468 = vpop.f32.mrf.mxu0
    %v1469 = vadd.f32 %v1434, %v1468
    %1470 = vmatmul.f32.gmra.mxu0 %v1030
    %v1471 = vpop.f32.mrf.mxu0
    %v1472 = vadd.f32 %v1434, %v1471
    %1473 = vmatmul.f32.gmra.mxu0 %v1032
    %v1474 = vpop.f32.mrf.mxu0
    %v1475 = vadd.f32 %v1434, %v1474
    %1476 = vmatmul.f32.gmra.mxu0 %v1034
    %v1477 = vpop.f32.mrf.mxu0
    %v1478 = vadd.f32 %v1434, %v1477
    %1479 = vmatmul.f32.gmra.mxu0 %v1036
    %v1480 = vpop.f32.mrf.mxu0
    %v1481 = vadd.f32 %v1434, %v1480
    %1482 = vmatmul.f32.gmra.mxu0 %v1038
    %v1483 = vpop.f32.mrf.mxu0
    %v1484 = vadd.f32 %v1434, %v1483
    %1485 = vmatmul.f32.gmra.mxu0 %v1040
    %v1486 = vpop.f32.mrf.mxu0
    %v1487 = vadd.f32 %v1434, %v1486
    %1488 = vmatmul.f32.gmra.mxu0 %v1042
    %v1489 = vpop.f32.mrf.mxu0
    %v1490 = vadd.f32 %v1434, %v1489
    %1491 = vmatmul.f32.gmra.mxu0 %v1044
    %v1492 = vpop.f32.mrf.mxu0
    %v1493 = vadd.f32 %v1434, %v1492
    %1494 = vdwg.mxu0
    %1495 = vmatpush.msra.mxu0 %v1172
    %1496 = vmatpush.msra.mxu0 %v1168
    %1497 = vmatpush.msra.mxu0 %v1164
    %1498 = vmatpush.msra.mxu0 %v1160
    %1499 = vmatpush.msra.mxu0 %v1156
    %1500 = vmatpush.msra.mxu0 %v1152
    %1501 = vmatpush.msra.mxu0 %v1148
    %1502 = vmatpush.msra.mxu0 %v1144
    %1503 = vmatpush.msra.mxu0 %v1140
    %1504 = vmatpush.msra.mxu0 %v1136
    %1505 = vmatpush.msra.mxu0 %v1132
    %1506 = vmatpush.msra.mxu0 %v1128
    %1507 = vmatpush.msra.mxu0 %v1124
    %1508 = vmatpush.msra.mxu0 %v1120
    %1509 = vmatpush.msra.mxu0 %v1116
    %1510 = vmatpush.msra.mxu0 %v1112
    %1511 = vmatmul.f32.gmra.mxu0 0.0
    %v1512 = vpop.f32.mrf.mxu0
    %v1513 = vadd.f32 %v1460, %v1512
    %1514 = vmatmul.f32.gmra.mxu0 %v1025
    %v1515 = vpop.f32.mrf.mxu0
    %v1516 = vadd.f32 %v1463, %v1515
    %1517 = vmatmul.f32.gmra.mxu0 %v1027
    %v1518 = vpop.f32.mrf.mxu0
    %v1519 = vadd.f32 %v1466, %v1518
    %1520 = vmatmul.f32.gmra.mxu0 %v1029
    %v1521 = vpop.f32.mrf.mxu0
    %v1522 = vadd.f32 %v1469, %v1521
    %1523 = vmatmul.f32.gmra.mxu0 %v1031
    %v1524 = vpop.f32.mrf.mxu0
    %v1525 = vadd.f32 %v1472, %v1524
    %1526 = vmatmul.f32.gmra.mxu0 %v1033
    %v1527 = vpop.f32.mrf.mxu0
    %v1528 = vadd.f32 %v1475, %v1527
    %1529 = vmatmul.f32.gmra.mxu0 %v1035
    %v1530 = vpop.f32.mrf.mxu0
    %v1531 = vadd.f32 %v1478, %v1530
    %1532 = vmatmul.f32.gmra.mxu0 %v1037
    %v1533 = vpop.f32.mrf.mxu0
    %v1534 = vadd.f32 %v1481, %v1533
    %1535 = vmatmul.f32.gmra.mxu0 %v1039
    %v1536 = vpop.f32.mrf.mxu0
    %v1537 = vadd.f32 %v1484, %v1536
    %1538 = vmatmul.f32.gmra.mxu0 %v1041
    %v1539 = vpop.f32.mrf.mxu0
    %v1540 = vadd.f32 %v1487, %v1539
    %1541 = vmatmul.f32.gmra.mxu0 %v1043
    %v1542 = vpop.f32.mrf.mxu0
    %v1543 = vadd.f32 %v1490, %v1542
    %1544 = vmatmul.f32.gmra.mxu0 %v1045
    %v1545 = vpop.f32.mrf.mxu0
    %v1546 = vadd.f32 %v1493, %v1545
    %1547 = vdwg.mxu0
    %1548 = vmatpush.msra.mxu0 %v1236
    %1549 = vmatpush.msra.mxu0 %v1232
    %1550 = vmatpush.msra.mxu0 %v1228
    %1551 = vmatpush.msra.mxu0 %v1224
    %1552 = vmatpush.msra.mxu0 %v1220
    %1553 = vmatpush.msra.mxu0 %v1216
    %1554 = vmatpush.msra.mxu0 %v1212
    %1555 = vmatpush.msra.mxu0 %v1208
    %1556 = vmatpush.msra.mxu0 %v1204
    %1557 = vmatpush.msra.mxu0 %v1200
    %1558 = vmatpush.msra.mxu0 %v1196
    %1559 = vmatpush.msra.mxu0 %v1192
    %1560 = vmatpush.msra.mxu0 %v1188
    %1561 = vmatpush.msra.mxu0 %v1184
    %1562 = vmatpush.msra.mxu0 %v1180
    %1563 = vmatpush.msra.mxu0 %v1176
    %1564 = vmatmul.f32.gmra.mxu0 %v1024
    %v1565 = vpop.f32.mrf.mxu0
    %v1566 = vadd.f32 %v1513, %v1565
    %1567 = vmatmul.f32.gmra.mxu0 %v1026
    %v1568 = vpop.f32.mrf.mxu0
    %v1569 = vadd.f32 %v1516, %v1568
    %1570 = vmatmul.f32.gmra.mxu0 %v1028
    %v1571 = vpop.f32.mrf.mxu0
    %v1572 = vadd.f32 %v1519, %v1571
    %1573 = vmatmul.f32.gmra.mxu0 %v1030
    %v1574 = vpop.f32.mrf.mxu0
    %v1575 = vadd.f32 %v1522, %v1574
    %1576 = vmatmul.f32.gmra.mxu0 %v1032
    %v1577 = vpop.f32.mrf.mxu0
    %v1578 = vadd.f32 %v1525, %v1577
    %1579 = vmatmul.f32.gmra.mxu0 %v1034
    %v1580 = vpop.f32.mrf.mxu0
    %v1581 = vadd.f32 %v1528, %v1580
    %1582 = vmatmul.f32.gmra.mxu0 %v1036
    %v1583 = vpop.f32.mrf.mxu0
    %v1584 = vadd.f32 %v1531, %v1583
    %1585 = vmatmul.f32.gmra.mxu0 %v1038
    %v1586 = vpop.f32.mrf.mxu0
    %v1587 = vadd.f32 %v1534, %v1586
    %1588 = vmatmul.f32.gmra.mxu0 %v1040
    %v1589 = vpop.f32.mrf.mxu0
    %v1590 = vadd.f32 %v1537, %v1589
    %1591 = vmatmul.f32.gmra.mxu0 %v1042
    %v1592 = vpop.f32.mrf.mxu0
    %v1593 = vadd.f32 %v1540, %v1592
    %1594 = vmatmul.f32.gmra.mxu0 %v1044
    %v1595 = vpop.f32.mrf.mxu0
    %v1596 = vadd.f32 %v1543, %v1595
    %1597 = vmatmul.f32.gmra.mxu0 %v1046
    %v1598 = vpop.f32.mrf.mxu0
    %v1599 = vadd.f32 %v1546, %v1598
    %1600 = vdwg.mxu0
    %1601 = vmatpush.msra.mxu0 %v1300
    %1602 = vmatpush.msra.mxu0 %v1296
    %1603 = vmatpush.msra.mxu0 %v1292
    %1604 = vmatpush.msra.mxu0 %v1288
    %1605 = vmatpush.msra.mxu0 %v1284
    %1606 = vmatpush.msra.mxu0 %v1280
    %1607 = vmatpush.msra.mxu0 %v1276
    %1608 = vmatpush.msra.mxu0 %v1272
    %1609 = vmatpush.msra.mxu0 %v1268
    %1610 = vmatpush.msra.mxu0 %v1264
    %1611 = vmatpush.msra.mxu0 %v1260
    %1612 = vmatpush.msra.mxu0 %v1256
    %1613 = vmatpush.msra.mxu0 %v1252
    %1614 = vmatpush.msra.mxu0 %v1248
    %1615 = vmatpush.msra.mxu0 %v1244
    %1616 = vmatpush.msra.mxu0 %v1240
    %1617 = vmatmul.f32.gmra.mxu0 %v1025
    %v1618 = vpop.f32.mrf.mxu0
    %v1619 = vadd.f32 %v1566, %v1618
    %1620 = vmatmul.f32.gmra.mxu0 %v1027
    %v1621 = vpop.f32.mrf.mxu0
    %v1622 = vadd.f32 %v1569, %v1621
    %1623 = vmatmul.f32.gmra.mxu0 %v1029
    %v1624 = vpop.f32.mrf.mxu0
    %v1625 = vadd.f32 %v1572, %v1624
    %1626 = vmatmul.f32.gmra.mxu0 %v1031
    %v1627 = vpop.f32.mrf.mxu0
    %v1628 = vadd.f32 %v1575, %v1627
    %1629 = vmatmul.f32.gmra.mxu0 %v1033
    %v1630 = vpop.f32.mrf.mxu0
    %v1631 = vadd.f32 %v1578, %v1630
    %1632 = vmatmul.f32.gmra.mxu0 %v1035
    %v1633 = vpop.f32.mrf.mxu0
    %v1634 = vadd.f32 %v1581, %v1633
    %1635 = vmatmul.f32.gmra.mxu0 %v1037
    %v1636 = vpop.f32.mrf.mxu0
    %v1637 = vadd.f32 %v1584, %v1636
    %1638 = vmatmul.f32.gmra.mxu0 %v1039
    %v1639 = vpop.f32.mrf.mxu0
    %v1640 = vadd.f32 %v1587, %v1639
    %1641 = vmatmul.f32.gmra.mxu0 %v1041
    %v1642 = vpop.f32.mrf.mxu0
    %v1643 = vadd.f32 %v1590, %v1642
    %1644 = vmatmul.f32.gmra.mxu0 %v1043
    %v1645 = vpop.f32.mrf.mxu0
    %v1646 = vadd.f32 %v1593, %v1645
    %1647 = vmatmul.f32.gmra.mxu0 %v1045
    %v1648 = vpop.f32.mrf.mxu0
    %v1649 = vadd.f32 %v1596, %v1648
    %1650 = vmatmul.f32.gmra.mxu0 %v1047
    %v1651 = vpop.f32.mrf.mxu0
    %v1652 = vadd.f32 %v1599, %v1651
    %1653 = vdwg.mxu0
    %1654 = vmatpush.msra.mxu0 %v1364
    %1655 = vmatpush.msra.mxu0 %v1360
    %1656 = vmatpush.msra.mxu0 %v1356
    %1657 = vmatpush.msra.mxu0 %v1352
    %1658 = vmatpush.msra.mxu0 %v1348
    %1659 = vmatpush.msra.mxu0 %v1344
    %1660 = vmatpush.msra.mxu0 %v1340
    %1661 = vmatpush.msra.mxu0 %v1336
    %1662 = vmatpush.msra.mxu0 %v1332
    %1663 = vmatpush.msra.mxu0 %v1328
    %1664 = vmatpush.msra.mxu0 %v1324
    %1665 = vmatpush.msra.mxu0 %v1320
    %1666 = vmatpush.msra.mxu0 %v1316
    %1667 = vmatpush.msra.mxu0 %v1312
    %1668 = vmatpush.msra.mxu0 %v1308
    %1669 = vmatpush.msra.mxu0 %v1304
    %1670 = vmatmul.f32.gmra.mxu0 %v1026
    %v1671 = vpop.f32.mrf.mxu0
    %v1672 = vadd.f32 %v1619, %v1671
    %1673 = vmatmul.f32.gmra.mxu0 %v1028
    %v1674 = vpop.f32.mrf.mxu0
    %v1675 = vadd.f32 %v1622, %v1674
    %1676 = vmatmul.f32.gmra.mxu0 %v1030
    %v1677 = vpop.f32.mrf.mxu0
    %v1678 = vadd.f32 %v1625, %v1677
    %1679 = vmatmul.f32.gmra.mxu0 %v1032
    %v1680 = vpop.f32.mrf.mxu0
    %v1681 = vadd.f32 %v1628, %v1680
    %1682 = vmatmul.f32.gmra.mxu0 %v1034
    %v1683 = vpop.f32.mrf.mxu0
    %v1684 = vadd.f32 %v1631, %v1683
    %1685 = vmatmul.f32.gmra.mxu0 %v1036
    %v1686 = vpop.f32.mrf.mxu0
    %v1687 = vadd.f32 %v1634, %v1686
    %1688 = vmatmul.f32.gmra.mxu0 %v1038
    %v1689 = vpop.f32.mrf.mxu0
    %v1690 = vadd.f32 %v1637, %v1689
    %1691 = vmatmul.f32.gmra.mxu0 %v1040
    %v1692 = vpop.f32.mrf.mxu0
    %v1693 = vadd.f32 %v1640, %v1692
    %1694 = vmatmul.f32.gmra.mxu0 %v1042
    %v1695 = vpop.f32.mrf.mxu0
    %v1696 = vadd.f32 %v1643, %v1695
    %1697 = vmatmul.f32.gmra.mxu0 %v1044
    %v1698 = vpop.f32.mrf.mxu0
    %v1699 = vadd.f32 %v1646, %v1698
    %1700 = vmatmul.f32.gmra.mxu0 %v1046
    %v1701 = vpop.f32.mrf.mxu0
    %v1702 = vadd.f32 %v1649, %v1701
    %1703 = vmatmul.f32.gmra.mxu0 0.0
    %v1704 = vpop.f32.mrf.mxu0
    %v1705 = vadd.f32 %v1652, %v1704
    %1706 = vdwg.mxu0
    %1707 = vmatpush.msra.mxu0 %v1428
    %1708 = vmatpush.msra.mxu0 %v1424
    %1709 = vmatpush.msra.mxu0 %v1420
    %1710 = vmatpush.msra.mxu0 %v1416
    %1711 = vmatpush.msra.mxu0 %v1412
    %1712 = vmatpush.msra.mxu0 %v1408
    %1713 = vmatpush.msra.mxu0 %v1404
    %1714 = vmatpush.msra.mxu0 %v1400
    %1715 = vmatpush.msra.mxu0 %v1396
    %1716 = vmatpush.msra.mxu0 %v1392
    %1717 = vmatpush.msra.mxu0 %v1388
    %1718 = vmatpush.msra.mxu0 %v1384
    %1719 = vmatpush.msra.mxu0 %v1380
    %1720 = vmatpush.msra.mxu0 %v1376
    %1721 = vmatpush.msra.mxu0 %v1372
    %1722 = vmatpush.msra.mxu0 %v1368
    %1723 = vmatmul.f32.gmra.mxu0 %v1027
    %v1724 = vpop.f32.mrf.mxu0
    %v1725 = vadd.f32 %v1672, %v1724
    %1726 = vmatmul.f32.gmra.mxu0 %v1029
    %v1727 = vpop.f32.mrf.mxu0
    %v1728 = vadd.f32 %v1675, %v1727
    %1729 = vmatmul.f32.gmra.mxu0 %v1031
    %v1730 = vpop.f32.mrf.mxu0
    %v1731 = vadd.f32 %v1678, %v1730
    %1732 = vmatmul.f32.gmra.mxu0 %v1033
    %v1733 = vpop.f32.mrf.mxu0
    %v1734 = vadd.f32 %v1681, %v1733
    %1735 = vmatmul.f32.gmra.mxu0 %v1035
    %v1736 = vpop.f32.mrf.mxu0
    %v1737 = vadd.f32 %v1684, %v1736
    %1738 = vmatmul.f32.gmra.mxu0 %v1037
    %v1739 = vpop.f32.mrf.mxu0
    %v1740 = vadd.f32 %v1687, %v1739
    %1741 = vmatmul.f32.gmra.mxu0 %v1039
    %v1742 = vpop.f32.mrf.mxu0
    %v1743 = vadd.f32 %v1690, %v1742
    %1744 = vmatmul.f32.gmra.mxu0 %v1041
    %v1745 = vpop.f32.mrf.mxu0
    %v1746 = vadd.f32 %v1693, %v1745
    %1747 = vmatmul.f32.gmra.mxu0 %v1043
    %v1748 = vpop.f32.mrf.mxu0
    %v1749 = vadd.f32 %v1696, %v1748
    %1750 = vmatmul.f32.gmra.mxu0 %v1045
    %v1751 = vpop.f32.mrf.mxu0
    %v1752 = vadd.f32 %v1699, %v1751
    %1753 = vmatmul.f32.gmra.mxu0 %v1047
    %v1754 = vpop.f32.mrf.mxu0
    %v1755 = vadd.f32 %v1702, %v1754
    %1756 = vmatmul.f32.gmra.mxu0 0.0
    %v1757 = vpop.f32.mrf.mxu0
    %v1758 = vadd.f32 %v1705, %v1757
    %1759 = vdwg.mxu0
    %1760 = vmatpush.msra.mxu0 %v1109
    %1761 = vmatpush.msra.mxu0 %v1105
    %1762 = vmatpush.msra.mxu0 %v1101
    %1763 = vmatpush.msra.mxu0 %v1097
    %1764 = vmatpush.msra.mxu0 %v1093
    %1765 = vmatpush.msra.mxu0 %v1089
    %1766 = vmatpush.msra.mxu0 %v1085
    %1767 = vmatpush.msra.mxu0 %v1081
    %1768 = vmatpush.msra.mxu0 %v1077
    %1769 = vmatpush.msra.mxu0 %v1073
    %1770 = vmatpush.msra.mxu0 %v1069
    %1771 = vmatpush.msra.mxu0 %v1065
    %1772 = vmatpush.msra.mxu0 %v1061
    %1773 = vmatpush.msra.mxu0 %v1057
    %1774 = vmatpush.msra.mxu0 %v1053
    %1775 = vmatpush.msra.mxu0 %v1049
    %1776 = vmatmul.f32.gmra.mxu0 0.0
    %v1777 = vpop.f32.mrf.mxu0
    %v1778 = vadd.f32 %v1435, %v1777
    %1779 = vmatmul.f32.gmra.mxu0 %v1024
    %v1780 = vpop.f32.mrf.mxu0
    %v1781 = vadd.f32 %v1435, %v1780
    %1782 = vmatmul.f32.gmra.mxu0 %v1026
    %v1783 = vpop.f32.mrf.mxu0
    %v1784 = vadd.f32 %v1435, %v1783
    %1785 = vmatmul.f32.gmra.mxu0 %v1028
    %v1786 = vpop.f32.mrf.mxu0
    %v1787 = vadd.f32 %v1435, %v1786
    %1788 = vmatmul.f32.gmra.mxu0 %v1030
    %v1789 = vpop.f32.mrf.mxu0
    %v1790 = vadd.f32 %v1435, %v1789
    %1791 = vmatmul.f32.gmra.mxu0 %v1032
    %v1792 = vpop.f32.mrf.mxu0
    %v1793 = vadd.f32 %v1435, %v1792
    %1794 = vmatmul.f32.gmra.mxu0 %v1034
    %v1795 = vpop.f32.mrf.mxu0
    %v1796 = vadd.f32 %v1435, %v1795
    %1797 = vmatmul.f32.gmra.mxu0 %v1036
    %v1798 = vpop.f32.mrf.mxu0
    %v1799 = vadd.f32 %v1435, %v1798
    %1800 = vmatmul.f32.gmra.mxu0 %v1038
    %v1801 = vpop.f32.mrf.mxu0
    %v1802 = vadd.f32 %v1435, %v1801
    %1803 = vmatmul.f32.gmra.mxu0 %v1040
    %v1804 = vpop.f32.mrf.mxu0
    %v1805 = vadd.f32 %v1435, %v1804
    %1806 = vmatmul.f32.gmra.mxu0 %v1042
    %v1807 = vpop.f32.mrf.mxu0
    %v1808 = vadd.f32 %v1435, %v1807
    %1809 = vmatmul.f32.gmra.mxu0 %v1044
    %v1810 = vpop.f32.mrf.mxu0
    %v1811 = vadd.f32 %v1435, %v1810
    %1812 = vdwg.mxu0
    %1813 = vmatpush.msra.mxu0 %v1173
    %1814 = vmatpush.msra.mxu0 %v1169
    %1815 = vmatpush.msra.mxu0 %v1165
    %1816 = vmatpush.msra.mxu0 %v1161
    %1817 = vmatpush.msra.mxu0 %v1157
    %1818 = vmatpush.msra.mxu0 %v1153
    %1819 = vmatpush.msra.mxu0 %v1149
    %1820 = vmatpush.msra.mxu0 %v1145
    %1821 = vmatpush.msra.mxu0 %v1141
    %1822 = vmatpush.msra.mxu0 %v1137
    %1823 = vmatpush.msra.mxu0 %v1133
    %1824 = vmatpush.msra.mxu0 %v1129
    %1825 = vmatpush.msra.mxu0 %v1125
    %1826 = vmatpush.msra.mxu0 %v1121
    %1827 = vmatpush.msra.mxu0 %v1117
    %1828 = vmatpush.msra.mxu0 %v1113
    %1829 = vmatmul.f32.gmra.mxu0 0.0
    %v1830 = vpop.f32.mrf.mxu0
    %v1831 = vadd.f32 %v1778, %v1830
    %1832 = vmatmul.f32.gmra.mxu0 %v1025
    %v1833 = vpop.f32.mrf.mxu0
    %v1834 = vadd.f32 %v1781, %v1833
    %1835 = vmatmul.f32.gmra.mxu0 %v1027
    %v1836 = vpop.f32.mrf.mxu0
    %v1837 = vadd.f32 %v1784, %v1836
    %1838 = vmatmul.f32.gmra.mxu0 %v1029
    %v1839 = vpop.f32.mrf.mxu0
    %v1840 = vadd.f32 %v1787, %v1839
    %1841 = vmatmul.f32.gmra.mxu0 %v1031
    %v1842 = vpop.f32.mrf.mxu0
    %v1843 = vadd.f32 %v1790, %v1842
    %1844 = vmatmul.f32.gmra.mxu0 %v1033
    %v1845 = vpop.f32.mrf.mxu0
    %v1846 = vadd.f32 %v1793, %v1845
    %1847 = vmatmul.f32.gmra.mxu0 %v1035
    %v1848 = vpop.f32.mrf.mxu0
    %v1849 = vadd.f32 %v1796, %v1848
    %1850 = vmatmul.f32.gmra.mxu0 %v1037
    %v1851 = vpop.f32.mrf.mxu0
    %v1852 = vadd.f32 %v1799, %v1851
    %1853 = vmatmul.f32.gmra.mxu0 %v1039
    %v1854 = vpop.f32.mrf.mxu0
    %v1855 = vadd.f32 %v1802, %v1854
    %1856 = vmatmul.f32.gmra.mxu0 %v1041
    %v1857 = vpop.f32.mrf.mxu0
    %v1858 = vadd.f32 %v1805, %v1857
    %1859 = vmatmul.f32.gmra.mxu0 %v1043
    %v1860 = vpop.f32.mrf.mxu0
    %v1861 = vadd.f32 %v1808, %v1860
    %1862 = vmatmul.f32.gmra.mxu0 %v1045
    %v1863 = vpop.f32.mrf.mxu0
    %v1864 = vadd.f32 %v1811, %v1863
    %1865 = vdwg.mxu0
    %1866 = vmatpush.msra.mxu0 %v1237
    %1867 = vmatpush.msra.mxu0 %v1233
    %1868 = vmatpush.msra.mxu0 %v1229
    %1869 = vmatpush.msra.mxu0 %v1225
    %1870 = vmatpush.msra.mxu0 %v1221
    %1871 = vmatpush.msra.mxu0 %v1217
    %1872 = vmatpush.msra.mxu0 %v1213
    %1873 = vmatpush.msra.mxu0 %v1209
    %1874 = vmatpush.msra.mxu0 %v1205
    %1875 = vmatpush.msra.mxu0 %v1201
    %1876 = vmatpush.msra.mxu0 %v1197
    %1877 = vmatpush.msra.mxu0 %v1193
    %1878 = vmatpush.msra.mxu0 %v1189
    %1879 = vmatpush.msra.mxu0 %v1185
    %1880 = vmatpush.msra.mxu0 %v1181
    %1881 = vmatpush.msra.mxu0 %v1177
    %1882 = vmatmul.f32.gmra.mxu0 %v1024
    %v1883 = vpop.f32.mrf.mxu0
    %v1884 = vadd.f32 %v1831, %v1883
    %1885 = vmatmul.f32.gmra.mxu0 %v1026
    %v1886 = vpop.f32.mrf.mxu0
    %v1887 = vadd.f32 %v1834, %v1886
    %1888 = vmatmul.f32.gmra.mxu0 %v1028
    %v1889 = vpop.f32.mrf.mxu0
    %v1890 = vadd.f32 %v1837, %v1889
    %1891 = vmatmul.f32.gmra.mxu0 %v1030
    %v1892 = vpop.f32.mrf.mxu0
    %v1893 = vadd.f32 %v1840, %v1892
    %1894 = vmatmul.f32.gmra.mxu0 %v1032
    %v1895 = vpop.f32.mrf.mxu0
    %v1896 = vadd.f32 %v1843, %v1895
    %1897 = vmatmul.f32.gmra.mxu0 %v1034
    %v1898 = vpop.f32.mrf.mxu0
    %v1899 = vadd.f32 %v1846, %v1898
    %1900 = vmatmul.f32.gmra.mxu0 %v1036
    %v1901 = vpop.f32.mrf.mxu0
    %v1902 = vadd.f32 %v1849, %v1901
    %1903 = vmatmul.f32.gmra.mxu0 %v1038
    %v1904 = vpop.f32.mrf.mxu0
    %v1905 = vadd.f32 %v1852, %v1904
    %1906 = vmatmul.f32.gmra.mxu0 %v1040
    %v1907 = vpop.f32.mrf.mxu0
    %v1908 = vadd.f32 %v1855, %v1907
    %1909 = vmatmul.f32.gmra.mxu0 %v1042
    %v1910 = vpop.f32.mrf.mxu0
    %v1911 = vadd.f32 %v1858, %v1910
    %1912 = vmatmul.f32.gmra.mxu0 %v1044
    %v1913 = vpop.f32.mrf.mxu0
    %v1914 = vadd.f32 %v1861, %v1913
    %1915 = vmatmul.f32.gmra.mxu0 %v1046
    %v1916 = vpop.f32.mrf.mxu0
    %v1917 = vadd.f32 %v1864, %v1916
    %1918 = vdwg.mxu0
    %1919 = vmatpush.msra.mxu0 %v1301
    %1920 = vmatpush.msra.mxu0 %v1297
    %1921 = vmatpush.msra.mxu0 %v1293
    %1922 = vmatpush.msra.mxu0 %v1289
    %1923 = vmatpush.msra.mxu0 %v1285
    %1924 = vmatpush.msra.mxu0 %v1281
    %1925 = vmatpush.msra.mxu0 %v1277
    %1926 = vmatpush.msra.mxu0 %v1273
    %1927 = vmatpush.msra.mxu0 %v1269
    %1928 = vmatpush.msra.mxu0 %v1265
    %1929 = vmatpush.msra.mxu0 %v1261
    %1930 = vmatpush.msra.mxu0 %v1257
    %1931 = vmatpush.msra.mxu0 %v1253
    %1932 = vmatpush.msra.mxu0 %v1249
    %1933 = vmatpush.msra.mxu0 %v1245
    %1934 = vmatpush.msra.mxu0 %v1241
    %1935 = vmatmul.f32.gmra.mxu0 %v1025
    %v1936 = vpop.f32.mrf.mxu0
    %v1937 = vadd.f32 %v1884, %v1936
    %1938 = vmatmul.f32.gmra.mxu0 %v1027
    %v1939 = vpop.f32.mrf.mxu0
    %v1940 = vadd.f32 %v1887, %v1939
    %1941 = vmatmul.f32.gmra.mxu0 %v1029
    %v1942 = vpop.f32.mrf.mxu0
    %v1943 = vadd.f32 %v1890, %v1942
    %1944 = vmatmul.f32.gmra.mxu0 %v1031
    %v1945 = vpop.f32.mrf.mxu0
    %v1946 = vadd.f32 %v1893, %v1945
    %1947 = vmatmul.f32.gmra.mxu0 %v1033
    %v1948 = vpop.f32.mrf.mxu0
    %v1949 = vadd.f32 %v1896, %v1948
    %1950 = vmatmul.f32.gmra.mxu0 %v1035
    %v1951 = vpop.f32.mrf.mxu0
    %v1952 = vadd.f32 %v1899, %v1951
    %1953 = vmatmul.f32.gmra.mxu0 %v1037
    %v1954 = vpop.f32.mrf.mxu0
    %v1955 = vadd.f32 %v1902, %v1954
    %1956 = vmatmul.f32.gmra.mxu0 %v1039
    %v1957 = vpop.f32.mrf.mxu0
    %v1958 = vadd.f32 %v1905, %v1957
    %1959 = vmatmul.f32.gmra.mxu0 %v1041
    %v1960 = vpop.f32.mrf.mxu0
    %v1961 = vadd.f32 %v1908, %v1960
    %1962 = vmatmul.f32.gmra.mxu0 %v1043
    %v1963 = vpop.f32.mrf.mxu0
    %v1964 = vadd.f32 %v1911, %v1963
    %1965 = vmatmul.f32.gmra.mxu0 %v1045
    %v1966 = vpop.f32.mrf.mxu0
    %v1967 = vadd.f32 %v1914, %v1966
    %1968 = vmatmul.f32.gmra.mxu0 %v1047
    %v1969 = vpop.f32.mrf.mxu0
    %v1970 = vadd.f32 %v1917, %v1969
    %1971 = vdwg.mxu0
    %1972 = vmatpush.msra.mxu0 %v1365
    %1973 = vmatpush.msra.mxu0 %v1361
    %1974 = vmatpush.msra.mxu0 %v1357
    %1975 = vmatpush.msra.mxu0 %v1353
    %1976 = vmatpush.msra.mxu0 %v1349
    %1977 = vmatpush.msra.mxu0 %v1345
    %1978 = vmatpush.msra.mxu0 %v1341
    %1979 = vmatpush.msra.mxu0 %v1337
    %1980 = vmatpush.msra.mxu0 %v1333
    %1981 = vmatpush.msra.mxu0 %v1329
    %1982 = vmatpush.msra.mxu0 %v1325
    %1983 = vmatpush.msra.mxu0 %v1321
    %1984 = vmatpush.msra.mxu0 %v1317
    %1985 = vmatpush.msra.mxu0 %v1313
    %1986 = vmatpush.msra.mxu0 %v1309
    %1987 = vmatpush.msra.mxu0 %v1305
    %1988 = vmatmul.f32.gmra.mxu0 %v1026
    %v1989 = vpop.f32.mrf.mxu0
    %v1990 = vadd.f32 %v1937, %v1989
    %1991 = vmatmul.f32.gmra.mxu0 %v1028
    %v1992 = vpop.f32.mrf.mxu0
    %v1993 = vadd.f32 %v1940, %v1992
    %1994 = vmatmul.f32.gmra.mxu0 %v1030
    %v1995 = vpop.f32.mrf.mxu0
    %v1996 = vadd.f32 %v1943, %v1995
    %1997 = vmatmul.f32.gmra.mxu0 %v1032
    %v1998 = vpop.f32.mrf.mxu0
    %v1999 = vadd.f32 %v1946, %v1998
    %2000 = vmatmul.f32.gmra.mxu0 %v1034
    %v2001 = vpop.f32.mrf.mxu0
    %v2002 = vadd.f32 %v1949, %v2001
    %2003 = vmatmul.f32.gmra.mxu0 %v1036
    %v2004 = vpop.f32.mrf.mxu0
    %v2005 = vadd.f32 %v1952, %v2004
    %2006 = vmatmul.f32.gmra.mxu0 %v1038
    %v2007 = vpop.f32.mrf.mxu0
    %v2008 = vadd.f32 %v1955, %v2007
    %2009 = vmatmul.f32.gmra.mxu0 %v1040
    %v2010 = vpop.f32.mrf.mxu0
    %v2011 = vadd.f32 %v1958, %v2010
    %2012 = vmatmul.f32.gmra.mxu0 %v1042
    %v2013 = vpop.f32.mrf.mxu0
    %v2014 = vadd.f32 %v1961, %v2013
    %2015 = vmatmul.f32.gmra.mxu0 %v1044
    %v2016 = vpop.f32.mrf.mxu0
    %v2017 = vadd.f32 %v1964, %v2016
    %2018 = vmatmul.f32.gmra.mxu0 %v1046
    %v2019 = vpop.f32.mrf.mxu0
    %v2020 = vadd.f32 %v1967, %v2019
    %2021 = vmatmul.f32.gmra.mxu0 0.0
    %v2022 = vpop.f32.mrf.mxu0
    %v2023 = vadd.f32 %v1970, %v2022
    %2024 = vdwg.mxu0
    %2025 = vmatpush.msra.mxu0 %v1429
    %2026 = vmatpush.msra.mxu0 %v1425
    %2027 = vmatpush.msra.mxu0 %v1421
    %2028 = vmatpush.msra.mxu0 %v1417
    %2029 = vmatpush.msra.mxu0 %v1413
    %2030 = vmatpush.msra.mxu0 %v1409
    %2031 = vmatpush.msra.mxu0 %v1405
    %2032 = vmatpush.msra.mxu0 %v1401
    %2033 = vmatpush.msra.mxu0 %v1397
    %2034 = vmatpush.msra.mxu0 %v1393
    %2035 = vmatpush.msra.mxu0 %v1389
    %2036 = vmatpush.msra.mxu0 %v1385
    %2037 = vmatpush.msra.mxu0 %v1381
    %2038 = vmatpush.msra.mxu0 %v1377
    %2039 = vmatpush.msra.mxu0 %v1373
    %2040 = vmatpush.msra.mxu0 %v1369
    %2041 = vmatmul.f32.gmra.mxu0 %v1027
    %v2042 = vpop.f32.mrf.mxu0
    %v2043 = vadd.f32 %v1990, %v2042
    %2044 = vmatmul.f32.gmra.mxu0 %v1029
    %v2045 = vpop.f32.mrf.mxu0
    %v2046 = vadd.f32 %v1993, %v2045
    %2047 = vmatmul.f32.gmra.mxu0 %v1031
    %v2048 = vpop.f32.mrf.mxu0
    %v2049 = vadd.f32 %v1996, %v2048
    %2050 = vmatmul.f32.gmra.mxu0 %v1033
    %v2051 = vpop.f32.mrf.mxu0
    %v2052 = vadd.f32 %v1999, %v2051
    %2053 = vmatmul.f32.gmra.mxu0 %v1035
    %v2054 = vpop.f32.mrf.mxu0
    %v2055 = vadd.f32 %v2002, %v2054
    %2056 = vmatmul.f32.gmra.mxu0 %v1037
    %v2057 = vpop.f32.mrf.mxu0
    %v2058 = vadd.f32 %v2005, %v2057
    %2059 = vmatmul.f32.gmra.mxu0 %v1039
    %v2060 = vpop.f32.mrf.mxu0
    %v2061 = vadd.f32 %v2008, %v2060
    %2062 = vmatmul.f32.gmra.mxu0 %v1041
    %v2063 = vpop.f32.mrf.mxu0
    %v2064 = vadd.f32 %v2011, %v2063
    %2065 = vmatmul.f32.gmra.mxu0 %v1043
    %v2066 = vpop.f32.mrf.mxu0
    %v2067 = vadd.f32 %v2014, %v2066
    %2068 = vmatmul.f32.gmra.mxu0 %v1045
    %v2069 = vpop.f32.mrf.mxu0
    %v2070 = vadd.f32 %v2017, %v2069
    %2071 = vmatmul.f32.gmra.mxu0 %v1047
    %v2072 = vpop.f32.mrf.mxu0
    %v2073 = vadd.f32 %v2020, %v2072
    %2074 = vmatmul.f32.gmra.mxu0 0.0
    %v2075 = vpop.f32.mrf.mxu0
    %v2076 = vadd.f32 %v2023, %v2075
    %2077 = vdwg.mxu0
    %2078 = vmatpush.msra.mxu0 %v1110
    %2079 = vmatpush.msra.mxu0 %v1106
    %2080 = vmatpush.msra.mxu0 %v1102
    %2081 = vmatpush.msra.mxu0 %v1098
    %2082 = vmatpush.msra.mxu0 %v1094
    %2083 = vmatpush.msra.mxu0 %v1090
    %2084 = vmatpush.msra.mxu0 %v1086
    %2085 = vmatpush.msra.mxu0 %v1082
    %2086 = vmatpush.msra.mxu0 %v1078
    %2087 = vmatpush.msra.mxu0 %v1074
    %2088 = vmatpush.msra.mxu0 %v1070
    %2089 = vmatpush.msra.mxu0 %v1066
    %2090 = vmatpush.msra.mxu0 %v1062
    %2091 = vmatpush.msra.mxu0 %v1058
    %2092 = vmatpush.msra.mxu0 %v1054
    %2093 = vmatpush.msra.mxu0 %v1050
    %2094 = vmatmul.f32.gmra.mxu0 0.0
    %v2095 = vpop.f32.mrf.mxu0
    %v2096 = vadd.f32 %v1436, %v2095
    %2097 = vmatmul.f32.gmra.mxu0 %v1024
    %v2098 = vpop.f32.mrf.mxu0
    %v2099 = vadd.f32 %v1436, %v2098
    %2100 = vmatmul.f32.gmra.mxu0 %v1026
    %v2101 = vpop.f32.mrf.mxu0
    %v2102 = vadd.f32 %v1436, %v2101
    %2103 = vmatmul.f32.gmra.mxu0 %v1028
    %v2104 = vpop.f32.mrf.mxu0
    %v2105 = vadd.f32 %v1436, %v2104
    %2106 = vmatmul.f32.gmra.mxu0 %v1030
    %v2107 = vpop.f32.mrf.mxu0
    %v2108 = vadd.f32 %v1436, %v2107
    %2109 = vmatmul.f32.gmra.mxu0 %v1032
    %v2110 = vpop.f32.mrf.mxu0
    %v2111 = vadd.f32 %v1436, %v2110
    %2112 = vmatmul.f32.gmra.mxu0 %v1034
    %v2113 = vpop.f32.mrf.mxu0
    %v2114 = vadd.f32 %v1436, %v2113
    %2115 = vmatmul.f32.gmra.mxu0 %v1036
    %v2116 = vpop.f32.mrf.mxu0
    %v2117 = vadd.f32 %v1436, %v2116
    %2118 = vmatmul.f32.gmra.mxu0 %v1038
    %v2119 = vpop.f32.mrf.mxu0
    %v2120 = vadd.f32 %v1436, %v2119
    %2121 = vmatmul.f32.gmra.mxu0 %v1040
    %v2122 = vpop.f32.mrf.mxu0
    %v2123 = vadd.f32 %v1436, %v2122
    %2124 = vmatmul.f32.gmra.mxu0 %v1042
    %v2125 = vpop.f32.mrf.mxu0
    %v2126 = vadd.f32 %v1436, %v2125
    %2127 = vmatmul.f32.gmra.mxu0 %v1044
    %v2128 = vpop.f32.mrf.mxu0
    %v2129 = vadd.f32 %v1436, %v2128
    %2130 = vdwg.mxu0
    %2131 = vmatpush.msra.mxu0 %v1174
    %2132 = vmatpush.msra.mxu0 %v1170
    %2133 = vmatpush.msra.mxu0 %v1166
    %2134 = vmatpush.msra.mxu0 %v1162
    %2135 = vmatpush.msra.mxu0 %v1158
    %2136 = vmatpush.msra.mxu0 %v1154
    %2137 = vmatpush.msra.mxu0 %v1150
    %2138 = vmatpush.msra.mxu0 %v1146
    %2139 = vmatpush.msra.mxu0 %v1142
    %2140 = vmatpush.msra.mxu0 %v1138
    %2141 = vmatpush.msra.mxu0 %v1134
    %2142 = vmatpush.msra.mxu0 %v1130
    %2143 = vmatpush.msra.mxu0 %v1126
    %2144 = vmatpush.msra.mxu0 %v1122
    %2145 = vmatpush.msra.mxu0 %v1118
    %2146 = vmatpush.msra.mxu0 %v1114
    %2147 = vmatmul.f32.gmra.mxu0 0.0
    %v2148 = vpop.f32.mrf.mxu0
    %v2149 = vadd.f32 %v2096, %v2148
    %2150 = vmatmul.f32.gmra.mxu0 %v1025
    %v2151 = vpop.f32.mrf.mxu0
    %v2152 = vadd.f32 %v2099, %v2151
    %2153 = vmatmul.f32.gmra.mxu0 %v1027
    %v2154 = vpop.f32.mrf.mxu0
    %v2155 = vadd.f32 %v2102, %v2154
    %2156 = vmatmul.f32.gmra.mxu0 %v1029
    %v2157 = vpop.f32.mrf.mxu0
    %v2158 = vadd.f32 %v2105, %v2157
    %2159 = vmatmul.f32.gmra.mxu0 %v1031
    %v2160 = vpop.f32.mrf.mxu0
    %v2161 = vadd.f32 %v2108, %v2160
    %2162 = vmatmul.f32.gmra.mxu0 %v1033
    %v2163 = vpop.f32.mrf.mxu0
    %v2164 = vadd.f32 %v2111, %v2163
    %2165 = vmatmul.f32.gmra.mxu0 %v1035
    %v2166 = vpop.f32.mrf.mxu0
    %v2167 = vadd.f32 %v2114, %v2166
    %2168 = vmatmul.f32.gmra.mxu0 %v1037
    %v2169 = vpop.f32.mrf.mxu0
    %v2170 = vadd.f32 %v2117, %v2169
    %2171 = vmatmul.f32.gmra.mxu0 %v1039
    %v2172 = vpop.f32.mrf.mxu0
    %v2173 = vadd.f32 %v2120, %v2172
    %2174 = vmatmul.f32.gmra.mxu0 %v1041
    %v2175 = vpop.f32.mrf.mxu0
    %v2176 = vadd.f32 %v2123, %v2175
    %2177 = vmatmul.f32.gmra.mxu0 %v1043
    %v2178 = vpop.f32.mrf.mxu0
    %v2179 = vadd.f32 %v2126, %v2178
    %2180 = vmatmul.f32.gmra.mxu0 %v1045
    %v2181 = vpop.f32.mrf.mxu0
    %v2182 = vadd.f32 %v2129, %v2181
    %2183 = vdwg.mxu0
    %2184 = vmatpush.msra.mxu0 %v1238
    %2185 = vmatpush.msra.mxu0 %v1234
    %2186 = vmatpush.msra.mxu0 %v1230
    %2187 = vmatpush.msra.mxu0 %v1226
    %2188 = vmatpush.msra.mxu0 %v1222
    %2189 = vmatpush.msra.mxu0 %v1218
    %2190 = vmatpush.msra.mxu0 %v1214
    %2191 = vmatpush.msra.mxu0 %v1210
    %2192 = vmatpush.msra.mxu0 %v1206
    %2193 = vmatpush.msra.mxu0 %v1202
    %2194 = vmatpush.msra.mxu0 %v1198
    %2195 = vmatpush.msra.mxu0 %v1194
    %2196 = vmatpush.msra.mxu0 %v1190
    %2197 = vmatpush.msra.mxu0 %v1186
    %2198 = vmatpush.msra.mxu0 %v1182
    %2199 = vmatpush.msra.mxu0 %v1178
    %2200 = vmatmul.f32.gmra.mxu0 %v1024
    %v2201 = vpop.f32.mrf.mxu0
    %v2202 = vadd.f32 %v2149, %v2201
    %2203 = vmatmul.f32.gmra.mxu0 %v1026
    %v2204 = vpop.f32.mrf.mxu0
    %v2205 = vadd.f32 %v2152, %v2204
    %2206 = vmatmul.f32.gmra.mxu0 %v1028
    %v2207 = vpop.f32.mrf.mxu0
    %v2208 = vadd.f32 %v2155, %v2207
    %2209 = vmatmul.f32.gmra.mxu0 %v1030
    %v2210 = vpop.f32.mrf.mxu0
    %v2211 = vadd.f32 %v2158, %v2210
    %2212 = vmatmul.f32.gmra.mxu0 %v1032
    %v2213 = vpop.f32.mrf.mxu0
    %v2214 = vadd.f32 %v2161, %v2213
    %2215 = vmatmul.f32.gmra.mxu0 %v1034
    %v2216 = vpop.f32.mrf.mxu0
    %v2217 = vadd.f32 %v2164, %v2216
    %2218 = vmatmul.f32.gmra.mxu0 %v1036
    %v2219 = vpop.f32.mrf.mxu0
    %v2220 = vadd.f32 %v2167, %v2219
    %2221 = vmatmul.f32.gmra.mxu0 %v1038
    %v2222 = vpop.f32.mrf.mxu0
    %v2223 = vadd.f32 %v2170, %v2222
    %2224 = vmatmul.f32.gmra.mxu0 %v1040
    %v2225 = vpop.f32.mrf.mxu0
    %v2226 = vadd.f32 %v2173, %v2225
    %2227 = vmatmul.f32.gmra.mxu0 %v1042
    %v2228 = vpop.f32.mrf.mxu0
    %v2229 = vadd.f32 %v2176, %v2228
    %2230 = vmatmul.f32.gmra.mxu0 %v1044
    %v2231 = vpop.f32.mrf.mxu0
    %v2232 = vadd.f32 %v2179, %v2231
    %2233 = vmatmul.f32.gmra.mxu0 %v1046
    %v2234 = vpop.f32.mrf.mxu0
    %v2235 = vadd.f32 %v2182, %v2234
    %2236 = vdwg.mxu0
    %2237 = vmatpush.msra.mxu0 %v1302
    %2238 = vmatpush.msra.mxu0 %v1298
    %2239 = vmatpush.msra.mxu0 %v1294
    %2240 = vmatpush.msra.mxu0 %v1290
    %2241 = vmatpush.msra.mxu0 %v1286
    %2242 = vmatpush.msra.mxu0 %v1282
    %2243 = vmatpush.msra.mxu0 %v1278
    %2244 = vmatpush.msra.mxu0 %v1274
    %2245 = vmatpush.msra.mxu0 %v1270
    %2246 = vmatpush.msra.mxu0 %v1266
    %2247 = vmatpush.msra.mxu0 %v1262
    %2248 = vmatpush.msra.mxu0 %v1258
    %2249 = vmatpush.msra.mxu0 %v1254
    %2250 = vmatpush.msra.mxu0 %v1250
    %2251 = vmatpush.msra.mxu0 %v1246
    %2252 = vmatpush.msra.mxu0 %v1242
    %2253 = vmatmul.f32.gmra.mxu0 %v1025
    %v2254 = vpop.f32.mrf.mxu0
    %v2255 = vadd.f32 %v2202, %v2254
    %2256 = vmatmul.f32.gmra.mxu0 %v1027
    %v2257 = vpop.f32.mrf.mxu0
    %v2258 = vadd.f32 %v2205, %v2257
    %2259 = vmatmul.f32.gmra.mxu0 %v1029
    %v2260 = vpop.f32.mrf.mxu0
    %v2261 = vadd.f32 %v2208, %v2260
    %2262 = vmatmul.f32.gmra.mxu0 %v1031
    %v2263 = vpop.f32.mrf.mxu0
    %v2264 = vadd.f32 %v2211, %v2263
    %2265 = vmatmul.f32.gmra.mxu0 %v1033
    %v2266 = vpop.f32.mrf.mxu0
    %v2267 = vadd.f32 %v2214, %v2266
    %2268 = vmatmul.f32.gmra.mxu0 %v1035
    %v2269 = vpop.f32.mrf.mxu0
    %v2270 = vadd.f32 %v2217, %v2269
    %2271 = vmatmul.f32.gmra.mxu0 %v1037
    %v2272 = vpop.f32.mrf.mxu0
    %v2273 = vadd.f32 %v2220, %v2272
    %2274 = vmatmul.f32.gmra.mxu0 %v1039
    %v2275 = vpop.f32.mrf.mxu0
    %v2276 = vadd.f32 %v2223, %v2275
    %2277 = vmatmul.f32.gmra.mxu0 %v1041
    %v2278 = vpop.f32.mrf.mxu0
    %v2279 = vadd.f32 %v2226, %v2278
    %2280 = vmatmul.f32.gmra.mxu0 %v1043
    %v2281 = vpop.f32.mrf.mxu0
    %v2282 = vadd.f32 %v2229, %v2281
    %2283 = vmatmul.f32.gmra.mxu0 %v1045
    %v2284 = vpop.f32.mrf.mxu0
    %v2285 = vadd.f32 %v2232, %v2284
    %2286 = vmatmul.f32.gmra.mxu0 %v1047
    %v2287 = vpop.f32.mrf.mxu0
    %v2288 = vadd.f32 %v2235, %v2287
    %2289 = vdwg.mxu0
    %2290 = vmatpush.msra.mxu0 %v1366
    %2291 = vmatpush.msra.mxu0 %v1362
    %2292 = vmatpush.msra.mxu0 %v1358
    %2293 = vmatpush.msra.mxu0 %v1354
    %2294 = vmatpush.msra.mxu0 %v1350
    %2295 = vmatpush.msra.mxu0 %v1346
    %2296 = vmatpush.msra.mxu0 %v1342
    %2297 = vmatpush.msra.mxu0 %v1338
    %2298 = vmatpush.msra.mxu0 %v1334
    %2299 = vmatpush.msra.mxu0 %v1330
    %2300 = vmatpush.msra.mxu0 %v1326
    %2301 = vmatpush.msra.mxu0 %v1322
    %2302 = vmatpush.msra.mxu0 %v1318
    %2303 = vmatpush.msra.mxu0 %v1314
    %2304 = vmatpush.msra.mxu0 %v1310
    %2305 = vmatpush.msra.mxu0 %v1306
    %2306 = vmatmul.f32.gmra.mxu0 %v1026
    %v2307 = vpop.f32.mrf.mxu0
    %v2308 = vadd.f32 %v2255, %v2307
    %2309 = vmatmul.f32.gmra.mxu0 %v1028
    %v2310 = vpop.f32.mrf.mxu0
    %v2311 = vadd.f32 %v2258, %v2310
    %2312 = vmatmul.f32.gmra.mxu0 %v1030
    %v2313 = vpop.f32.mrf.mxu0
    %v2314 = vadd.f32 %v2261, %v2313
    %2315 = vmatmul.f32.gmra.mxu0 %v1032
    %v2316 = vpop.f32.mrf.mxu0
    %v2317 = vadd.f32 %v2264, %v2316
    %2318 = vmatmul.f32.gmra.mxu0 %v1034
    %v2319 = vpop.f32.mrf.mxu0
    %v2320 = vadd.f32 %v2267, %v2319
    %2321 = vmatmul.f32.gmra.mxu0 %v1036
    %v2322 = vpop.f32.mrf.mxu0
    %v2323 = vadd.f32 %v2270, %v2322
    %2324 = vmatmul.f32.gmra.mxu0 %v1038
    %v2325 = vpop.f32.mrf.mxu0
    %v2326 = vadd.f32 %v2273, %v2325
    %2327 = vmatmul.f32.gmra.mxu0 %v1040
    %v2328 = vpop.f32.mrf.mxu0
    %v2329 = vadd.f32 %v2276, %v2328
    %2330 = vmatmul.f32.gmra.mxu0 %v1042
    %v2331 = vpop.f32.mrf.mxu0
    %v2332 = vadd.f32 %v2279, %v2331
    %2333 = vmatmul.f32.gmra.mxu0 %v1044
    %v2334 = vpop.f32.mrf.mxu0
    %v2335 = vadd.f32 %v2282, %v2334
    %2336 = vmatmul.f32.gmra.mxu0 %v1046
    %v2337 = vpop.f32.mrf.mxu0
    %v2338 = vadd.f32 %v2285, %v2337
    %2339 = vmatmul.f32.gmra.mxu0 0.0
    %v2340 = vpop.f32.mrf.mxu0
    %v2341 = vadd.f32 %v2288, %v2340
    %2342 = vdwg.mxu0
    %2343 = vmatpush.msra.mxu0 %v1430
    %2344 = vmatpush.msra.mxu0 %v1426
    %2345 = vmatpush.msra.mxu0 %v1422
    %2346 = vmatpush.msra.mxu0 %v1418
    %2347 = vmatpush.msra.mxu0 %v1414
    %2348 = vmatpush.msra.mxu0 %v1410
    %2349 = vmatpush.msra.mxu0 %v1406
    %2350 = vmatpush.msra.mxu0 %v1402
    %2351 = vmatpush.msra.mxu0 %v1398
    %2352 = vmatpush.msra.mxu0 %v1394
    %2353 = vmatpush.msra.mxu0 %v1390
    %2354 = vmatpush.msra.mxu0 %v1386
    %2355 = vmatpush.msra.mxu0 %v1382
    %2356 = vmatpush.msra.mxu0 %v1378
    %2357 = vmatpush.msra.mxu0 %v1374
    %2358 = vmatpush.msra.mxu0 %v1370
    %2359 = vmatmul.f32.gmra.mxu0 %v1027
    %v2360 = vpop.f32.mrf.mxu0
    %v2361 = vadd.f32 %v2308, %v2360
    %2362 = vmatmul.f32.gmra.mxu0 %v1029
    %v2363 = vpop.f32.mrf.mxu0
    %v2364 = vadd.f32 %v2311, %v2363
    %2365 = vmatmul.f32.gmra.mxu0 %v1031
    %v2366 = vpop.f32.mrf.mxu0
    %v2367 = vadd.f32 %v2314, %v2366
    %2368 = vmatmul.f32.gmra.mxu0 %v1033
    %v2369 = vpop.f32.mrf.mxu0
    %v2370 = vadd.f32 %v2317, %v2369
    %2371 = vmatmul.f32.gmra.mxu0 %v1035
    %v2372 = vpop.f32.mrf.mxu0
    %v2373 = vadd.f32 %v2320, %v2372
    %2374 = vmatmul.f32.gmra.mxu0 %v1037
    %v2375 = vpop.f32.mrf.mxu0
    %v2376 = vadd.f32 %v2323, %v2375
    %2377 = vmatmul.f32.gmra.mxu0 %v1039
    %v2378 = vpop.f32.mrf.mxu0
    %v2379 = vadd.f32 %v2326, %v2378
    %2380 = vmatmul.f32.gmra.mxu0 %v1041
    %v2381 = vpop.f32.mrf.mxu0
    %v2382 = vadd.f32 %v2329, %v2381
    %2383 = vmatmul.f32.gmra.mxu0 %v1043
    %v2384 = vpop.f32.mrf.mxu0
    %v2385 = vadd.f32 %v2332, %v2384
    %2386 = vmatmul.f32.gmra.mxu0 %v1045
    %v2387 = vpop.f32.mrf.mxu0
    %v2388 = vadd.f32 %v2335, %v2387
    %2389 = vmatmul.f32.gmra.mxu0 %v1047
    %v2390 = vpop.f32.mrf.mxu0
    %v2391 = vadd.f32 %v2338, %v2390
    %2392 = vmatmul.f32.gmra.mxu0 0.0
    %v2393 = vpop.f32.mrf.mxu0
    %v2394 = vadd.f32 %v2341, %v2393
    %2395 = vdwg.mxu0
    %2396 = vmatpush.msra.mxu0 %v1111
    %2397 = vmatpush.msra.mxu0 %v1107
    %2398 = vmatpush.msra.mxu0 %v1103
    %2399 = vmatpush.msra.mxu0 %v1099
    %2400 = vmatpush.msra.mxu0 %v1095
    %2401 = vmatpush.msra.mxu0 %v1091
    %2402 = vmatpush.msra.mxu0 %v1087
    %2403 = vmatpush.msra.mxu0 %v1083
    %2404 = vmatpush.msra.mxu0 %v1079
    %2405 = vmatpush.msra.mxu0 %v1075
    %2406 = vmatpush.msra.mxu0 %v1071
    %2407 = vmatpush.msra.mxu0 %v1067
    %2408 = vmatpush.msra.mxu0 %v1063
    %2409 = vmatpush.msra.mxu0 %v1059
    %2410 = vmatpush.msra.mxu0 %v1055
    %2411 = vmatpush.msra.mxu0 %v1051
    %2412 = vmatmul.f32.gmra.mxu0 0.0
    %v2413 = vpop.f32.mrf.mxu0
    %v2414 = vadd.f32 %v1437, %v2413
    %2415 = vmatmul.f32.gmra.mxu0 %v1024
    %v2416 = vpop.f32.mrf.mxu0
    %v2417 = vadd.f32 %v1437, %v2416
    %2418 = vmatmul.f32.gmra.mxu0 %v1026
    %v2419 = vpop.f32.mrf.mxu0
    %v2420 = vadd.f32 %v1437, %v2419
    %2421 = vmatmul.f32.gmra.mxu0 %v1028
    %v2422 = vpop.f32.mrf.mxu0
    %v2423 = vadd.f32 %v1437, %v2422
    %2424 = vmatmul.f32.gmra.mxu0 %v1030
    %v2425 = vpop.f32.mrf.mxu0
    %v2426 = vadd.f32 %v1437, %v2425
    %2427 = vmatmul.f32.gmra.mxu0 %v1032
    %v2428 = vpop.f32.mrf.mxu0
    %v2429 = vadd.f32 %v1437, %v2428
    %2430 = vmatmul.f32.gmra.mxu0 %v1034
    %v2431 = vpop.f32.mrf.mxu0
    %v2432 = vadd.f32 %v1437, %v2431
    %2433 = vmatmul.f32.gmra.mxu0 %v1036
    %v2434 = vpop.f32.mrf.mxu0
    %v2435 = vadd.f32 %v1437, %v2434
    %2436 = vmatmul.f32.gmra.mxu0 %v1038
    %v2437 = vpop.f32.mrf.mxu0
    %v2438 = vadd.f32 %v1437, %v2437
    %2439 = vmatmul.f32.gmra.mxu0 %v1040
    %v2440 = vpop.f32.mrf.mxu0
    %v2441 = vadd.f32 %v1437, %v2440
    %2442 = vmatmul.f32.gmra.mxu0 %v1042
    %v2443 = vpop.f32.mrf.mxu0
    %v2444 = vadd.f32 %v1437, %v2443
    %2445 = vmatmul.f32.gmra.mxu0 %v1044
    %v2446 = vpop.f32.mrf.mxu0
    %v2447 = vadd.f32 %v1437, %v2446
    %2448 = vdwg.mxu0
    %2449 = vmatpush.msra.mxu0 %v1175
    %2450 = vmatpush.msra.mxu0 %v1171
    %2451 = vmatpush.msra.mxu0 %v1167
    %2452 = vmatpush.msra.mxu0 %v1163
    %2453 = vmatpush.msra.mxu0 %v1159
    %2454 = vmatpush.msra.mxu0 %v1155
    %2455 = vmatpush.msra.mxu0 %v1151
    %2456 = vmatpush.msra.mxu0 %v1147
    %2457 = vmatpush.msra.mxu0 %v1143
    %2458 = vmatpush.msra.mxu0 %v1139
    %2459 = vmatpush.msra.mxu0 %v1135
    %2460 = vmatpush.msra.mxu0 %v1131
    %2461 = vmatpush.msra.mxu0 %v1127
    %2462 = vmatpush.msra.mxu0 %v1123
    %2463 = vmatpush.msra.mxu0 %v1119
    %2464 = vmatpush.msra.mxu0 %v1115
    %2465 = vmatmul.f32.gmra.mxu0 0.0
    %v2466 = vpop.f32.mrf.mxu0
    %v2467 = vadd.f32 %v2414, %v2466
    %2468 = vmatmul.f32.gmra.mxu0 %v1025
    %v2469 = vpop.f32.mrf.mxu0
    %v2470 = vadd.f32 %v2417, %v2469
    %2471 = vmatmul.f32.gmra.mxu0 %v1027
    %v2472 = vpop.f32.mrf.mxu0
    %v2473 = vadd.f32 %v2420, %v2472
    %2474 = vmatmul.f32.gmra.mxu0 %v1029
    %v2475 = vpop.f32.mrf.mxu0
    %v2476 = vadd.f32 %v2423, %v2475
    %2477 = vmatmul.f32.gmra.mxu0 %v1031
    %v2478 = vpop.f32.mrf.mxu0
    %v2479 = vadd.f32 %v2426, %v2478
    %2480 = vmatmul.f32.gmra.mxu0 %v1033
    %v2481 = vpop.f32.mrf.mxu0
    %v2482 = vadd.f32 %v2429, %v2481
    %2483 = vmatmul.f32.gmra.mxu0 %v1035
    %v2484 = vpop.f32.mrf.mxu0
    %v2485 = vadd.f32 %v2432, %v2484
    %2486 = vmatmul.f32.gmra.mxu0 %v1037
    %v2487 = vpop.f32.mrf.mxu0
    %v2488 = vadd.f32 %v2435, %v2487
    %2489 = vmatmul.f32.gmra.mxu0 %v1039
    %v2490 = vpop.f32.mrf.mxu0
    %v2491 = vadd.f32 %v2438, %v2490
    %2492 = vmatmul.f32.gmra.mxu0 %v1041
    %v2493 = vpop.f32.mrf.mxu0
    %v2494 = vadd.f32 %v2441, %v2493
    %2495 = vmatmul.f32.gmra.mxu0 %v1043
    %v2496 = vpop.f32.mrf.mxu0
    %v2497 = vadd.f32 %v2444, %v2496
    %2498 = vmatmul.f32.gmra.mxu0 %v1045
    %v2499 = vpop.f32.mrf.mxu0
    %v2500 = vadd.f32 %v2447, %v2499
    %2501 = vdwg.mxu0
    %2502 = vmatpush.msra.mxu0 %v1239
    %2503 = vmatpush.msra.mxu0 %v1235
    %2504 = vmatpush.msra.mxu0 %v1231
    %2505 = vmatpush.msra.mxu0 %v1227
    %2506 = vmatpush.msra.mxu0 %v1223
    %2507 = vmatpush.msra.mxu0 %v1219
    %2508 = vmatpush.msra.mxu0 %v1215
    %2509 = vmatpush.msra.mxu0 %v1211
    %2510 = vmatpush.msra.mxu0 %v1207
    %2511 = vmatpush.msra.mxu0 %v1203
    %2512 = vmatpush.msra.mxu0 %v1199
    %2513 = vmatpush.msra.mxu0 %v1195
    %2514 = vmatpush.msra.mxu0 %v1191
    %2515 = vmatpush.msra.mxu0 %v1187
    %2516 = vmatpush.msra.mxu0 %v1183
    %2517 = vmatpush.msra.mxu0 %v1179
    %2518 = vmatmul.f32.gmra.mxu0 %v1024
    %v2519 = vpop.f32.mrf.mxu0
    %v2520 = vadd.f32 %v2467, %v2519
    %2521 = vmatmul.f32.gmra.mxu0 %v1026
    %v2522 = vpop.f32.mrf.mxu0
    %v2523 = vadd.f32 %v2470, %v2522
    %2524 = vmatmul.f32.gmra.mxu0 %v1028
    %v2525 = vpop.f32.mrf.mxu0
    %v2526 = vadd.f32 %v2473, %v2525
    %2527 = vmatmul.f32.gmra.mxu0 %v1030
    %v2528 = vpop.f32.mrf.mxu0
    %v2529 = vadd.f32 %v2476, %v2528
    %2530 = vmatmul.f32.gmra.mxu0 %v1032
    %v2531 = vpop.f32.mrf.mxu0
    %v2532 = vadd.f32 %v2479, %v2531
    %2533 = vmatmul.f32.gmra.mxu0 %v1034
    %v2534 = vpop.f32.mrf.mxu0
    %v2535 = vadd.f32 %v2482, %v2534
    %2536 = vmatmul.f32.gmra.mxu0 %v1036
    %v2537 = vpop.f32.mrf.mxu0
    %v2538 = vadd.f32 %v2485, %v2537
    %2539 = vmatmul.f32.gmra.mxu0 %v1038
    %v2540 = vpop.f32.mrf.mxu0
    %v2541 = vadd.f32 %v2488, %v2540
    %2542 = vmatmul.f32.gmra.mxu0 %v1040
    %v2543 = vpop.f32.mrf.mxu0
    %v2544 = vadd.f32 %v2491, %v2543
    %2545 = vmatmul.f32.gmra.mxu0 %v1042
    %v2546 = vpop.f32.mrf.mxu0
    %v2547 = vadd.f32 %v2494, %v2546
    %2548 = vmatmul.f32.gmra.mxu0 %v1044
    %v2549 = vpop.f32.mrf.mxu0
    %v2550 = vadd.f32 %v2497, %v2549
    %2551 = vmatmul.f32.gmra.mxu0 %v1046
    %v2552 = vpop.f32.mrf.mxu0
    %v2553 = vadd.f32 %v2500, %v2552
    %2554 = vdwg.mxu0
    %2555 = vmatpush.msra.mxu0 %v1303
    %2556 = vmatpush.msra.mxu0 %v1299
    %2557 = vmatpush.msra.mxu0 %v1295
    %2558 = vmatpush.msra.mxu0 %v1291
    %2559 = vmatpush.msra.mxu0 %v1287
    %2560 = vmatpush.msra.mxu0 %v1283
    %2561 = vmatpush.msra.mxu0 %v1279
    %2562 = vmatpush.msra.mxu0 %v1275
    %2563 = vmatpush.msra.mxu0 %v1271
    %2564 = vmatpush.msra.mxu0 %v1267
    %2565 = vmatpush.msra.mxu0 %v1263
    %2566 = vmatpush.msra.mxu0 %v1259
    %2567 = vmatpush.msra.mxu0 %v1255
    %2568 = vmatpush.msra.mxu0 %v1251
    %2569 = vmatpush.msra.mxu0 %v1247
    %2570 = vmatpush.msra.mxu0 %v1243
    %2571 = vmatmul.f32.gmra.mxu0 %v1025
    %v2572 = vpop.f32.mrf.mxu0
    %v2573 = vadd.f32 %v2520, %v2572
    %2574 = vmatmul.f32.gmra.mxu0 %v1027
    %v2575 = vpop.f32.mrf.mxu0
    %v2576 = vadd.f32 %v2523, %v2575
    %2577 = vmatmul.f32.gmra.mxu0 %v1029
    %v2578 = vpop.f32.mrf.mxu0
    %v2579 = vadd.f32 %v2526, %v2578
    %2580 = vmatmul.f32.gmra.mxu0 %v1031
    %v2581 = vpop.f32.mrf.mxu0
    %v2582 = vadd.f32 %v2529, %v2581
    %2583 = vmatmul.f32.gmra.mxu0 %v1033
    %v2584 = vpop.f32.mrf.mxu0
    %v2585 = vadd.f32 %v2532, %v2584
    %2586 = vmatmul.f32.gmra.mxu0 %v1035
    %v2587 = vpop.f32.mrf.mxu0
    %v2588 = vadd.f32 %v2535, %v2587
    %2589 = vmatmul.f32.gmra.mxu0 %v1037
    %v2590 = vpop.f32.mrf.mxu0
    %v2591 = vadd.f32 %v2538, %v2590
    %2592 = vmatmul.f32.gmra.mxu0 %v1039
    %v2593 = vpop.f32.mrf.mxu0
    %v2594 = vadd.f32 %v2541, %v2593
    %2595 = vmatmul.f32.gmra.mxu0 %v1041
    %v2596 = vpop.f32.mrf.mxu0
    %v2597 = vadd.f32 %v2544, %v2596
    %2598 = vmatmul.f32.gmra.mxu0 %v1043
    %v2599 = vpop.f32.mrf.mxu0
    %v2600 = vadd.f32 %v2547, %v2599
    %2601 = vmatmul.f32.gmra.mxu0 %v1045
    %v2602 = vpop.f32.mrf.mxu0
    %v2603 = vadd.f32 %v2550, %v2602
    %2604 = vmatmul.f32.gmra.mxu0 %v1047
    %v2605 = vpop.f32.mrf.mxu0
    %v2606 = vadd.f32 %v2553, %v2605
    %2607 = vdwg.mxu0
    %2608 = vmatpush.msra.mxu0 %v1367
    %2609 = vmatpush.msra.mxu0 %v1363
    %2610 = vmatpush.msra.mxu0 %v1359
    %2611 = vmatpush.msra.mxu0 %v1355
    %2612 = vmatpush.msra.mxu0 %v1351
    %2613 = vmatpush.msra.mxu0 %v1347
    %2614 = vmatpush.msra.mxu0 %v1343
    %2615 = vmatpush.msra.mxu0 %v1339
    %2616 = vmatpush.msra.mxu0 %v1335
    %2617 = vmatpush.msra.mxu0 %v1331
    %2618 = vmatpush.msra.mxu0 %v1327
    %2619 = vmatpush.msra.mxu0 %v1323
    %2620 = vmatpush.msra.mxu0 %v1319
    %2621 = vmatpush.msra.mxu0 %v1315
    %2622 = vmatpush.msra.mxu0 %v1311
    %2623 = vmatpush.msra.mxu0 %v1307
    %2624 = vmatmul.f32.gmra.mxu0 %v1026
    %v2625 = vpop.f32.mrf.mxu0
    %v2626 = vadd.f32 %v2573, %v2625
    %2627 = vmatmul.f32.gmra.mxu0 %v1028
    %v2628 = vpop.f32.mrf.mxu0
    %v2629 = vadd.f32 %v2576, %v2628
    %2630 = vmatmul.f32.gmra.mxu0 %v1030
    %v2631 = vpop.f32.mrf.mxu0
    %v2632 = vadd.f32 %v2579, %v2631
    %2633 = vmatmul.f32.gmra.mxu0 %v1032
    %v2634 = vpop.f32.mrf.mxu0
    %v2635 = vadd.f32 %v2582, %v2634
    %2636 = vmatmul.f32.gmra.mxu0 %v1034
    %v2637 = vpop.f32.mrf.mxu0
    %v2638 = vadd.f32 %v2585, %v2637
    %2639 = vmatmul.f32.gmra.mxu0 %v1036
    %v2640 = vpop.f32.mrf.mxu0
    %v2641 = vadd.f32 %v2588, %v2640
    %2642 = vmatmul.f32.gmra.mxu0 %v1038
    %v2643 = vpop.f32.mrf.mxu0
    %v2644 = vadd.f32 %v2591, %v2643
    %2645 = vmatmul.f32.gmra.mxu0 %v1040
    %v2646 = vpop.f32.mrf.mxu0
    %v2647 = vadd.f32 %v2594, %v2646
    %2648 = vmatmul.f32.gmra.mxu0 %v1042
    %v2649 = vpop.f32.mrf.mxu0
    %v2650 = vadd.f32 %v2597, %v2649
    %2651 = vmatmul.f32.gmra.mxu0 %v1044
    %v2652 = vpop.f32.mrf.mxu0
    %v2653 = vadd.f32 %v2600, %v2652
    %2654 = vmatmul.f32.gmra.mxu0 %v1046
    %v2655 = vpop.f32.mrf.mxu0
    %v2656 = vadd.f32 %v2603, %v2655
    %2657 = vmatmul.f32.gmra.mxu0 0.0
    %v2658 = vpop.f32.mrf.mxu0
    %v2659 = vadd.f32 %v2606, %v2658
    %2660 = vdwg.mxu0
    %2661 = vmatpush.msra.mxu0 %v1431
    %2662 = vmatpush.msra.mxu0 %v1427
    %2663 = vmatpush.msra.mxu0 %v1423
    %2664 = vmatpush.msra.mxu0 %v1419
    %2665 = vmatpush.msra.mxu0 %v1415
    %2666 = vmatpush.msra.mxu0 %v1411
    %2667 = vmatpush.msra.mxu0 %v1407
    %2668 = vmatpush.msra.mxu0 %v1403
    %2669 = vmatpush.msra.mxu0 %v1399
    %2670 = vmatpush.msra.mxu0 %v1395
    %2671 = vmatpush.msra.mxu0 %v1391
    %2672 = vmatpush.msra.mxu0 %v1387
    %2673 = vmatpush.msra.mxu0 %v1383
    %2674 = vmatpush.msra.mxu0 %v1379
    %2675 = vmatpush.msra.mxu0 %v1375
    %2676 = vmatpush.msra.mxu0 %v1371
    %2677 = vmatmul.f32.gmra.mxu0 %v1027
    %v2678 = vpop.f32.mrf.mxu0
    %v2679 = vadd.f32 %v2626, %v2678
    %2680 = vmatmul.f32.gmra.mxu0 %v1029
    %v2681 = vpop.f32.mrf.mxu0
    %v2682 = vadd.f32 %v2629, %v2681
    %2683 = vmatmul.f32.gmra.mxu0 %v1031
    %v2684 = vpop.f32.mrf.mxu0
    %v2685 = vadd.f32 %v2632, %v2684
    %2686 = vmatmul.f32.gmra.mxu0 %v1033
    %v2687 = vpop.f32.mrf.mxu0
    %v2688 = vadd.f32 %v2635, %v2687
    %2689 = vmatmul.f32.gmra.mxu0 %v1035
    %v2690 = vpop.f32.mrf.mxu0
    %v2691 = vadd.f32 %v2638, %v2690
    %2692 = vmatmul.f32.gmra.mxu0 %v1037
    %v2693 = vpop.f32.mrf.mxu0
    %v2694 = vadd.f32 %v2641, %v2693
    %2695 = vmatmul.f32.gmra.mxu0 %v1039
    %v2696 = vpop.f32.mrf.mxu0
    %v2697 = vadd.f32 %v2644, %v2696
    %2698 = vmatmul.f32.gmra.mxu0 %v1041
    %v2699 = vpop.f32.mrf.mxu0
    %v2700 = vadd.f32 %v2647, %v2699
    %2701 = vmatmul.f32.gmra.mxu0 %v1043
    %v2702 = vpop.f32.mrf.mxu0
    %v2703 = vadd.f32 %v2650, %v2702
    %2704 = vmatmul.f32.gmra.mxu0 %v1045
    %v2705 = vpop.f32.mrf.mxu0
    %v2706 = vadd.f32 %v2653, %v2705
    %2707 = vmatmul.f32.gmra.mxu0 %v1047
    %v2708 = vpop.f32.mrf.mxu0
    %v2709 = vadd.f32 %v2656, %v2708
    %2710 = vmatmul.f32.gmra.mxu0 0.0
    %v2711 = vpop.f32.mrf.mxu0
    %v2712 = vadd.f32 %v2659, %v2711
    %2713 = vdwg.mxu0
    %v2714 = vmax.f32 %v1725, 0.0
    %v2715 = vmax.f32 %v2043, 0.0
    %v2716 = vmax.f32 %v2361, 0.0
    %v2717 = vmax.f32 %v2679, 0.0
    %v2718 = vmax.f32 %v1728, 0.0
    %v2719 = vmax.f32 %v2046, 0.0
    %v2720 = vmax.f32 %v2364, 0.0
    %v2721 = vmax.f32 %v2682, 0.0
    %v2722 = vmax.f32 %v1731, 0.0
    %v2723 = vmax.f32 %v2049, 0.0
    %v2724 = vmax.f32 %v2367, 0.0
    %v2725 = vmax.f32 %v2685, 0.0
    %v2726 = vmax.f32 %v1734, 0.0
    %v2727 = vmax.f32 %v2052, 0.0
    %v2728 = vmax.f32 %v2370, 0.0
    %v2729 = vmax.f32 %v2688, 0.0
    %v2730 = vmax.f32 %v1737, 0.0
    %v2731 = vmax.f32 %v2055, 0.0
    %v2732 = vmax.f32 %v2373, 0.0
    %v2733 = vmax.f32 %v2691, 0.0
    %v2734 = vmax.f32 %v1740, 0.0
    %v2735 = vmax.f32 %v2058, 0.0
    %v2736 = vmax.f32 %v2376, 0.0
    %v2737 = vmax.f32 %v2694, 0.0
    %v2738 = vmax.f32 %v1743, 0.0
    %v2739 = vmax.f32 %v2061, 0.0
    %v2740 = vmax.f32 %v2379, 0.0
    %v2741 = vmax.f32 %v2697, 0.0
    %v2742 = vmax.f32 %v1746, 0.0
    %v2743 = vmax.f32 %v2064, 0.0
    %v2744 = vmax.f32 %v2382, 0.0
    %v2745 = vmax.f32 %v2700, 0.0
    %v2746 = vmax.f32 %v1749, 0.0
    %v2747 = vmax.f32 %v2067, 0.0
    %v2748 = vmax.f32 %v2385, 0.0
    %v2749 = vmax.f32 %v2703, 0.0
    %v2750 = vmax.f32 %v1752, 0.0
    %v2751 = vmax.f32 %v2070, 0.0
    %v2752 = vmax.f32 %v2388, 0.0
    %v2753 = vmax.f32 %v2706, 0.0
    %v2754 = vmax.f32 %v1755, 0.0
    %v2755 = vmax.f32 %v2073, 0.0
    %v2756 = vmax.f32 %v2391, 0.0
    %v2757 = vmax.f32 %v2709, 0.0
    %v2758 = vmax.f32 %v1758, 0.0
    %v2759 = vmax.f32 %v2076, 0.0
    %v2760 = vmax.f32 %v2394, 0.0
    %v2761 = vmax.f32 %v2712, 0.0
    %v2762 = vmax.f32 %v2714, %v2718
    %v2763 = vmax.f32 %v2715, %v2719
    %v2764 = vmax.f32 %v2716, %v2720
    %v2765 = vmax.f32 %v2717, %v2721
    %v2766 = vmax.f32 %v2722, %v2726
    %v2767 = vmax.f32 %v2723, %v2727
    %v2768 = vmax.f32 %v2724, %v2728
    %v2769 = vmax.f32 %v2725, %v2729
    %v2770 = vmax.f32 %v2730, %v2734
    %v2771 = vmax.f32 %v2731, %v2735
    %v2772 = vmax.f32 %v2732, %v2736
    %v2773 = vmax.f32 %v2733, %v2737
    %v2774 = vmax.f32 %v2738, %v2742
    %v2775 = vmax.f32 %v2739, %v2743
    %v2776 = vmax.f32 %v2740, %v2744
    %v2777 = vmax.f32 %v2741, %v2745
    %v2778 = vmax.f32 %v2746, %v2750
    %v2779 = vmax.f32 %v2747, %v2751
    %v2780 = vmax.f32 %v2748, %v2752
    %v2781 = vmax.f32 %v2749, %v2753
    %v2782 = vmax.f32 %v2754, %v2758
    %v2783 = vmax.f32 %v2755, %v2759
    %v2784 = vmax.f32 %v2756, %v2760
    %v2785 = vmax.f32 %v2757, %v2761
    %v2786 = vmax.f32 %v2762, %v2764
    %v2787 = vmax.f32 %v2763, %v2765
    %v2788 = vmax.f32 %v2766, %v2768
    %v2789 = vmax.f32 %v2767, %v2769
    %v2790 = vmax.f32 %v2770, %v2772
    %v2791 = vmax.f32 %v2771, %v2773
    %v2792 = vmax.f32 %v2774, %v2776
    %v2793 = vmax.f32 %v2775, %v2777
    %v2794 = vmax.f32 %v2778, %v2780
    %v2795 = vmax.f32 %v2779, %v2781
    %v2796 = vmax.f32 %v2782, %v2784
    %v2797 = vmax.f32 %v2783, %v2785
    %v2798 = vld [vmem:[#allocation10] sm:$0xff]
    %v2799 = vld [vmem:[#allocation10 + $0x8] sm:$0xff]
    %v2800 = vld [vmem:[#allocation10 + $0x10] sm:$0xff]
    %v2801 = vld [vmem:[#allocation10 + $0x18] sm:$0xff]
    %v2802 = vld [vmem:[#allocation10 + $0x20] sm:$0xff]
    %v2803 = vld [vmem:[#allocation10 + $0x28] sm:$0xff]
    %v2804 = vld [vmem:[#allocation10 + $0x30] sm:$0xff]
    %v2805 = vld [vmem:[#allocation10 + $0x38] sm:$0xff]
    %v2806 = vld [vmem:[#allocation10 + $0x40] sm:$0xff]
    %v2807 = vld [vmem:[#allocation10 + $0x48] sm:$0xff]
    %v2808 = vld [vmem:[#allocation10 + $0x50] sm:$0xff]
    %v2809 = vld [vmem:[#allocation10 + $0x58] sm:$0xff]
    %v2810 = vld [vmem:[#allocation10 + $0x60] sm:$0xff]
    %v2811 = vld [vmem:[#allocation10 + $0x68] sm:$0xff]
    %v2812 = vld [vmem:[#allocation10 + $0x70] sm:$0xff]
    %v2813 = vld [vmem:[#allocation10 + $0x78] sm:$0xff]
    %v2814 = vld [vmem:[#allocation10 + $0x80] sm:$0xff]
    %v2815 = vld [vmem:[#allocation10 + $0x88] sm:$0xff]
    %v2816 = vld [vmem:[#allocation10 + $0x90] sm:$0xff]
    %v2817 = vld [vmem:[#allocation10 + $0x98] sm:$0xff]
    %v2818 = vld [vmem:[#allocation10 + $0xa0] sm:$0xff]
    %v2819 = vld [vmem:[#allocation10 + $0xa8] sm:$0xff]
    %v2820 = vld [vmem:[#allocation10 + $0xb0] sm:$0xff]
    %v2821 = vld [vmem:[#allocation10 + $0xb8] sm:$0xff]
    %v2822 = vld [vmem:[#allocation10 + $0xc0] sm:$0xff]
    %v2823 = vld [vmem:[#allocation10 + $0xc8] sm:$0xff]
    %v2824 = vld [vmem:[#allocation10 + $0xd0] sm:$0xff]
    %v2825 = vld [vmem:[#allocation10 + $0xd8] sm:$0xff]
    %v2826 = vld [vmem:[#allocation10 + $0xe0] sm:$0xff]
    %v2827 = vld [vmem:[#allocation10 + $0xe8] sm:$0xff]
    %v2828 = vld [vmem:[#allocation10 + $0xf0] sm:$0xff]
    %v2829 = vld [vmem:[#allocation10 + $0xf8] sm:$0xff]
    %v2830 = vld [vmem:[#allocation10 + $0x100] sm:$0xff]
    %v2831 = vld [vmem:[#allocation10 + $0x108] sm:$0xff]
    %v2832 = vld [vmem:[#allocation10 + $0x110] sm:$0xff]
    %v2833 = vld [vmem:[#allocation10 + $0x118] sm:$0xff]
    %v2834 = vld [vmem:[#allocation10 + $0x120] sm:$0xff]
    %v2835 = vld [vmem:[#allocation10 + $0x128] sm:$0xff]
    %v2836 = vld [vmem:[#allocation10 + $0x130] sm:$0xff]
    %v2837 = vld [vmem:[#allocation10 + $0x138] sm:$0xff]
    %v2838 = vld [vmem:[#allocation10 + $0x140] sm:$0xff]
    %v2839 = vld [vmem:[#allocation10 + $0x148] sm:$0xff]
    %v2840 = vld [vmem:[#allocation10 + $0x150] sm:$0xff]
    %v2841 = vld [vmem:[#allocation10 + $0x158] sm:$0xff]
    %v2842 = vld [vmem:[#allocation10 + $0x160] sm:$0xff]
    %v2843 = vld [vmem:[#allocation10 + $0x168] sm:$0xff]
    %v2844 = vld [vmem:[#allocation10 + $0x170] sm:$0xff]
    %v2845 = vld [vmem:[#allocation10 + $0x178] sm:$0xff]
    %v2846 = vld [vmem:[#allocation10 + $0x180] sm:$0xff]
    %v2847 = vld [vmem:[#allocation10 + $0x188] sm:$0xff]
    %v2848 = vld [vmem:[#allocation10 + $0x190] sm:$0xff]
    %v2849 = vld [vmem:[#allocation10 + $0x198] sm:$0xff]
    %v2850 = vld [vmem:[#allocation10 + $0x1a0] sm:$0xff]
    %v2851 = vld [vmem:[#allocation10 + $0x1a8] sm:$0xff]
    %v2852 = vld [vmem:[#allocation10 + $0x1b0] sm:$0xff]
    %v2853 = vld [vmem:[#allocation10 + $0x1b8] sm:$0xff]
    %v2854 = vld [vmem:[#allocation10 + $0x1c0] sm:$0xff]
    %v2855 = vld [vmem:[#allocation10 + $0x1c8] sm:$0xff]
    %v2856 = vld [vmem:[#allocation10 + $0x1d0] sm:$0xff]
    %v2857 = vld [vmem:[#allocation10 + $0x1d8] sm:$0xff]
    %v2858 = vld [vmem:[#allocation10 + $0x1e0] sm:$0xff]
    %v2859 = vld [vmem:[#allocation10 + $0x1e8] sm:$0xff]
    %v2860 = vld [vmem:[#allocation10 + $0x1f0] sm:$0xff]
    %v2861 = vld [vmem:[#allocation10 + $0x1f8] sm:$0xff]
    %v2862 = vld [vmem:[#allocation10 + $0x200] sm:$0xff]
    %v2863 = vld [vmem:[#allocation10 + $0x208] sm:$0xff]
    %v2864 = vld [vmem:[#allocation10 + $0x210] sm:$0xff]
    %v2865 = vld [vmem:[#allocation10 + $0x218] sm:$0xff]
    %v2866 = vld [vmem:[#allocation10 + $0x220] sm:$0xff]
    %v2867 = vld [vmem:[#allocation10 + $0x228] sm:$0xff]
    %v2868 = vld [vmem:[#allocation10 + $0x230] sm:$0xff]
    %v2869 = vld [vmem:[#allocation10 + $0x238] sm:$0xff]
    %v2870 = vld [vmem:[#allocation10 + $0x240] sm:$0xff]
    %v2871 = vld [vmem:[#allocation10 + $0x248] sm:$0xff]
    %v2872 = vld [vmem:[#allocation10 + $0x250] sm:$0xff]
    %v2873 = vld [vmem:[#allocation10 + $0x258] sm:$0xff]
    %v2874 = vld [vmem:[#allocation10 + $0x260] sm:$0xff]
    %v2875 = vld [vmem:[#allocation10 + $0x268] sm:$0xff]
    %v2876 = vld [vmem:[#allocation10 + $0x270] sm:$0xff]
    %v2877 = vld [vmem:[#allocation10 + $0x278] sm:$0xff]
    %v2878 = vld [vmem:[#allocation10 + $0x280] sm:$0xff]
    %v2879 = vld [vmem:[#allocation10 + $0x288] sm:$0xff]
    %v2880 = vld [vmem:[#allocation10 + $0x290] sm:$0xff]
    %v2881 = vld [vmem:[#allocation10 + $0x298] sm:$0xff]
    %v2882 = vld [vmem:[#allocation10 + $0x2a0] sm:$0xff]
    %v2883 = vld [vmem:[#allocation10 + $0x2a8] sm:$0xff]
    %v2884 = vld [vmem:[#allocation10 + $0x2b0] sm:$0xff]
    %v2885 = vld [vmem:[#allocation10 + $0x2b8] sm:$0xff]
    %v2886 = vld [vmem:[#allocation10 + $0x2c0] sm:$0xff]
    %v2887 = vld [vmem:[#allocation10 + $0x2c8] sm:$0xff]
    %v2888 = vld [vmem:[#allocation10 + $0x2d0] sm:$0xff]
    %v2889 = vld [vmem:[#allocation10 + $0x2d8] sm:$0xff]
    %v2890 = vld [vmem:[#allocation10 + $0x2e0] sm:$0xff]
    %v2891 = vld [vmem:[#allocation10 + $0x2e8] sm:$0xff]
    %v2892 = vld [vmem:[#allocation10 + $0x2f0] sm:$0xff]
    %v2893 = vld [vmem:[#allocation10 + $0x2f8] sm:$0xff]
    %v2894 = vld [vmem:[#allocation10 + $0x300] sm:$0xff]
    %v2895 = vld [vmem:[#allocation10 + $0x308] sm:$0xff]
    %v2896 = vld [vmem:[#allocation10 + $0x310] sm:$0xff]
    %v2897 = vld [vmem:[#allocation10 + $0x318] sm:$0xff]
    %v2898 = vld [vmem:[#allocation10 + $0x320] sm:$0xff]
    %v2899 = vld [vmem:[#allocation10 + $0x328] sm:$0xff]
    %v2900 = vld [vmem:[#allocation10 + $0x330] sm:$0xff]
    %v2901 = vld [vmem:[#allocation10 + $0x338] sm:$0xff]
    %v2902 = vld [vmem:[#allocation10 + $0x340] sm:$0xff]
    %v2903 = vld [vmem:[#allocation10 + $0x348] sm:$0xff]
    %v2904 = vld [vmem:[#allocation10 + $0x350] sm:$0xff]
    %v2905 = vld [vmem:[#allocation10 + $0x358] sm:$0xff]
    %v2906 = vld [vmem:[#allocation10 + $0x360] sm:$0xff]
    %v2907 = vld [vmem:[#allocation10 + $0x368] sm:$0xff]
    %v2908 = vld [vmem:[#allocation10 + $0x370] sm:$0xff]
    %v2909 = vld [vmem:[#allocation10 + $0x378] sm:$0xff]
    %v2910 = vld [vmem:[#allocation10 + $0x380] sm:$0xff]
    %v2911 = vld [vmem:[#allocation10 + $0x388] sm:$0xff]
    %v2912 = vld [vmem:[#allocation10 + $0x390] sm:$0xff]
    %v2913 = vld [vmem:[#allocation10 + $0x398] sm:$0xff]
    %v2914 = vld [vmem:[#allocation10 + $0x3a0] sm:$0xff]
    %v2915 = vld [vmem:[#allocation10 + $0x3a8] sm:$0xff]
    %v2916 = vld [vmem:[#allocation10 + $0x3b0] sm:$0xff]
    %v2917 = vld [vmem:[#allocation10 + $0x3b8] sm:$0xff]
    %v2918 = vld [vmem:[#allocation10 + $0x3c0] sm:$0xff]
    %v2919 = vld [vmem:[#allocation10 + $0x3c8] sm:$0xff]
    %v2920 = vld [vmem:[#allocation10 + $0x3d0] sm:$0xff]
    %v2921 = vld [vmem:[#allocation10 + $0x3d8] sm:$0xff]
    %v2922 = vld [vmem:[#allocation10 + $0x3e0] sm:$0xff]
    %v2923 = vld [vmem:[#allocation10 + $0x3e8] sm:$0xff]
    %v2924 = vld [vmem:[#allocation10 + $0x3f0] sm:$0xff]
    %v2925 = vld [vmem:[#allocation10 + $0x3f8] sm:$0xff]
    %v2926 = vld [vmem:[#allocation10 + $0x400] sm:$0xff]
    %v2927 = vld [vmem:[#allocation10 + $0x408] sm:$0xff]
    %v2928 = vld [vmem:[#allocation10 + $0x410] sm:$0xff]
    %v2929 = vld [vmem:[#allocation10 + $0x418] sm:$0xff]
    %v2930 = vld [vmem:[#allocation10 + $0x420] sm:$0xff]
    %v2931 = vld [vmem:[#allocation10 + $0x428] sm:$0xff]
    %v2932 = vld [vmem:[#allocation10 + $0x430] sm:$0xff]
    %v2933 = vld [vmem:[#allocation10 + $0x438] sm:$0xff]
    %v2934 = vld [vmem:[#allocation10 + $0x440] sm:$0xff]
    %v2935 = vld [vmem:[#allocation10 + $0x448] sm:$0xff]
    %v2936 = vld [vmem:[#allocation10 + $0x450] sm:$0xff]
    %v2937 = vld [vmem:[#allocation10 + $0x458] sm:$0xff]
    %v2938 = vld [vmem:[#allocation10 + $0x460] sm:$0xff]
    %v2939 = vld [vmem:[#allocation10 + $0x468] sm:$0xff]
    %v2940 = vld [vmem:[#allocation10 + $0x470] sm:$0xff]
    %v2941 = vld [vmem:[#allocation10 + $0x478] sm:$0xff]
    %v2942 = vld [vmem:[#allocation10 + $0x480] sm:$0xff]
    %v2943 = vld [vmem:[#allocation10 + $0x488] sm:$0xff]
    %v2944 = vld [vmem:[#allocation10 + $0x490] sm:$0xff]
    %v2945 = vld [vmem:[#allocation10 + $0x498] sm:$0xff]
    %v2946 = vld [vmem:[#allocation10 + $0x4a0] sm:$0xff]
    %v2947 = vld [vmem:[#allocation10 + $0x4a8] sm:$0xff]
    %v2948 = vld [vmem:[#allocation10 + $0x4b0] sm:$0xff]
    %v2949 = vld [vmem:[#allocation10 + $0x4b8] sm:$0xff]
    %v2950 = vld [vmem:[#allocation10 + $0x4c0] sm:$0xff]
    %v2951 = vld [vmem:[#allocation10 + $0x4c8] sm:$0xff]
    %v2952 = vld [vmem:[#allocation10 + $0x4d0] sm:$0xff]
    %v2953 = vld [vmem:[#allocation10 + $0x4d8] sm:$0xff]
    %v2954 = vld [vmem:[#allocation10 + $0x4e0] sm:$0xff]
    %v2955 = vld [vmem:[#allocation10 + $0x4e8] sm:$0xff]
    %v2956 = vld [vmem:[#allocation10 + $0x4f0] sm:$0xff]
    %v2957 = vld [vmem:[#allocation10 + $0x4f8] sm:$0xff]
    %v2958 = vld [vmem:[#allocation10 + $0x500] sm:$0xff]
    %v2959 = vld [vmem:[#allocation10 + $0x508] sm:$0xff]
    %v2960 = vld [vmem:[#allocation10 + $0x510] sm:$0xff]
    %v2961 = vld [vmem:[#allocation10 + $0x518] sm:$0xff]
    %v2962 = vld [vmem:[#allocation10 + $0x520] sm:$0xff]
    %v2963 = vld [vmem:[#allocation10 + $0x528] sm:$0xff]
    %v2964 = vld [vmem:[#allocation10 + $0x530] sm:$0xff]
    %v2965 = vld [vmem:[#allocation10 + $0x538] sm:$0xff]
    %v2966 = vld [vmem:[#allocation10 + $0x540] sm:$0xff]
    %v2967 = vld [vmem:[#allocation10 + $0x548] sm:$0xff]
    %v2968 = vld [vmem:[#allocation10 + $0x550] sm:$0xff]
    %v2969 = vld [vmem:[#allocation10 + $0x558] sm:$0xff]
    %v2970 = vld [vmem:[#allocation10 + $0x560] sm:$0xff]
    %v2971 = vld [vmem:[#allocation10 + $0x568] sm:$0xff]
    %v2972 = vld [vmem:[#allocation10 + $0x570] sm:$0xff]
    %v2973 = vld [vmem:[#allocation10 + $0x578] sm:$0xff]
    %v2974 = vld [vmem:[#allocation10 + $0x580] sm:$0xff]
    %v2975 = vld [vmem:[#allocation10 + $0x588] sm:$0xff]
    %v2976 = vld [vmem:[#allocation10 + $0x590] sm:$0xff]
    %v2977 = vld [vmem:[#allocation10 + $0x598] sm:$0xff]
    %v2978 = vld [vmem:[#allocation10 + $0x5a0] sm:$0xff]
    %v2979 = vld [vmem:[#allocation10 + $0x5a8] sm:$0xff]
    %v2980 = vld [vmem:[#allocation10 + $0x5b0] sm:$0xff]
    %v2981 = vld [vmem:[#allocation10 + $0x5b8] sm:$0xff]
    %v2982 = vld [vmem:[#allocation10 + $0x5c0] sm:$0xff]
    %v2983 = vld [vmem:[#allocation10 + $0x5c8] sm:$0xff]
    %v2984 = vld [vmem:[#allocation10 + $0x5d0] sm:$0xff]
    %v2985 = vld [vmem:[#allocation10 + $0x5d8] sm:$0xff]
    %v2986 = vld [vmem:[#allocation10 + $0x5e0] sm:$0xff]
    %v2987 = vld [vmem:[#allocation10 + $0x5e8] sm:$0xff]
    %v2988 = vld [vmem:[#allocation10 + $0x5f0] sm:$0xff]
    %v2989 = vld [vmem:[#allocation10 + $0x5f8] sm:$0xff]
    %v2990 = vld [vmem:[#allocation11] sm:$0x1]
    %v2992 = vperm.slane %v2990, 0
    %2994 = vmatpush.msra.mxu0 %v2813
    %2995 = vmatpush.msra.mxu0 %v2812
    %2996 = vmatpush.msra.mxu0 %v2811
    %2997 = vmatpush.msra.mxu0 %v2810
    %2998 = vmatpush.msra.mxu0 %v2809
    %2999 = vmatpush.msra.mxu0 %v2808
    %3000 = vmatpush.msra.mxu0 %v2807
    %3001 = vmatpush.msra.mxu0 %v2806
    %3002 = vmatpush.msra.mxu0 %v2805
    %3003 = vmatpush.msra.mxu0 %v2804
    %3004 = vmatpush.msra.mxu0 %v2803
    %3005 = vmatpush.msra.mxu0 %v2802
    %3006 = vmatpush.msra.mxu0 %v2801
    %3007 = vmatpush.msra.mxu0 %v2800
    %3008 = vmatpush.msra.mxu0 %v2799
    %3009 = vmatpush.msra.mxu0 %v2798
    %3010 = vmatmul.f32.gmra.mxu0 %v2786
    %v3011 = vpop.f32.mrf.mxu0
    %v3012 = vadd.f32 %v2992, %v3011
    %3013 = vdwg.mxu0
    %3014 = vmatpush.msra.mxu0 %v2829
    %3015 = vmatpush.msra.mxu0 %v2828
    %3016 = vmatpush.msra.mxu0 %v2827
    %3017 = vmatpush.msra.mxu0 %v2826
    %3018 = vmatpush.msra.mxu0 %v2825
    %3019 = vmatpush.msra.mxu0 %v2824
    %3020 = vmatpush.msra.mxu0 %v2823
    %3021 = vmatpush.msra.mxu0 %v2822
    %3022 = vmatpush.msra.mxu0 %v2821
    %3023 = vmatpush.msra.mxu0 %v2820
    %3024 = vmatpush.msra.mxu0 %v2819
    %3025 = vmatpush.msra.mxu0 %v2818
    %3026 = vmatpush.msra.mxu0 %v2817
    %3027 = vmatpush.msra.mxu0 %v2816
    %3028 = vmatpush.msra.mxu0 %v2815
    %3029 = vmatpush.msra.mxu0 %v2814
    %3030 = vmatmul.f32.gmra.mxu0 %v2787
    %v3031 = vpop.f32.mrf.mxu0
    %v3032 = vadd.f32 %v3012, %v3031
    %3033 = vdwg.mxu0
    %3034 = vmatpush.msra.mxu0 %v2845
    %3035 = vmatpush.msra.mxu0 %v2844
    %3036 = vmatpush.msra.mxu0 %v2843
    %3037 = vmatpush.msra.mxu0 %v2842
    %3038 = vmatpush.msra.mxu0 %v2841
    %3039 = vmatpush.msra.mxu0 %v2840
    %3040 = vmatpush.msra.mxu0 %v2839
    %3041 = vmatpush.msra.mxu0 %v2838
    %3042 = vmatpush.msra.mxu0 %v2837
    %3043 = vmatpush.msra.mxu0 %v2836
    %3044 = vmatpush.msra.mxu0 %v2835
    %3045 = vmatpush.msra.mxu0 %v2834
    %3046 = vmatpush.msra.mxu0 %v2833
    %3047 = vmatpush.msra.mxu0 %v2832
    %3048 = vmatpush.msra.mxu0 %v2831
    %3049 = vmatpush.msra.mxu0 %v2830
    %3050 = vmatmul.f32.gmra.mxu0 %v2788
    %v3051 = vpop.f32.mrf.mxu0
    %v3052 = vadd.f32 %v3032, %v3051
    %3053 = vdwg.mxu0
    %3054 = vmatpush.msra.mxu0 %v2861
    %3055 = vmatpush.msra.mxu0 %v2860
    %3056 = vmatpush.msra.mxu0 %v2859
    %3057 = vmatpush.msra.mxu0 %v2858
    %3058 = vmatpush.msra.mxu0 %v2857
    %3059 = vmatpush.msra.mxu0 %v2856
    %3060 = vmatpush.msra.mxu0 %v2855
    %3061 = vmatpush.msra.mxu0 %v2854
    %3062 = vmatpush.msra.mxu0 %v2853
    %3063 = vmatpush.msra.mxu0 %v2852
    %3064 = vmatpush.msra.mxu0 %v2851
    %3065 = vmatpush.msra.mxu0 %v2850
    %3066 = vmatpush.msra.mxu0 %v2849
    %3067 = vmatpush.msra.mxu0 %v2848
    %3068 = vmatpush.msra.mxu0 %v2847
    %3069 = vmatpush.msra.mxu0 %v2846
    %3070 = vmatmul.f32.gmra.mxu0 %v2789
    %v3071 = vpop.f32.mrf.mxu0
    %v3072 = vadd.f32 %v3052, %v3071
    %3073 = vdwg.mxu0
    %3074 = vmatpush.msra.mxu0 %v2877
    %3075 = vmatpush.msra.mxu0 %v2876
    %3076 = vmatpush.msra.mxu0 %v2875
    %3077 = vmatpush.msra.mxu0 %v2874
    %3078 = vmatpush.msra.mxu0 %v2873
    %3079 = vmatpush.msra.mxu0 %v2872
    %3080 = vmatpush.msra.mxu0 %v2871
    %3081 = vmatpush.msra.mxu0 %v2870
    %3082 = vmatpush.msra.mxu0 %v2869
    %3083 = vmatpush.msra.mxu0 %v2868
    %3084 = vmatpush.msra.mxu0 %v2867
    %3085 = vmatpush.msra.mxu0 %v2866
    %3086 = vmatpush.msra.mxu0 %v2865
    %3087 = vmatpush.msra.mxu0 %v2864
    %3088 = vmatpush.msra.mxu0 %v2863
    %3089 = vmatpush.msra.mxu0 %v2862
    %3090 = vmatmul.f32.gmra.mxu0 %v2790
    %v3091 = vpop.f32.mrf.mxu0
    %v3092 = vadd.f32 %v3072, %v3091
    %3093 = vdwg.mxu0
    %3094 = vmatpush.msra.mxu0 %v2893
    %3095 = vmatpush.msra.mxu0 %v2892
    %3096 = vmatpush.msra.mxu0 %v2891
    %3097 = vmatpush.msra.mxu0 %v2890
    %3098 = vmatpush.msra.mxu0 %v2889
    %3099 = vmatpush.msra.mxu0 %v2888
    %3100 = vmatpush.msra.mxu0 %v2887
    %3101 = vmatpush.msra.mxu0 %v2886
    %3102 = vmatpush.msra.mxu0 %v2885
    %3103 = vmatpush.msra.mxu0 %v2884
    %3104 = vmatpush.msra.mxu0 %v2883
    %3105 = vmatpush.msra.mxu0 %v2882
    %3106 = vmatpush.msra.mxu0 %v2881
    %3107 = vmatpush.msra.mxu0 %v2880
    %3108 = vmatpush.msra.mxu0 %v2879
    %3109 = vmatpush.msra.mxu0 %v2878
    %3110 = vmatmul.f32.gmra.mxu0 %v2791
    %v3111 = vpop.f32.mrf.mxu0
    %v3112 = vadd.f32 %v3092, %v3111
    %3113 = vdwg.mxu0
    %3114 = vmatpush.msra.mxu0 %v2909
    %3115 = vmatpush.msra.mxu0 %v2908
    %3116 = vmatpush.msra.mxu0 %v2907
    %3117 = vmatpush.msra.mxu0 %v2906
    %3118 = vmatpush.msra.mxu0 %v2905
    %3119 = vmatpush.msra.mxu0 %v2904
    %3120 = vmatpush.msra.mxu0 %v2903
    %3121 = vmatpush.msra.mxu0 %v2902
    %3122 = vmatpush.msra.mxu0 %v2901
    %3123 = vmatpush.msra.mxu0 %v2900
    %3124 = vmatpush.msra.mxu0 %v2899
    %3125 = vmatpush.msra.mxu0 %v2898
    %3126 = vmatpush.msra.mxu0 %v2897
    %3127 = vmatpush.msra.mxu0 %v2896
    %3128 = vmatpush.msra.mxu0 %v2895
    %3129 = vmatpush.msra.mxu0 %v2894
    %3130 = vmatmul.f32.gmra.mxu0 %v2792
    %v3131 = vpop.f32.mrf.mxu0
    %v3132 = vadd.f32 %v3112, %v3131
    %3133 = vdwg.mxu0
    %3134 = vmatpush.msra.mxu0 %v2925
    %3135 = vmatpush.msra.mxu0 %v2924
    %3136 = vmatpush.msra.mxu0 %v2923
    %3137 = vmatpush.msra.mxu0 %v2922
    %3138 = vmatpush.msra.mxu0 %v2921
    %3139 = vmatpush.msra.mxu0 %v2920
    %3140 = vmatpush.msra.mxu0 %v2919
    %3141 = vmatpush.msra.mxu0 %v2918
    %3142 = vmatpush.msra.mxu0 %v2917
    %3143 = vmatpush.msra.mxu0 %v2916
    %3144 = vmatpush.msra.mxu0 %v2915
    %3145 = vmatpush.msra.mxu0 %v2914
    %3146 = vmatpush.msra.mxu0 %v2913
    %3147 = vmatpush.msra.mxu0 %v2912
    %3148 = vmatpush.msra.mxu0 %v2911
    %3149 = vmatpush.msra.mxu0 %v2910
    %3150 = vmatmul.f32.gmra.mxu0 %v2793
    %v3151 = vpop.f32.mrf.mxu0
    %v3152 = vadd.f32 %v3132, %v3151
    %3153 = vdwg.mxu0
    %3154 = vmatpush.msra.mxu0 %v2941
    %3155 = vmatpush.msra.mxu0 %v2940
    %3156 = vmatpush.msra.mxu0 %v2939
    %3157 = vmatpush.msra.mxu0 %v2938
    %3158 = vmatpush.msra.mxu0 %v2937
    %3159 = vmatpush.msra.mxu0 %v2936
    %3160 = vmatpush.msra.mxu0 %v2935
    %3161 = vmatpush.msra.mxu0 %v2934
    %3162 = vmatpush.msra.mxu0 %v2933
    %3163 = vmatpush.msra.mxu0 %v2932
    %3164 = vmatpush.msra.mxu0 %v2931
    %3165 = vmatpush.msra.mxu0 %v2930
    %3166 = vmatpush.msra.mxu0 %v2929
    %3167 = vmatpush.msra.mxu0 %v2928
    %3168 = vmatpush.msra.mxu0 %v2927
    %3169 = vmatpush.msra.mxu0 %v2926
    %3170 = vmatmul.f32.gmra.mxu0 %v2794
    %v3171 = vpop.f32.mrf.mxu0
    %v3172 = vadd.f32 %v3152, %v3171
    %3173 = vdwg.mxu0
    %3174 = vmatpush.msra.mxu0 %v2957
    %3175 = vmatpush.msra.mxu0 %v2956
    %3176 = vmatpush.msra.mxu0 %v2955
    %3177 = vmatpush.msra.mxu0 %v2954
    %3178 = vmatpush.msra.mxu0 %v2953
    %3179 = vmatpush.msra.mxu0 %v2952
    %3180 = vmatpush.msra.mxu0 %v2951
    %3181 = vmatpush.msra.mxu0 %v2950
    %3182 = vmatpush.msra.mxu0 %v2949
    %3183 = vmatpush.msra.mxu0 %v2948
    %3184 = vmatpush.msra.mxu0 %v2947
    %3185 = vmatpush.msra.mxu0 %v2946
    %3186 = vmatpush.msra.mxu0 %v2945
    %3187 = vmatpush.msra.mxu0 %v2944
    %3188 = vmatpush.msra.mxu0 %v2943
    %3189 = vmatpush.msra.mxu0 %v2942
    %3190 = vmatmul.f32.gmra.mxu0 %v2795
    %v3191 = vpop.f32.mrf.mxu0
    %v3192 = vadd.f32 %v3172, %v3191
    %3193 = vdwg.mxu0
    %3194 = vmatpush.msra.mxu0 %v2973
    %3195 = vmatpush.msra.mxu0 %v2972
    %3196 = vmatpush.msra.mxu0 %v2971
    %3197 = vmatpush.msra.mxu0 %v2970
    %3198 = vmatpush.msra.mxu0 %v2969
    %3199 = vmatpush.msra.mxu0 %v2968
    %3200 = vmatpush.msra.mxu0 %v2967
    %3201 = vmatpush.msra.mxu0 %v2966
    %3202 = vmatpush.msra.mxu0 %v2965
    %3203 = vmatpush.msra.mxu0 %v2964
    %3204 = vmatpush.msra.mxu0 %v2963
    %3205 = vmatpush.msra.mxu0 %v2962
    %3206 = vmatpush.msra.mxu0 %v2961
    %3207 = vmatpush.msra.mxu0 %v2960
    %3208 = vmatpush.msra.mxu0 %v2959
    %3209 = vmatpush.msra.mxu0 %v2958
    %3210 = vmatmul.f32.gmra.mxu0 %v2796
    %v3211 = vpop.f32.mrf.mxu0
    %v3212 = vadd.f32 %v3192, %v3211
    %3213 = vdwg.mxu0
    %3214 = vmatpush.msra.mxu0 %v2989
    %3215 = vmatpush.msra.mxu0 %v2988
    %3216 = vmatpush.msra.mxu0 %v2987
    %3217 = vmatpush.msra.mxu0 %v2986
    %3218 = vmatpush.msra.mxu0 %v2985
    %3219 = vmatpush.msra.mxu0 %v2984
    %3220 = vmatpush.msra.mxu0 %v2983
    %3221 = vmatpush.msra.mxu0 %v2982
    %3222 = vmatpush.msra.mxu0 %v2981
    %3223 = vmatpush.msra.mxu0 %v2980
    %3224 = vmatpush.msra.mxu0 %v2979
    %3225 = vmatpush.msra.mxu0 %v2978
    %3226 = vmatpush.msra.mxu0 %v2977
    %3227 = vmatpush.msra.mxu0 %v2976
    %3228 = vmatpush.msra.mxu0 %v2975
    %3229 = vmatpush.msra.mxu0 %v2974
    %3230 = vmatmul.f32.gmra.mxu0 %v2797
    %v3231 = vpop.f32.mrf.mxu0
    %v3232 = vadd.f32 %v3212, %v3231
    %3233 = vdwg.mxu0
    %v3234 = vmax.f32 %v3232, 0.0
    %v3235 = vld [vmem:[#allocation13] sm:$0xff]
    %v3236 = vld [vmem:[#allocation13 + $0x8] sm:$0xff]
    %v3237 = vld [vmem:[#allocation13 + $0x10] sm:$0xff]
    %v3238 = vld [vmem:[#allocation13 + $0x18] sm:$0xff]
    %v3239 = vld [vmem:[#allocation13 + $0x20] sm:$0xff]
    %v3240 = vld [vmem:[#allocation13 + $0x28] sm:$0xff]
    %v3241 = vld [vmem:[#allocation13 + $0x30] sm:$0xff]
    %v3242 = vld [vmem:[#allocation13 + $0x38] sm:$0xff]
    %v3243 = vld [vmem:[#allocation13 + $0x40] sm:$0xff]
    %v3244 = vld [vmem:[#allocation13 + $0x48] sm:$0xff]
    %v3245 = vld [vmem:[#allocation13 + $0x50] sm:$0xff]
    %v3246 = vld [vmem:[#allocation13 + $0x58] sm:$0xff]
    %v3247 = vld [vmem:[#allocation13 + $0x60] sm:$0xff]
    %v3248 = vld [vmem:[#allocation13 + $0x68] sm:$0xff]
    %v3249 = vld [vmem:[#allocation13 + $0x70] sm:$0xff]
    %v3250 = vld [vmem:[#allocation13 + $0x78] sm:$0xff]
    %v3251 = vld [vmem:[#allocation14] sm:$0x1]
    %v3253 = vperm.slane %v3251, 0
    %3255 = vmatpush.msra.mxu0 %v3250
    %3256 = vmatpush.msra.mxu0 %v3249
    %3257 = vmatpush.msra.mxu0 %v3248
    %3258 = vmatpush.msra.mxu0 %v3247
    %3259 = vmatpush.msra.mxu0 %v3246
    %3260 = vmatpush.msra.mxu0 %v3245
    %3261 = vmatpush.msra.mxu0 %v3244
    %3262 = vmatpush.msra.mxu0 %v3243
    %3263 = vmatpush.msra.mxu0 %v3242
    %3264 = vmatpush.msra.mxu0 %v3241
    %3265 = vmatpush.msra.mxu0 %v3240
    %3266 = vmatpush.msra.mxu0 %v3239
    %3267 = vmatpush.msra.mxu0 %v3238
    %3268 = vmatpush.msra.mxu0 %v3237
    %3269 = vmatpush.msra.mxu0 %v3236
    %3270 = vmatpush.msra.mxu0 %v3235
    %3271 = vmatmul.f32.gmra.mxu0 %v3234
    %v3272 = vpop.f32.mrf.mxu0
    %v3273 = vadd.f32 %v3253, %v3272
    %3274 = vdwg.mxu0
    %3275 = vst [vmem:[#allocation16] sm:$0xff] %v3273
    // Predicated region
    $region70: #{tpu_custom_call.1} parent=1 // pred_check
      _
    $region71: #{tpu_custom_call.1} parent=1 // pred_check_branch
      %3277 = sbr.rel (0) target = $region73
    $region72: #{tpu_custom_call.1} parent=1 // pred_region
      %3279 = vsyncadd [#allocation4], 0
      %s3281 = sshll.u32 [#allocation16], 4
      %s3282 = int_to_ptr.vmem [resolvable:$true] %s3281
      %s3283 = sshll.u32 %s9, 4
      %s3284 = int_to_ptr.hbm [resolvable:$true] %s3283
      %3286 = dma.vmem_to_hbm [thread:$0]  %s3282, 128, %s3284, [#allocation4]
    $region73: #{tpu_custom_call.1} parent=1 // pred_fallthru
      _
    // Predicated region
    $region74: #{tpu_custom_call.1} parent=1 // pred_check
      _
    $region75: #{tpu_custom_call.1} parent=1 // pred_check_branch
      %3288 = sbr.rel (0) target = $region77
    $region76: #{tpu_custom_call.1} parent=1 // pred_region
      %3290 = dma.done [#allocation4], 128
    $region77: #{tpu_custom_call.1} parent=1 // pred_fallthru
      _
    %3291 = vsyncpa [#allocation3], 1
    %3292 = vsyncpa [#allocation6], 1
    %3293 = vsyncpa [#allocation9], 1
    %3294 = vsyncpa [#allocation12], 1
    %3295 = vsyncpa [#allocation15], 1
    %3296 = vsyncpa [#allocation4], 1

</llo_original>
